<compile_context>
chip_gen: v5e
topology: v5e:2x2
jax: 0.10.0
libtpu: 0.0.40
codegen_flags: <defaults>
</compile_context>

<pallas_src>
import functools

import jax
import jax.numpy as jnp
import numpy as np
from jax.experimental import pallas as pl
from jax.experimental.pallas import tpu as pltpu


def _swish(x):
    return x * jax.nn.sigmoid(x)


def _round_up(x, m):
    return (x + m - 1) // m * m


# ------------------------- fused MBConv kernel (per image) -----------------------
def _mbconv_kernel(xp_ref, we_ref, b1_ref, wd_ref, b2_ref,
                   wse1_ref, bse1_ref, wse2_ref, bse2_ref,
                   wpt_ref, b3_ref, *rest,
                   k, p, Ho, Wo, Hp, Wp, add_shortcut):
    if add_shortcut:
        sc_ref, o_ref, e_scr = rest
    else:
        sc_ref = None
        o_ref, e_scr = rest

    Ce = we_ref.shape[1]
    M2 = Ho * Wo

    # ---- expand 1x1 conv (BN1 scale folded into the weights) + bias + Swish ----
    xp = xp_ref[0]                                       # (Hp, Wp, Cin)
    x2d = xp.reshape(Hp * Wp, xp.shape[-1])              # Wp is a multiple of 8
    e = jnp.dot(x2d, we_ref[...], preferred_element_type=jnp.float32)
    e = _swish(e + b1_ref[...])                          # (Hp*Wp, Ce)
    e = e.reshape(Hp, Wp, Ce)

    # The input was zero-padded, but BN bias + Swish make the padded ring
    # nonzero; mask the halo back to exact zeros so the depthwise conv sees
    # the same zero padding as F.conv2d(padding=k//2).
    row = jax.lax.broadcasted_iota(jnp.int32, (Hp, Wp, Ce), 0)
    col = jax.lax.broadcasted_iota(jnp.int32, (Hp, Wp, Ce), 1)
    valid = (row >= p) & (row < p + Ho) & (col >= p) & (col < p + Wo)
    e_scr[...] = jnp.where(valid, e, 0.0)

    # ---- depthwise kxk conv (stride 1, BN2 scale folded) + bias + Swish ----
    wdw = wd_ref[...]                                    # (k*k, Ce)
    acc = jnp.zeros((Ho, Wo, Ce), jnp.float32)
    for kj in range(k):                                  # static taps, unrolled
        for ki in range(k):
            tap = e_scr[ki:ki + Ho, kj:kj + Wo, :]
            acc = acc + tap * wdw[ki * k + kj][None, None, :]
    dw = _swish(acc.reshape(M2, Ce) + b2_ref[...])       # (Ho*Wo, Ce)

    # ---- SE: global average pool + two tiny FCs -> channel gates ----
    pooled = jnp.mean(dw, axis=0, keepdims=True)         # (1, Ce)
    h = _swish(jnp.dot(pooled, wse1_ref[...],
                       preferred_element_type=jnp.float32) + bse1_ref[...])
    g = jax.nn.sigmoid(jnp.dot(h, wse2_ref[...],
                               preferred_element_type=jnp.float32) + bse2_ref[...])

    # ---- gate, project 1x1 conv (BN3 scale folded, bf16 MXU operands) + bias ----
    xg = (dw * g).astype(jnp.bfloat16)                   # (Ho*Wo, Ce)
    # (Cout, Ce) contracted with (Ho*Wo, Ce) on Ce -> (Cout, Ho*Wo):
    # lane-dense NCHW-shaped output, no transpose needed in the wrapper.
    y = jax.lax.dot_general(wpt_ref[...], xg, (((1,), (1,)), ((), ())),
                            preferred_element_type=jnp.float32)
    y = y + b3_ref[...]                                  # bias (Cout, 1)
    if add_shortcut:
        y = y + sc_ref[0]                                # (Cout, Ho*Wo) shortcut
    o_ref[0] = y


# --------------------------------- wrapper ---------------------------------------
def _fold_bn(gamma, beta, mean, var, eps=1e-3):
    scale = gamma / jnp.sqrt(var + eps)
    bias = beta - mean * scale
    return scale, bias


def mbconv_forward(x_nchw, params, *, kernel_size, stride, shortcut):
    N, Cin, Hin, Win = x_nchw.shape
    k = kernel_size
    p = k // 2

    x = x_nchw.astype(jnp.float32)
    # stride sits on the 1x1 expand conv in this module: a stride-s 1x1 conv
    # == spatial subsampling followed by the 1x1 conv.
    xs = x[:, :, ::stride, ::stride]
    Ho, Wo = xs.shape[2], xs.shape[3]
    M2 = Ho * Wo

    Ce = params["w_expand"].shape[1]
    Ch = params["w_se1"].shape[1]
    Cout = params["w_proj"].shape[1]

    scale1, bias1 = _fold_bn(*params["bn1"])
    scale2, bias2 = _fold_bn(*params["bn2"])
    scale3, bias3 = _fold_bn(*params["bn3"])

    # Fold BN scales into the conv weights; kernels only add the bias.
    we_f = params["w_expand"] * scale1[None, :]                       # (Cin, Ce) f32
    wd_f = (params["w_dw"] * scale2[None, None, :]).reshape(k * k, Ce)  # f32
    wpt_f = (params["w_proj"] * scale3[None, :]).T.astype(jnp.bfloat16)  # (Cout, Ce)

    # NHWC (channels on lanes) + zero pad for the depthwise conv.  W is padded
    # up to a multiple of 8 so the in-kernel (Hp*Wp, Cin) reshape is
    # sublane-tile aligned (no relayout copies).
    xt = jnp.transpose(xs, (0, 2, 3, 1))                 # (N, Ho, Wo, Cin)
    Hp = Ho + 2 * p
    Wp = _round_up(Wo + 2 * p, 8)
    xp = jnp.pad(xt, ((0, 0), (p, p), (p, Wp - Wo - p), (0, 0)))

    kern = functools.partial(_mbconv_kernel, k=k, p=p, Ho=Ho, Wo=Wo,
                             Hp=Hp, Wp=Wp, add_shortcut=shortcut)

    def _fixed(n):
        return (0, 0)

    in_specs = [
        pl.BlockSpec((1, Hp, Wp, Cin), lambda n: (n, 0, 0, 0)),   # padded input
        pl.BlockSpec((Cin, Ce), _fixed),                          # w_expand (folded)
        pl.BlockSpec((1, Ce), _fixed),                            # bias1
        pl.BlockSpec((k * k, Ce), _fixed),                        # w_dw (folded)
        pl.BlockSpec((1, Ce), _fixed),                            # bias2
        pl.BlockSpec((Ce, Ch), _fixed),                           # w_se1
        pl.BlockSpec((1, Ch), _fixed),                            # b_se1
        pl.BlockSpec((Ch, Ce), _fixed),                           # w_se2
        pl.BlockSpec((1, Ce), _fixed),                            # b_se2
        pl.BlockSpec((Cout, Ce), _fixed),                         # w_proj^T (folded)
        pl.BlockSpec((Cout, 1), _fixed),                          # bias3
    ]
    inputs = [
        xp, we_f, bias1.reshape(1, Ce), wd_f, bias2.reshape(1, Ce),
        params["w_se1"], params["b_se1"].reshape(1, Ch),
        params["w_se2"], params["b_se2"].reshape(1, Ce),
        wpt_f, bias3.reshape(Cout, 1),
    ]
    if shortcut:
        # stride == 1 and Cin == Cout here; reuse the raw NCHW input directly
        # (no transpose, no zeros tensor when there is no shortcut).
        in_specs.append(pl.BlockSpec((1, Cout, M2), lambda n: (n, 0, 0)))
        inputs.append(x.reshape(N, Cin, Hin * Win))

    out_flat = pl.pallas_call(
        kern,
        out_shape=jax.ShapeDtypeStruct((N, Cout, M2), jnp.float32),
        grid=(N,),
        in_specs=in_specs,
        out_specs=pl.BlockSpec((1, Cout, M2), lambda n: (n, 0, 0)),
        scratch_shapes=[pltpu.VMEM((Hp, Wp, Ce), jnp.float32)],
        compiler_params=pltpu.CompilerParams(
            dimension_semantics=("parallel",),
            vmem_limit_bytes=32 * 1024 * 1024),
    )(*inputs)

    # Output is already NCHW (channel-major, lane-dense spatial axis).
    return out_flat.reshape(N, Cout, Ho, Wo)


# ------------------------- pure-JAX reference (for checking) ---------------------
def mbconv_reference(x_nchw, params, *, kernel_size, stride, shortcut):
    hi = jax.lax.Precision.HIGHEST
    x = jnp.transpose(x_nchw, (0, 2, 3, 1)).astype(jnp.float32)
    xs = x[:, ::stride, ::stride, :]
    s1, b1 = _fold_bn(*params["bn1"])
    s2, b2 = _fold_bn(*params["bn2"])
    s3, b3 = _fold_bn(*params["bn3"])
    e = _swish(jnp.einsum("nhwc,cd->nhwd", xs, params["w_expand"], precision=hi) * s1 + b1)
    p = kernel_size // 2
    H, W = e.shape[1], e.shape[2]
    xp = jnp.pad(e, ((0, 0), (p, p), (p, p), (0, 0)))
    acc = jnp.zeros_like(e)
    for ki in range(kernel_size):
        for kj in range(kernel_size):
            acc = acc + xp[:, ki:ki + H, kj:kj + W, :] * params["w_dw"][ki, kj]
    d = _swish(acc * s2 + b2)
    pooled = d.mean(axis=(1, 2))
    h = _swish(jnp.dot(pooled, params["w_se1"], precision=hi) + params["b_se1"])
    g = jax.nn.sigmoid(jnp.dot(h, params["w_se2"], precision=hi) + params["b_se2"])
    xg = d * g[:, None, None, :]
    y = jnp.einsum("nhwc,cd->nhwd", xg, params["w_proj"], precision=hi) * s3 + b3
    if shortcut:
        y = y + xs
    return jnp.transpose(y, (0, 3, 1, 2))


if __name__ == "__main__":
    key = jax.random.PRNGKey(0)
    N, Cin, Hin, Win = 2, 4, 16, 16
    Cout = 4
    kernel_size, stride, se_scale = 3, 1, 4
    expand = 6
    Ce = Cin * expand
    Ch = Ce * se_scale

    keys = jax.random.split(key, 20)

    def uni(k, shape):
        return jax.random.uniform(k, shape, jnp.float32, 0.5, 1.5)

    # deterministic synthetic parameters (gamma, beta, running_mean, running_var)
    params = dict(
        w_expand=jax.random.normal(keys[0], (Cin, Ce), jnp.float32) * 0.3,
        bn1=(uni(keys[1], (Ce,)), jax.random.normal(keys[2], (Ce,)) * 0.1,
             jax.random.normal(keys[3], (Ce,)) * 0.1, uni(keys[4], (Ce,))),
        w_dw=jax.random.normal(keys[5], (kernel_size, kernel_size, Ce), jnp.float32) * 0.3,
        bn2=(uni(keys[6], (Ce,)), jax.random.normal(keys[7], (Ce,)) * 0.1,
             jax.random.normal(keys[8], (Ce,)) * 0.1, uni(keys[9], (Ce,))),
        w_se1=jax.random.normal(keys[10], (Ce, Ch), jnp.float32) * 0.1,
        b_se1=jax.random.normal(keys[11], (Ch,), jnp.float32) * 0.1,
        w_se2=jax.random.normal(keys[12], (Ch, Ce), jnp.float32) * 0.1,
        b_se2=jax.random.normal(keys[13], (Ce,), jnp.float32) * 0.1,
        w_proj=jax.random.normal(keys[14], (Ce, Cout), jnp.float32) * 0.3,
        bn3=(uni(keys[15], (Cout,)), jax.random.normal(keys[16], (Cout,)) * 0.1,
             jax.random.normal(keys[17], (Cout,)) * 0.1, uni(keys[18], (Cout,))),
    )
    x = jax.random.normal(keys[19], (N, Cin, Hin, Win), jnp.float32)

    shortcut = (stride == 1 and Cin == Cout)
    fwd = jax.jit(functools.partial(mbconv_forward, kernel_size=kernel_size,
                                    stride=stride, shortcut=shortcut))
    out = jax.block_until_ready(fwd(x, params))

    ref = mbconv_reference(x, params, kernel_size=kernel_size, stride=stride,
                           shortcut=shortcut)
    ref = jax.block_until_ready(ref)

    assert out.shape == (N, Cout, Hin // stride, Win // stride), out.shape
    # project matmul runs with bf16 MXU operands (f32 accumulate), hence the
    # slightly looser tolerance vs. the f32 HIGHEST-precision reference.
    np.testing.assert_allclose(np.asarray(out), np.asarray(ref), rtol=2e-2, atol=2e-2)
    print("KERNEL_OK")
</pallas_src>

<mosaic_0001>
module attributes {stable_mosaic.version = 11 : i64} {
  func.func @_mbconv_kernel(%arg0: i32, %arg1: memref<1x18x24x4xf32, #tpu.memory_space<vmem>>, %arg2: memref<4x24xf32, #tpu.memory_space<vmem>>, %arg3: memref<1x24xf32, #tpu.memory_space<vmem>>, %arg4: memref<9x24xf32, #tpu.memory_space<vmem>>, %arg5: memref<1x24xf32, #tpu.memory_space<vmem>>, %arg6: memref<24x96xf32, #tpu.memory_space<vmem>>, %arg7: memref<1x96xf32, #tpu.memory_space<vmem>>, %arg8: memref<96x24xf32, #tpu.memory_space<vmem>>, %arg9: memref<1x24xf32, #tpu.memory_space<vmem>>, %arg10: memref<4x24xbf16, #tpu.memory_space<vmem>>, %arg11: memref<4x1xf32, #tpu.memory_space<vmem>>, %arg12: memref<1x4x256xf32, #tpu.memory_space<vmem>>, %arg13: memref<1x4x256xf32, #tpu.memory_space<vmem>>, %arg14: memref<18x24x24xf32, #tpu.memory_space<vmem>>) attributes {dimension_semantics = [#tpu.dimension_semantics<parallel>], iteration_bounds = array<i64: 2>, scalar_prefetch = 0 : i64, scratch_operands = 1 : i64, tpu.core_type = #tpu.core_type<tc>, window_params = [{transform_indices = @transform_0, window_bounds = array<i64: 1, 18, 24, 4>}, {pipeline_mode = #tpu.pipeline_mode<synchronous>, transform_indices = @transform_1, window_bounds = array<i64: 4, 24>}, {pipeline_mode = #tpu.pipeline_mode<synchronous>, transform_indices = @transform_2, window_bounds = array<i64: 1, 24>}, {pipeline_mode = #tpu.pipeline_mode<synchronous>, transform_indices = @transform_3, window_bounds = array<i64: 9, 24>}, {pipeline_mode = #tpu.pipeline_mode<synchronous>, transform_indices = @transform_4, window_bounds = array<i64: 1, 24>}, {pipeline_mode = #tpu.pipeline_mode<synchronous>, transform_indices = @transform_5, window_bounds = array<i64: 24, 96>}, {pipeline_mode = #tpu.pipeline_mode<synchronous>, transform_indices = @transform_6, window_bounds = array<i64: 1, 96>}, {pipeline_mode = #tpu.pipeline_mode<synchronous>, transform_indices = @transform_7, window_bounds = array<i64: 96, 24>}, {pipeline_mode = #tpu.pipeline_mode<synchronous>, transform_indices = @transform_8, window_bounds = array<i64: 1, 24>}, {pipeline_mode = #tpu.pipeline_mode<synchronous>, transform_indices = @transform_9, window_bounds = array<i64: 4, 24>}, {pipeline_mode = #tpu.pipeline_mode<synchronous>, transform_indices = @transform_10, window_bounds = array<i64: 4, 1>}, {transform_indices = @transform_11, window_bounds = array<i64: 1, 4, 256>}, {transform_indices = @transform_12, window_bounds = array<i64: 1, 4, 256>}]} {
    %c0 = arith.constant 0 : index
    %c0_0 = arith.constant 0 : index
    %c0_1 = arith.constant 0 : index
    %c0_2 = arith.constant 0 : index
    %0 = vector.load %arg1[%c0, %c0_0, %c0_1, %c0_2] : memref<1x18x24x4xf32, #tpu.memory_space<vmem>>, vector<1x18x24x4xf32>
    %1 = vector.shape_cast %0 : vector<1x18x24x4xf32> to vector<18x24x4xf32>
    %2 = vector.shape_cast %1 : vector<18x24x4xf32> to vector<432x4xf32>
    %c0_3 = arith.constant 0 : index
    %c0_4 = arith.constant 0 : index
    %3 = vector.load %arg2[%c0_3, %c0_4] : memref<4x24xf32, #tpu.memory_space<vmem>>, vector<4x24xf32>
    %cst = arith.constant dense<0.000000e+00> : vector<432x24xf32>
    %4 = tpu.matmul %2, %3, %cst {dimension_numbers = #tpu.dot_dimension_numbers<[1], [0], [0], [1], [0, 0, 1, 1], [], []>} : vector<432x4xf32>, vector<4x24xf32>, vector<432x24xf32> -> vector<432x24xf32>
    %c0_5 = arith.constant 0 : index
    %c0_6 = arith.constant 0 : index
    %5 = vector.load %arg3[%c0_5, %c0_6] : memref<1x24xf32, #tpu.memory_space<vmem>>, vector<1x24xf32>
    %6 = vector.broadcast %5 : vector<1x24xf32> to vector<432x24xf32>
    %7 = arith.addf %4, %6 : vector<432x24xf32>
    %8 = arith.negf %7 : vector<432x24xf32>
    %9 = math.exp %8 : vector<432x24xf32>
    %cst_7 = arith.constant 1.000000e+00 : f32
    %10 = vector.broadcast %cst_7 : f32 to vector<432x24xf32>
    %11 = arith.addf %10, %9 : vector<432x24xf32>
    %12 = arith.divf %10, %11 : vector<432x24xf32>
    %13 = arith.mulf %7, %12 : vector<432x24xf32>
    %14 = vector.shape_cast %13 : vector<432x24xf32> to vector<18x24x24xf32>
    %15 = tpu.iota {dimensions = array<i32: 0>} : vector<18x24x24xi32>
    %16 = tpu.iota {dimensions = array<i32: 1>} : vector<18x24x24xi32>
    %c1_i32 = arith.constant 1 : i32
    %17 = vector.broadcast %c1_i32 : i32 to vector<18x24x24xi32>
    %18 = arith.cmpi sge, %15, %17 : vector<18x24x24xi32>
    %c17_i32 = arith.constant 17 : i32
    %19 = vector.broadcast %c17_i32 : i32 to vector<18x24x24xi32>
    %20 = arith.cmpi slt, %15, %19 : vector<18x24x24xi32>
    %21 = arith.andi %18, %20 : vector<18x24x24xi1>
    %c1_i32_8 = arith.constant 1 : i32
    %22 = vector.broadcast %c1_i32_8 : i32 to vector<18x24x24xi32>
    %23 = arith.cmpi sge, %16, %22 : vector<18x24x24xi32>
    %24 = arith.andi %21, %23 : vector<18x24x24xi1>
    %c17_i32_9 = arith.constant 17 : i32
    %25 = vector.broadcast %c17_i32_9 : i32 to vector<18x24x24xi32>
    %26 = arith.cmpi slt, %16, %25 : vector<18x24x24xi32>
    %27 = arith.andi %24, %26 : vector<18x24x24xi1>
    %cst_10 = arith.constant 0.000000e+00 : f32
    %28 = vector.broadcast %cst_10 : f32 to vector<18x24x24xf32>
    %29 = arith.select %27, %14, %28 : vector<18x24x24xi1>, vector<18x24x24xf32>
    %c0_11 = arith.constant 0 : index
    %c0_12 = arith.constant 0 : index
    %c0_13 = arith.constant 0 : index
    %30 = vector.load %arg14[%c0_11, %c0_12, %c0_13] : memref<18x24x24xf32, #tpu.memory_space<vmem>>, vector<18x24x24xf32>
    tpu.vector_store %arg14[%c0_11, %c0_12, %c0_13], %29 {strides = array<i32>} : memref<18x24x24xf32, #tpu.memory_space<vmem>>, vector<18x24x24xf32>,
    %c0_14 = arith.constant 0 : index
    %c0_15 = arith.constant 0 : index
    %31 = vector.load %arg4[%c0_14, %c0_15] : memref<9x24xf32, #tpu.memory_space<vmem>>, vector<9x24xf32>
    %cst_16 = arith.constant 0.000000e+00 : f32
    %32 = vector.broadcast %cst_16 : f32 to vector<16x16x24xf32>
    %c0_17 = arith.constant 0 : index
    %c0_18 = arith.constant 0 : index
    %c0_19 = arith.constant 0 : index
    %33 = vector.load %arg14[%c0_17, %c0_18, %c0_19] : memref<18x24x24xf32, #tpu.memory_space<vmem>>, vector<16x16x24xf32>
    %34 = vector.extract_strided_slice %31 {offsets = [0, 0], sizes = [1, 24], strides = [1, 1]} : vector<9x24xf32> to vector<1x24xf32>
    %35 = vector.shape_cast %34 : vector<1x24xf32> to vector<24xf32>
    %36 = vector.shape_cast %35 : vector<24xf32> to vector<1x1x24xf32>
    %37 = vector.broadcast %36 : vector<1x1x24xf32> to vector<16x16x24xf32>
    %38 = arith.mulf %33, %37 : vector<16x16x24xf32>
    %39 = arith.addf %32, %38 : vector<16x16x24xf32>
    %c1 = arith.constant 1 : index
    %c0_20 = arith.constant 0 : index
    %c0_21 = arith.constant 0 : index
    %40 = vector.load %arg14[%c1, %c0_20, %c0_21] : memref<18x24x24xf32, #tpu.memory_space<vmem>>, vector<16x16x24xf32>
    %41 = vector.extract_strided_slice %31 {offsets = [3, 0], sizes = [1, 24], strides = [1, 1]} : vector<9x24xf32> to vector<1x24xf32>
    %42 = vector.shape_cast %41 : vector<1x24xf32> to vector<24xf32>
    %43 = vector.shape_cast %42 : vector<24xf32> to vector<1x1x24xf32>
    %44 = vector.broadcast %43 : vector<1x1x24xf32> to vector<16x16x24xf32>
    %45 = arith.mulf %40, %44 : vector<16x16x24xf32>
    %46 = arith.addf %39, %45 : vector<16x16x24xf32>
    %c2 = arith.constant 2 : index
    %c0_22 = arith.constant 0 : index
    %c0_23 = arith.constant 0 : index
    %47 = vector.load %arg14[%c2, %c0_22, %c0_23] : memref<18x24x24xf32, #tpu.memory_space<vmem>>, vector<16x16x24xf32>
    %48 = vector.extract_strided_slice %31 {offsets = [6, 0], sizes = [1, 24], strides = [1, 1]} : vector<9x24xf32> to vector<1x24xf32>
    %49 = vector.shape_cast %48 : vector<1x24xf32> to vector<24xf32>
    %50 = vector.shape_cast %49 : vector<24xf32> to vector<1x1x24xf32>
    %51 = vector.broadcast %50 : vector<1x1x24xf32> to vector<16x16x24xf32>
    %52 = arith.mulf %47, %51 : vector<16x16x24xf32>
    %53 = arith.addf %46, %52 : vector<16x16x24xf32>
    %c0_24 = arith.constant 0 : index
    %c1_25 = arith.constant 1 : index
    %c0_26 = arith.constant 0 : index
    %54 = vector.load %arg14[%c0_24, %c1_25, %c0_26] : memref<18x24x24xf32, #tpu.memory_space<vmem>>, vector<16x16x24xf32>
    %55 = vector.extract_strided_slice %31 {offsets = [1, 0], sizes = [1, 24], strides = [1, 1]} : vector<9x24xf32> to vector<1x24xf32>
    %56 = vector.shape_cast %55 : vector<1x24xf32> to vector<24xf32>
    %57 = vector.shape_cast %56 : vector<24xf32> to vector<1x1x24xf32>
    %58 = vector.broadcast %57 : vector<1x1x24xf32> to vector<16x16x24xf32>
    %59 = arith.mulf %54, %58 : vector<16x16x24xf32>
    %60 = arith.addf %53, %59 : vector<16x16x24xf32>
    %c1_27 = arith.constant 1 : index
    %c1_28 = arith.constant 1 : index
    %c0_29 = arith.constant 0 : index
    %61 = vector.load %arg14[%c1_27, %c1_28, %c0_29] : memref<18x24x24xf32, #tpu.memory_space<vmem>>, vector<16x16x24xf32>
    %62 = vector.extract_strided_slice %31 {offsets = [4, 0], sizes = [1, 24], strides = [1, 1]} : vector<9x24xf32> to vector<1x24xf32>
    %63 = vector.shape_cast %62 : vector<1x24xf32> to vector<24xf32>
    %64 = vector.shape_cast %63 : vector<24xf32> to vector<1x1x24xf32>
    %65 = vector.broadcast %64 : vector<1x1x24xf32> to vector<16x16x24xf32>
    %66 = arith.mulf %61, %65 : vector<16x16x24xf32>
    %67 = arith.addf %60, %66 : vector<16x16x24xf32>
    %c2_30 = arith.constant 2 : index
    %c1_31 = arith.constant 1 : index
    %c0_32 = arith.constant 0 : index
    %68 = vector.load %arg14[%c2_30, %c1_31, %c0_32] : memref<18x24x24xf32, #tpu.memory_space<vmem>>, vector<16x16x24xf32>
    %69 = vector.extract_strided_slice %31 {offsets = [7, 0], sizes = [1, 24], strides = [1, 1]} : vector<9x24xf32> to vector<1x24xf32>
    %70 = vector.shape_cast %69 : vector<1x24xf32> to vector<24xf32>
    %71 = vector.shape_cast %70 : vector<24xf32> to vector<1x1x24xf32>
    %72 = vector.broadcast %71 : vector<1x1x24xf32> to vector<16x16x24xf32>
    %73 = arith.mulf %68, %72 : vector<16x16x24xf32>
    %74 = arith.addf %67, %73 : vector<16x16x24xf32>
    %c0_33 = arith.constant 0 : index
    %c2_34 = arith.constant 2 : index
    %c0_35 = arith.constant 0 : index
    %75 = vector.load %arg14[%c0_33, %c2_34, %c0_35] : memref<18x24x24xf32, #tpu.memory_space<vmem>>, vector<16x16x24xf32>
    %76 = vector.extract_strided_slice %31 {offsets = [2, 0], sizes = [1, 24], strides = [1, 1]} : vector<9x24xf32> to vector<1x24xf32>
    %77 = vector.shape_cast %76 : vector<1x24xf32> to vector<24xf32>
    %78 = vector.shape_cast %77 : vector<24xf32> to vector<1x1x24xf32>
    %79 = vector.broadcast %78 : vector<1x1x24xf32> to vector<16x16x24xf32>
    %80 = arith.mulf %75, %79 : vector<16x16x24xf32>
    %81 = arith.addf %74, %80 : vector<16x16x24xf32>
    %c1_36 = arith.constant 1 : index
    %c2_37 = arith.constant 2 : index
    %c0_38 = arith.constant 0 : index
    %82 = vector.load %arg14[%c1_36, %c2_37, %c0_38] : memref<18x24x24xf32, #tpu.memory_space<vmem>>, vector<16x16x24xf32>
    %83 = vector.extract_strided_slice %31 {offsets = [5, 0], sizes = [1, 24], strides = [1, 1]} : vector<9x24xf32> to vector<1x24xf32>
    %84 = vector.shape_cast %83 : vector<1x24xf32> to vector<24xf32>
    %85 = vector.shape_cast %84 : vector<24xf32> to vector<1x1x24xf32>
    %86 = vector.broadcast %85 : vector<1x1x24xf32> to vector<16x16x24xf32>
    %87 = arith.mulf %82, %86 : vector<16x16x24xf32>
    %88 = arith.addf %81, %87 : vector<16x16x24xf32>
    %c2_39 = arith.constant 2 : index
    %c2_40 = arith.constant 2 : index
    %c0_41 = arith.constant 0 : index
    %89 = vector.load %arg14[%c2_39, %c2_40, %c0_41] : memref<18x24x24xf32, #tpu.memory_space<vmem>>, vector<16x16x24xf32>
    %90 = vector.extract_strided_slice %31 {offsets = [8, 0], sizes = [1, 24], strides = [1, 1]} : vector<9x24xf32> to vector<1x24xf32>
    %91 = vector.shape_cast %90 : vector<1x24xf32> to vector<24xf32>
    %92 = vector.shape_cast %91 : vector<24xf32> to vector<1x1x24xf32>
    %93 = vector.broadcast %92 : vector<1x1x24xf32> to vector<16x16x24xf32>
    %94 = arith.mulf %89, %93 : vector<16x16x24xf32>
    %95 = arith.addf %88, %94 : vector<16x16x24xf32>
    %96 = vector.shape_cast %95 : vector<16x16x24xf32> to vector<256x24xf32>
    %c0_42 = arith.constant 0 : index
    %c0_43 = arith.constant 0 : index
    %97 = vector.load %arg5[%c0_42, %c0_43] : memref<1x24xf32, #tpu.memory_space<vmem>>, vector<1x24xf32>
    %98 = vector.broadcast %97 : vector<1x24xf32> to vector<256x24xf32>
    %99 = arith.addf %96, %98 : vector<256x24xf32>
    %100 = arith.negf %99 : vector<256x24xf32>
    %101 = math.exp %100 : vector<256x24xf32>
    %cst_44 = arith.constant 1.000000e+00 : f32
    %102 = vector.broadcast %cst_44 : f32 to vector<256x24xf32>
    %103 = arith.addf %102, %101 : vector<256x24xf32>
    %104 = arith.divf %102, %103 : vector<256x24xf32>
    %105 = arith.mulf %99, %104 : vector<256x24xf32>
    %cst_45 = arith.constant dense<0.000000e+00> : vector<24xf32>
    %106 = vector.multi_reduction <add>, %105, %cst_45 [0] : vector<256x24xf32> to vector<24xf32>
    %107 = vector.shape_cast %106 : vector<24xf32> to vector<1x24xf32>
    %cst_46 = arith.constant 2.560000e+02 : f32
    %108 = vector.broadcast %cst_46 : f32 to vector<1x24xf32>
    %109 = arith.divf %107, %108 : vector<1x24xf32>
    %c0_47 = arith.constant 0 : index
    %c0_48 = arith.constant 0 : index
    %110 = vector.load %arg6[%c0_47, %c0_48] : memref<24x96xf32, #tpu.memory_space<vmem>>, vector<24x96xf32>
    %cst_49 = arith.constant dense<0.000000e+00> : vector<1x96xf32>
    %111 = tpu.matmul %109, %110, %cst_49 {dimension_numbers = #tpu.dot_dimension_numbers<[1], [0], [0], [1], [0, 0, 1, 1], [], []>} : vector<1x24xf32>, vector<24x96xf32>, vector<1x96xf32> -> vector<1x96xf32>
    %c0_50 = arith.constant 0 : index
    %c0_51 = arith.constant 0 : index
    %112 = vector.load %arg7[%c0_50, %c0_51] : memref<1x96xf32, #tpu.memory_space<vmem>>, vector<1x96xf32>
    %113 = arith.addf %111, %112 : vector<1x96xf32>
    %114 = arith.negf %113 : vector<1x96xf32>
    %115 = math.exp %114 : vector<1x96xf32>
    %cst_52 = arith.constant 1.000000e+00 : f32
    %116 = vector.broadcast %cst_52 : f32 to vector<1x96xf32>
    %117 = arith.addf %116, %115 : vector<1x96xf32>
    %118 = arith.divf %116, %117 : vector<1x96xf32>
    %119 = arith.mulf %113, %118 : vector<1x96xf32>
    %c0_53 = arith.constant 0 : index
    %c0_54 = arith.constant 0 : index
    %120 = vector.load %arg8[%c0_53, %c0_54] : memref<96x24xf32, #tpu.memory_space<vmem>>, vector<96x24xf32>
    %cst_55 = arith.constant dense<0.000000e+00> : vector<1x24xf32>
    %121 = tpu.matmul %119, %120, %cst_55 {dimension_numbers = #tpu.dot_dimension_numbers<[1], [0], [0], [1], [0, 0, 1, 1], [], []>} : vector<1x96xf32>, vector<96x24xf32>, vector<1x24xf32> -> vector<1x24xf32>
    %c0_56 = arith.constant 0 : index
    %c0_57 = arith.constant 0 : index
    %122 = vector.load %arg9[%c0_56, %c0_57] : memref<1x24xf32, #tpu.memory_space<vmem>>, vector<1x24xf32>
    %123 = arith.addf %121, %122 : vector<1x24xf32>
    %124 = arith.negf %123 : vector<1x24xf32>
    %125 = math.exp %124 : vector<1x24xf32>
    %cst_58 = arith.constant 1.000000e+00 : f32
    %126 = vector.broadcast %cst_58 : f32 to vector<1x24xf32>
    %127 = arith.addf %126, %125 : vector<1x24xf32>
    %128 = arith.divf %126, %127 : vector<1x24xf32>
    %129 = vector.broadcast %128 : vector<1x24xf32> to vector<256x24xf32>
    %130 = arith.mulf %105, %129 : vector<256x24xf32>
    %131 = arith.truncf %130 : vector<256x24xf32> to vector<256x24xbf16>
    %c0_59 = arith.constant 0 : index
    %c0_60 = arith.constant 0 : index
    %132 = vector.load %arg10[%c0_59, %c0_60] : memref<4x24xbf16, #tpu.memory_space<vmem>>, vector<4x24xbf16>
    %cst_61 = arith.constant dense<0.000000e+00> : vector<4x256xf32>
    %133 = tpu.matmul %132, %131, %cst_61 {dimension_numbers = #tpu.dot_dimension_numbers<[1], [1], [0], [0], [0, 0, 1, 0], [], []>} : vector<4x24xbf16>, vector<256x24xbf16>, vector<4x256xf32> -> vector<4x256xf32>
    %c0_62 = arith.constant 0 : index
    %c0_63 = arith.constant 0 : index
    %134 = vector.load %arg11[%c0_62, %c0_63] : memref<4x1xf32, #tpu.memory_space<vmem>>, vector<4x1xf32>
    %135 = vector.broadcast %134 : vector<4x1xf32> to vector<4x256xf32>
    %136 = arith.addf %133, %135 : vector<4x256xf32>
    %c0_64 = arith.constant 0 : index
    %c0_65 = arith.constant 0 : index
    %c0_66 = arith.constant 0 : index
    %137 = vector.load %arg12[%c0_64, %c0_65, %c0_66] : memref<1x4x256xf32, #tpu.memory_space<vmem>>, vector<1x4x256xf32>
    %138 = vector.shape_cast %137 : vector<1x4x256xf32> to vector<4x256xf32>
    %139 = arith.addf %136, %138 : vector<4x256xf32>
    %c0_67 = arith.constant 0 : index
    %c0_68 = arith.constant 0 : index
    %c0_69 = arith.constant 0 : index
    %140 = vector.load %arg13[%c0_67, %c0_68, %c0_69] : memref<1x4x256xf32, #tpu.memory_space<vmem>>, vector<1x4x256xf32>
    %141 = vector.shape_cast %140 : vector<1x4x256xf32> to vector<4x256xf32>
    %142 = vector.shape_cast %139 : vector<4x256xf32> to vector<1x4x256xf32>
    tpu.vector_store %arg13[%c0_67, %c0_68, %c0_69], %142 {strides = array<i32>} : memref<1x4x256xf32, #tpu.memory_space<vmem>>, vector<1x4x256xf32>,
    return
  }
  func.func @transform_0(%arg0: i32) -> (i32, i32, i32, i32) {
    %c0_i32 = arith.constant 0 : i32
    %c0_i32_0 = arith.constant 0 : i32
    %c0_i32_1 = arith.constant 0 : i32
    %c0_i32_2 = arith.constant 0 : i32
    return %arg0, %c0_i32, %c0_i32_0, %c0_i32_1 : i32, i32, i32, i32
  }
  func.func @transform_1(%arg0: i32) -> (i32, i32) {
    %c0_i32 = arith.constant 0 : i32
    %c0_i32_0 = arith.constant 0 : i32
    %c0_i32_1 = arith.constant 0 : i32
    return %c0_i32, %c0_i32_0 : i32, i32
  }
  func.func @transform_2(%arg0: i32) -> (i32, i32) {
    %c0_i32 = arith.constant 0 : i32
    %c0_i32_0 = arith.constant 0 : i32
    %c0_i32_1 = arith.constant 0 : i32
    return %c0_i32, %c0_i32_0 : i32, i32
  }
  func.func @transform_3(%arg0: i32) -> (i32, i32) {
    %c0_i32 = arith.constant 0 : i32
    %c0_i32_0 = arith.constant 0 : i32
    %c0_i32_1 = arith.constant 0 : i32
    return %c0_i32, %c0_i32_0 : i32, i32
  }
  func.func @transform_4(%arg0: i32) -> (i32, i32) {
    %c0_i32 = arith.constant 0 : i32
    %c0_i32_0 = arith.constant 0 : i32
    %c0_i32_1 = arith.constant 0 : i32
    return %c0_i32, %c0_i32_0 : i32, i32
  }
  func.func @transform_5(%arg0: i32) -> (i32, i32) {
    %c0_i32 = arith.constant 0 : i32
    %c0_i32_0 = arith.constant 0 : i32
    %c0_i32_1 = arith.constant 0 : i32
    return %c0_i32, %c0_i32_0 : i32, i32
  }
  func.func @transform_6(%arg0: i32) -> (i32, i32) {
    %c0_i32 = arith.constant 0 : i32
    %c0_i32_0 = arith.constant 0 : i32
    %c0_i32_1 = arith.constant 0 : i32
    return %c0_i32, %c0_i32_0 : i32, i32
  }
  func.func @transform_7(%arg0: i32) -> (i32, i32) {
    %c0_i32 = arith.constant 0 : i32
    %c0_i32_0 = arith.constant 0 : i32
    %c0_i32_1 = arith.constant 0 : i32
    return %c0_i32, %c0_i32_0 : i32, i32
  }
  func.func @transform_8(%arg0: i32) -> (i32, i32) {
    %c0_i32 = arith.constant 0 : i32
    %c0_i32_0 = arith.constant 0 : i32
    %c0_i32_1 = arith.constant 0 : i32
    return %c0_i32, %c0_i32_0 : i32, i32
  }
  func.func @transform_9(%arg0: i32) -> (i32, i32) {
    %c0_i32 = arith.constant 0 : i32
    %c0_i32_0 = arith.constant 0 : i32
    %c0_i32_1 = arith.constant 0 : i32
    return %c0_i32, %c0_i32_0 : i32, i32
  }
  func.func @transform_10(%arg0: i32) -> (i32, i32) {
    %c0_i32 = arith.constant 0 : i32
    %c0_i32_0 = arith.constant 0 : i32
    %c0_i32_1 = arith.constant 0 : i32
    return %c0_i32, %c0_i32_0 : i32, i32
  }
  func.func @transform_11(%arg0: i32) -> (i32, i32, i32) {
    %c0_i32 = arith.constant 0 : i32
    %c0_i32_0 = arith.constant 0 : i32
    %c0_i32_1 = arith.constant 0 : i32
    return %arg0, %c0_i32, %c0_i32_0 : i32, i32, i32
  }
  func.func @transform_12(%arg0: i32) -> (i32, i32, i32) {
    %c0_i32 = arith.constant 0 : i32
    %c0_i32_0 = arith.constant 0 : i32
    %c0_i32_1 = arith.constant 0 : i32
    return %arg0, %c0_i32, %c0_i32_0 : i32, i32, i32
  }
}

</mosaic_0001>

<llo_original>
// kernel: mbconv_forward.1
$region0: #{mbconv_forward.1}
  #allocation0 [shape = 'u32[]', space=smem, size = 0x4, offset = 0x4, fixed_abs, tag = 'smem constant byte address 0x4 - core index']
  #allocation1 [shape = 'u32[72,128]{1,0:T(1,128)}', space=vmem, size = 0x9000, scoped, tag = 'internal scratch']
  #allocation2 [shape = 'f32[18,24,24]{2,1,0:T(8,128)}', space=vmem, size = 0x36000, scoped, tag = 'scratch operand']
  %s0 = inlined_call_operand.vmem [shape: f32[2,18,24,4], index: 0, kind: input, shape index: {}]
  %s1 = inlined_call_operand.vmem [shape: f32[4,24], index: 1, kind: input, shape index: {}]
  %s2 = inlined_call_operand.vmem [shape: f32[1,24], index: 2, kind: input, shape index: {}]
  %s3 = inlined_call_operand.vmem [shape: f32[9,24], index: 3, kind: input, shape index: {}]
  %s4 = inlined_call_operand.vmem [shape: f32[1,24], index: 4, kind: input, shape index: {}]
  %s5 = inlined_call_operand.vmem [shape: f32[24,96], index: 5, kind: input, shape index: {}]
  %s6 = inlined_call_operand.vmem [shape: f32[1,96], index: 6, kind: input, shape index: {}]
  %s7 = inlined_call_operand.vmem [shape: f32[96,24], index: 7, kind: input, shape index: {}]
  %s8 = inlined_call_operand.vmem [shape: f32[1,24], index: 8, kind: input, shape index: {}]
  %s9 = inlined_call_operand.vmem [shape: bf16[4,24], index: 9, kind: input, shape index: {}]
  %s10 = inlined_call_operand.vmem [shape: f32[4,1], index: 10, kind: input, shape index: {}]
  %s11 = inlined_call_operand.vmem [shape: f32[2,4,256], index: 11, kind: input, shape index: {}]
  %s12 = inlined_call_operand.vmem [shape: f32[2,4,256], index: 12, kind: output, shape index: {}]
  %s13 = sld [smem:[#allocation0]]
  $region81: #{mbconv_forward.1} parent=0
    _
  %s15 = ssub.s32 1, %s13
  %s16 = scalar_select 0, %s15, %s13
  loop: start=0, step=1, limit=4
  $region2: #{mbconv_forward.1} parent=0 // loop_pre_header
    _
  $region3: #{mbconv_forward.1} parent=0 // loop_header
    %s18 = sphi 0, %s22
    %p19 = scmp.ge.s32.totalorder %s18, 4
    %s28 = sphi 0, %s30
    %s31 = sphi 0, %s28
    %s32 = sphi 0, %s31
    %s48 = sphi 0, %s32
    %s52 = sphi 0, %s52
    %s54 = sphi 0, %s52
    %s55 = sphi 0, %s54
    %s69 = sphi 0, %s55
    %s73 = sphi 0, %s73
    %s75 = sphi 0, %s73
    %s76 = sphi 0, %s75
    %s90 = sphi 0, %s76
    %s94 = sphi 0, %s94
    %s96 = sphi 0, %s94
    %s97 = sphi 0, %s96
    %s111 = sphi 0, %s97
    %s115 = sphi 0, %s115
    %s117 = sphi 0, %s115
    %s118 = sphi 0, %s117
    %s132 = sphi 0, %s118
    %s136 = sphi 0, %s136
    %s138 = sphi 0, %s136
    %s139 = sphi 0, %s138
    %s153 = sphi 0, %s139
    %s157 = sphi 0, %s157
    %s159 = sphi 0, %s157
    %s160 = sphi 0, %s159
    %s174 = sphi 0, %s160
    %s178 = sphi 0, %s178
    %s180 = sphi 0, %s178
    %s181 = sphi 0, %s180
    %s195 = sphi 0, %s181
    %s199 = sphi 0, %s199
    %s201 = sphi 0, %s199
    %s202 = sphi 0, %s201
    %s216 = sphi 0, %s202
    %s220 = sphi 0, %s220
    %s222 = sphi 0, %s220
    %s223 = sphi 0, %s222
    %s237 = sphi 0, %s223
    %s241 = sphi 0, %s241
    %s243 = sphi 0, %s241
    %s244 = sphi 0, %s243
    %s258 = sphi 0, %s244
    %s264 = sphi 0, %s266
    %s267 = sphi 0, %s264
    %s268 = sphi 0, %s267
    %s284 = sphi 0, %s268
    %s290 = sphi 0, %s292
    %s293 = sphi 0, %s290
    %s294 = sphi 0, %s293
    %s310 = sphi 0, %s294
  $region4: #{mbconv_forward.1} parent=0 // loop_header_branch
    %21 = sbr.rel (%p19) target = $region8
  $region5: #{mbconv_forward.1} parent=0 // loop_body
    %s23 = ssub.s32 %s18, 1
    %s24 = ssub.s32 %s18, 2
    %s25 = sadd.s32 %s18, 1
    %s26 = ssub.s32 %s18, %s25
    %p27 = scmp.eq.s32.totalorder %s26, 0
    %s29 = sadd.s32 %s28, 1
    %s30 = scalar_select %p27, %s28, %s29
    %p33 = pneg %p27
    %p34 = scmp.eq.s32.totalorder %s18, 1
    %p35 = por %p33, %p34
    %p36 = scmp.ne.s32.totalorder %s28, %s31
    %p37 = scmp.eq.s32.totalorder %s18, 0
    %p38 = por %p36, %p37
    %p39 = scmp.ne.s32.totalorder %s28, %s31
    %p40 = scmp.eq.s32.totalorder %s23, 1
    %p41 = por %p39, %p40
    %p42 = scmp.ne.s32.totalorder %s31, %s32
    %p43 = scmp.eq.s32.totalorder %s23, 0
    %p44 = por %p42, %p43
    %p45 = scmp.ne.s32.totalorder %s31, %s32
    %p46 = scmp.eq.s32.totalorder %s24, 1
    %p47 = por %p45, %p46
    %p49 = scmp.ne.s32.totalorder %s32, %s48
    %p50 = scmp.eq.s32.totalorder %s24, 0
    %p51 = por %p49, %p50
    %s53 = sadd.s32 %s52, 1
    %p56 = scmp.eq.s32.totalorder %s18, 1
    %p57 = scmp.ne.s32.totalorder %s52, %s54
    %p58 = scmp.eq.s32.totalorder %s18, 0
    %p59 = por %p57, %p58
    %p60 = scmp.ne.s32.totalorder %s52, %s54
    %p61 = scmp.eq.s32.totalorder %s23, 1
    %p62 = por %p60, %p61
    %p63 = scmp.ne.s32.totalorder %s54, %s55
    %p64 = scmp.eq.s32.totalorder %s23, 0
    %p65 = por %p63, %p64
    %p66 = scmp.ne.s32.totalorder %s54, %s55
    %p67 = scmp.eq.s32.totalorder %s24, 1
    %p68 = por %p66, %p67
    %p70 = scmp.ne.s32.totalorder %s55, %s69
    %p71 = scmp.eq.s32.totalorder %s24, 0
    %p72 = por %p70, %p71
    %s74 = sadd.s32 %s73, 1
    %p77 = scmp.eq.s32.totalorder %s18, 1
    %p78 = scmp.ne.s32.totalorder %s73, %s75
    %p79 = scmp.eq.s32.totalorder %s18, 0
    %p80 = por %p78, %p79
    %p81 = scmp.ne.s32.totalorder %s73, %s75
    %p82 = scmp.eq.s32.totalorder %s23, 1
    %p83 = por %p81, %p82
    %p84 = scmp.ne.s32.totalorder %s75, %s76
    %p85 = scmp.eq.s32.totalorder %s23, 0
    %p86 = por %p84, %p85
    %p87 = scmp.ne.s32.totalorder %s75, %s76
    %p88 = scmp.eq.s32.totalorder %s24, 1
    %p89 = por %p87, %p88
    %p91 = scmp.ne.s32.totalorder %s76, %s90
    %p92 = scmp.eq.s32.totalorder %s24, 0
    %p93 = por %p91, %p92
    %s95 = sadd.s32 %s94, 1
    %p98 = scmp.eq.s32.totalorder %s18, 1
    %p99 = scmp.ne.s32.totalorder %s94, %s96
    %p100 = scmp.eq.s32.totalorder %s18, 0
    %p101 = por %p99, %p100
    %p102 = scmp.ne.s32.totalorder %s94, %s96
    %p103 = scmp.eq.s32.totalorder %s23, 1
    %p104 = por %p102, %p103
    %p105 = scmp.ne.s32.totalorder %s96, %s97
    %p106 = scmp.eq.s32.totalorder %s23, 0
    %p107 = por %p105, %p106
    %p108 = scmp.ne.s32.totalorder %s96, %s97
    %p109 = scmp.eq.s32.totalorder %s24, 1
    %p110 = por %p108, %p109
    %p112 = scmp.ne.s32.totalorder %s97, %s111
    %p113 = scmp.eq.s32.totalorder %s24, 0
    %p114 = por %p112, %p113
    %s116 = sadd.s32 %s115, 1
    %p119 = scmp.eq.s32.totalorder %s18, 1
    %p120 = scmp.ne.s32.totalorder %s115, %s117
    %p121 = scmp.eq.s32.totalorder %s18, 0
    %p122 = por %p120, %p121
    %p123 = scmp.ne.s32.totalorder %s115, %s117
    %p124 = scmp.eq.s32.totalorder %s23, 1
    %p125 = por %p123, %p124
    %p126 = scmp.ne.s32.totalorder %s117, %s118
    %p127 = scmp.eq.s32.totalorder %s23, 0
    %p128 = por %p126, %p127
    %p129 = scmp.ne.s32.totalorder %s117, %s118
    %p130 = scmp.eq.s32.totalorder %s24, 1
    %p131 = por %p129, %p130
    %p133 = scmp.ne.s32.totalorder %s118, %s132
    %p134 = scmp.eq.s32.totalorder %s24, 0
    %p135 = por %p133, %p134
    %s137 = sadd.s32 %s136, 1
    %p140 = scmp.eq.s32.totalorder %s18, 1
    %p141 = scmp.ne.s32.totalorder %s136, %s138
    %p142 = scmp.eq.s32.totalorder %s18, 0
    %p143 = por %p141, %p142
    %p144 = scmp.ne.s32.totalorder %s136, %s138
    %p145 = scmp.eq.s32.totalorder %s23, 1
    %p146 = por %p144, %p145
    %p147 = scmp.ne.s32.totalorder %s138, %s139
    %p148 = scmp.eq.s32.totalorder %s23, 0
    %p149 = por %p147, %p148
    %p150 = scmp.ne.s32.totalorder %s138, %s139
    %p151 = scmp.eq.s32.totalorder %s24, 1
    %p152 = por %p150, %p151
    %p154 = scmp.ne.s32.totalorder %s139, %s153
    %p155 = scmp.eq.s32.totalorder %s24, 0
    %p156 = por %p154, %p155
    %s158 = sadd.s32 %s157, 1
    %p161 = scmp.eq.s32.totalorder %s18, 1
    %p162 = scmp.ne.s32.totalorder %s157, %s159
    %p163 = scmp.eq.s32.totalorder %s18, 0
    %p164 = por %p162, %p163
    %p165 = scmp.ne.s32.totalorder %s157, %s159
    %p166 = scmp.eq.s32.totalorder %s23, 1
    %p167 = por %p165, %p166
    %p168 = scmp.ne.s32.totalorder %s159, %s160
    %p169 = scmp.eq.s32.totalorder %s23, 0
    %p170 = por %p168, %p169
    %p171 = scmp.ne.s32.totalorder %s159, %s160
    %p172 = scmp.eq.s32.totalorder %s24, 1
    %p173 = por %p171, %p172
    %p175 = scmp.ne.s32.totalorder %s160, %s174
    %p176 = scmp.eq.s32.totalorder %s24, 0
    %p177 = por %p175, %p176
    %s179 = sadd.s32 %s178, 1
    %p182 = scmp.eq.s32.totalorder %s18, 1
    %p183 = scmp.ne.s32.totalorder %s178, %s180
    %p184 = scmp.eq.s32.totalorder %s18, 0
    %p185 = por %p183, %p184
    %p186 = scmp.ne.s32.totalorder %s178, %s180
    %p187 = scmp.eq.s32.totalorder %s23, 1
    %p188 = por %p186, %p187
    %p189 = scmp.ne.s32.totalorder %s180, %s181
    %p190 = scmp.eq.s32.totalorder %s23, 0
    %p191 = por %p189, %p190
    %p192 = scmp.ne.s32.totalorder %s180, %s181
    %p193 = scmp.eq.s32.totalorder %s24, 1
    %p194 = por %p192, %p193
    %p196 = scmp.ne.s32.totalorder %s181, %s195
    %p197 = scmp.eq.s32.totalorder %s24, 0
    %p198 = por %p196, %p197
    %s200 = sadd.s32 %s199, 1
    %p203 = scmp.eq.s32.totalorder %s18, 1
    %p204 = scmp.ne.s32.totalorder %s199, %s201
    %p205 = scmp.eq.s32.totalorder %s18, 0
    %p206 = por %p204, %p205
    %p207 = scmp.ne.s32.totalorder %s199, %s201
    %p208 = scmp.eq.s32.totalorder %s23, 1
    %p209 = por %p207, %p208
    %p210 = scmp.ne.s32.totalorder %s201, %s202
    %p211 = scmp.eq.s32.totalorder %s23, 0
    %p212 = por %p210, %p211
    %p213 = scmp.ne.s32.totalorder %s201, %s202
    %p214 = scmp.eq.s32.totalorder %s24, 1
    %p215 = por %p213, %p214
    %p217 = scmp.ne.s32.totalorder %s202, %s216
    %p218 = scmp.eq.s32.totalorder %s24, 0
    %p219 = por %p217, %p218
    %s221 = sadd.s32 %s220, 1
    %p224 = scmp.eq.s32.totalorder %s18, 1
    %p225 = scmp.ne.s32.totalorder %s220, %s222
    %p226 = scmp.eq.s32.totalorder %s18, 0
    %p227 = por %p225, %p226
    %p228 = scmp.ne.s32.totalorder %s220, %s222
    %p229 = scmp.eq.s32.totalorder %s23, 1
    %p230 = por %p228, %p229
    %p231 = scmp.ne.s32.totalorder %s222, %s223
    %p232 = scmp.eq.s32.totalorder %s23, 0
    %p233 = por %p231, %p232
    %p234 = scmp.ne.s32.totalorder %s222, %s223
    %p235 = scmp.eq.s32.totalorder %s24, 1
    %p236 = por %p234, %p235
    %p238 = scmp.ne.s32.totalorder %s223, %s237
    %p239 = scmp.eq.s32.totalorder %s24, 0
    %p240 = por %p238, %p239
    %s242 = sadd.s32 %s241, 1
    %p245 = scmp.eq.s32.totalorder %s18, 1
    %p246 = scmp.ne.s32.totalorder %s241, %s243
    %p247 = scmp.eq.s32.totalorder %s18, 0
    %p248 = por %p246, %p247
    %p249 = scmp.ne.s32.totalorder %s241, %s243
    %p250 = scmp.eq.s32.totalorder %s23, 1
    %p251 = por %p249, %p250
    %p252 = scmp.ne.s32.totalorder %s243, %s244
    %p253 = scmp.eq.s32.totalorder %s23, 0
    %p254 = por %p252, %p253
    %p255 = scmp.ne.s32.totalorder %s243, %s244
    %p256 = scmp.eq.s32.totalorder %s24, 1
    %p257 = por %p255, %p256
    %p259 = scmp.ne.s32.totalorder %s244, %s258
    %p260 = scmp.eq.s32.totalorder %s24, 0
    %p261 = por %p259, %p260
    %s262 = ssub.s32 %s18, %s25
    %p263 = scmp.eq.s32.totalorder %s262, 0
    %s265 = sadd.s32 %s264, 1
    %s266 = scalar_select %p263, %s264, %s265
    %p269 = pneg %p263
    %p270 = scmp.eq.s32.totalorder %s18, 1
    %p271 = por %p269, %p270
    %p272 = scmp.ne.s32.totalorder %s264, %s267
    %p273 = scmp.eq.s32.totalorder %s18, 0
    %p274 = por %p272, %p273
    %p275 = scmp.ne.s32.totalorder %s264, %s267
    %p276 = scmp.eq.s32.totalorder %s23, 1
    %p277 = por %p275, %p276
    %p278 = scmp.ne.s32.totalorder %s267, %s268
    %p279 = scmp.eq.s32.totalorder %s23, 0
    %p280 = por %p278, %p279
    %p281 = scmp.ne.s32.totalorder %s267, %s268
    %p282 = scmp.eq.s32.totalorder %s24, 1
    %p283 = por %p281, %p282
    %p285 = scmp.ne.s32.totalorder %s268, %s284
    %p286 = scmp.eq.s32.totalorder %s24, 0
    %p287 = por %p285, %p286
    %s288 = ssub.s32 %s18, %s25
    %p289 = scmp.eq.s32.totalorder %s288, 0
    %s291 = sadd.s32 %s290, 1
    %s292 = scalar_select %p289, %s290, %s291
    %p295 = pneg %p289
    %p296 = scmp.eq.s32.totalorder %s18, 1
    %p297 = por %p295, %p296
    %p298 = scmp.ne.s32.totalorder %s290, %s293
    %p299 = scmp.eq.s32.totalorder %s18, 0
    %p300 = por %p298, %p299
    %p301 = scmp.ne.s32.totalorder %s290, %s293
    %p302 = scmp.eq.s32.totalorder %s23, 1
    %p303 = por %p301, %p302
    %p304 = scmp.ne.s32.totalorder %s293, %s294
    %p305 = scmp.eq.s32.totalorder %s23, 0
    %p306 = por %p304, %p305
    %p307 = scmp.ne.s32.totalorder %s293, %s294
    %p308 = scmp.eq.s32.totalorder %s24, 1
    %p309 = por %p307, %p308
    %p311 = scmp.ne.s32.totalorder %s294, %s310
    %p312 = scmp.eq.s32.totalorder %s24, 0
    %p313 = por %p311, %p312
    %p314 = scmp.le.s32.totalorder 1, %s18
    %p315 = scmp.lt.s32.totalorder %s18, 3
    %p316 = pnand %p314, %p315
    %p317 = pneg %p316
    // Predicated region
    $region9: #{mbconv_forward.1} parent=5 // pred_check
      _
    $region10: #{mbconv_forward.1} parent=5 // pred_check_branch
      %319 = sbr.rel (%p316) target = $region12
    $region11: #{mbconv_forward.1} parent=5 // pred_region
      %s320 = ssub.s32 %s18, 1
      // Predicated region
      $region13: #{mbconv_forward.1} parent=11 // pred_check
        %p321 = pneg %p65
      $region14: #{mbconv_forward.1} parent=11 // pred_check_branch
        %323 = sbr.rel (%p321) target = $region16
      $region15: #{mbconv_forward.1} parent=11 // pred_region
        _
      $region16: #{mbconv_forward.1} parent=11 // pred_fallthru
        _
      // Predicated region
      $region17: #{mbconv_forward.1} parent=11 // pred_check
        %p324 = pneg %p86
      $region18: #{mbconv_forward.1} parent=11 // pred_check_branch
        %326 = sbr.rel (%p324) target = $region20
      $region19: #{mbconv_forward.1} parent=11 // pred_region
        _
      $region20: #{mbconv_forward.1} parent=11 // pred_fallthru
        _
      // Predicated region
      $region21: #{mbconv_forward.1} parent=11 // pred_check
        %p327 = pneg %p107
      $region22: #{mbconv_forward.1} parent=11 // pred_check_branch
        %329 = sbr.rel (%p327) target = $region24
      $region23: #{mbconv_forward.1} parent=11 // pred_region
        _
      $region24: #{mbconv_forward.1} parent=11 // pred_fallthru
        _
      // Predicated region
      $region25: #{mbconv_forward.1} parent=11 // pred_check
        %p330 = pneg %p128
      $region26: #{mbconv_forward.1} parent=11 // pred_check_branch
        %332 = sbr.rel (%p330) target = $region28
      $region27: #{mbconv_forward.1} parent=11 // pred_region
        _
      $region28: #{mbconv_forward.1} parent=11 // pred_fallthru
        _
      // Predicated region
      $region29: #{mbconv_forward.1} parent=11 // pred_check
        %p333 = pneg %p149
      $region30: #{mbconv_forward.1} parent=11 // pred_check_branch
        %335 = sbr.rel (%p333) target = $region32
      $region31: #{mbconv_forward.1} parent=11 // pred_region
        _
      $region32: #{mbconv_forward.1} parent=11 // pred_fallthru
        _
      // Predicated region
      $region33: #{mbconv_forward.1} parent=11 // pred_check
        %p336 = pneg %p170
      $region34: #{mbconv_forward.1} parent=11 // pred_check_branch
        %338 = sbr.rel (%p336) target = $region36
      $region35: #{mbconv_forward.1} parent=11 // pred_region
        _
      $region36: #{mbconv_forward.1} parent=11 // pred_fallthru
        _
      // Predicated region
      $region37: #{mbconv_forward.1} parent=11 // pred_check
        %p339 = pneg %p191
      $region38: #{mbconv_forward.1} parent=11 // pred_check_branch
        %341 = sbr.rel (%p339) target = $region40
      $region39: #{mbconv_forward.1} parent=11 // pred_region
        _
      $region40: #{mbconv_forward.1} parent=11 // pred_fallthru
        _
      // Predicated region
      $region41: #{mbconv_forward.1} parent=11 // pred_check
        %p342 = pneg %p212
      $region42: #{mbconv_forward.1} parent=11 // pred_check_branch
        %344 = sbr.rel (%p342) target = $region44
      $region43: #{mbconv_forward.1} parent=11 // pred_region
        _
      $region44: #{mbconv_forward.1} parent=11 // pred_fallthru
        _
      // Predicated region
      $region45: #{mbconv_forward.1} parent=11 // pred_check
        %p345 = pneg %p233
      $region46: #{mbconv_forward.1} parent=11 // pred_check_branch
        %347 = sbr.rel (%p345) target = $region48
      $region47: #{mbconv_forward.1} parent=11 // pred_region
        _
      $region48: #{mbconv_forward.1} parent=11 // pred_fallthru
        _
      // Predicated region
      $region49: #{mbconv_forward.1} parent=11 // pred_check
        %p348 = pneg %p254
      $region50: #{mbconv_forward.1} parent=11 // pred_check_branch
        %350 = sbr.rel (%p348) target = $region52
      $region51: #{mbconv_forward.1} parent=11 // pred_region
        _
      $region52: #{mbconv_forward.1} parent=11 // pred_fallthru
        _
    $region12: #{mbconv_forward.1} parent=5 // pred_fallthru
      _
    %p351 = scmp.lt.s32.totalorder %s18, 2
    // Predicated region
    $region53: #{mbconv_forward.1} parent=5 // pred_check
      %p352 = pneg %p351
    $region54: #{mbconv_forward.1} parent=5 // pred_check_branch
      %354 = sbr.rel (%p352) target = $region56
    $region55: #{mbconv_forward.1} parent=5 // pred_region
      // Predicated region
      $region57: #{mbconv_forward.1} parent=55 // pred_check
        %p355 = pneg %p38
      $region58: #{mbconv_forward.1} parent=55 // pred_check_branch
        %357 = sbr.rel (%p355) target = $region60
      $region59: #{mbconv_forward.1} parent=55 // pred_region
        %p358 = scmp.lt.s32.totalorder %s18, 1
        %s359 = scalar_select %p358, %s18, 1
        %s360 = smul.addr %s359, 54
        %s361 = smul.addr %s360, 8
        %s362 = scalar_lea.vmem %s0, %s361
      $region60: #{mbconv_forward.1} parent=55 // pred_fallthru
        _
      // Predicated region
      $region61: #{mbconv_forward.1} parent=55 // pred_check
        %p363 = pneg %p274
      $region62: #{mbconv_forward.1} parent=55 // pred_check_branch
        %365 = sbr.rel (%p363) target = $region64
      $region63: #{mbconv_forward.1} parent=55 // pred_region
        %p366 = scmp.lt.s32.totalorder %s18, 1
        %s367 = scalar_select %p366, %s18, 1
        %s368 = smul.addr %s367, 2
        %s369 = smul.addr %s368, 4
        %s370 = scalar_lea.vmem %s11, %s369
      $region64: #{mbconv_forward.1} parent=55 // pred_fallthru
        _
    $region56: #{mbconv_forward.1} parent=5 // pred_fallthru
      _
    %p371 = scmp.le.s32.totalorder 1, %s18
    %p372 = scmp.lt.s32.totalorder %s18, 3
    %p373 = pnand %p371, %p372
    %p374 = pneg %p373
    // Predicated region
    $region65: #{mbconv_forward.1} parent=5 // pred_check
      _
    $region66: #{mbconv_forward.1} parent=5 // pred_check_branch
      %376 = sbr.rel (%p373) target = $region68
    $region67: #{mbconv_forward.1} parent=5 // pred_region
      %s377 = ssub.s32 %s18, 1
      %p378 = scmp.lt.s32.totalorder %s23, 1
      %s379 = scalar_select %p378, %s23, 1
      %s380 = smul.addr %s379, 54
      %s381 = smul.addr %s380, 8
      %s382 = scalar_lea.vmem %s0, %s381
      %p383 = pneg %p44
      %p384 = pneg %p41
      %p385 = pneg %p65
      %p386 = pneg %p62
      %p387 = pneg %p86
      %p388 = pneg %p83
      %p389 = pneg %p107
      %p390 = pneg %p104
      %p391 = pneg %p128
      %p392 = pneg %p125
      %p393 = pneg %p149
      %p394 = pneg %p146
      %p395 = pneg %p170
      %p396 = pneg %p167
      %p397 = pneg %p191
      %p398 = pneg %p188
      %p399 = pneg %p212
      %p400 = pneg %p209
      %p401 = pneg %p233
      %p402 = pneg %p230
      %p403 = pneg %p254
      %p404 = pneg %p251
      %p405 = scmp.lt.s32.totalorder %s23, 1
      %s406 = scalar_select %p405, %s23, 1
      %s407 = smul.addr %s406, 2
      %s408 = smul.addr %s407, 4
      %s409 = scalar_lea.vmem %s11, %s408
      %p410 = pneg %p280
      %p411 = pneg %p277
      %p412 = pneg %p306
      %p413 = pneg %p303
      %p414 = scmp.lt.s32.totalorder %s23, 1
      %s415 = scalar_select %p414, %s23, 1
      %s416 = smul.addr %s415, 2
      %s417 = smul.addr %s416, 4
      %s418 = scalar_lea.vmem %s12, %s417
      %p419 = scmp.lt.s32.totalorder %s23, 1
      %s420 = scalar_select %p419, %s23, 1
      %s421 = smul.addr %s420, 54
      %s422 = smul.addr %s421, 8
      %s423 = scalar_lea.vmem %s0, %s422
      %p424 = scmp.lt.s32.totalorder %s23, 1
      %s425 = scalar_select %p424, %s23, 1
      %s426 = smul.addr %s425, 2
      %s427 = smul.addr %s426, 4
      %s428 = scalar_lea.vmem %s11, %s427
      %p429 = scmp.lt.s32.totalorder %s23, 1
      %s430 = scalar_select %p429, %s23, 1
      %s431 = smul.addr %s430, 2
      %s432 = smul.addr %s431, 4
      %s433 = scalar_lea.vmem %s12, %s432
      %v434 = vld [vmem:[%s423] sm:$0xff]
      %v435 = vld [vmem:[%s423 + $0x8] sm:$0xff]
      %v436 = vld [vmem:[%s423 + $0x10] sm:$0xff]
      %v437 = vld [vmem:[%s423 + $0x18] sm:$0xff]
      %v438 = vld [vmem:[%s423 + $0x20] sm:$0xff]
      %v439 = vld [vmem:[%s423 + $0x28] sm:$0xff]
      %v440 = vld [vmem:[%s423 + $0x30] sm:$0xff]
      %v441 = vld [vmem:[%s423 + $0x38] sm:$0xff]
      %v442 = vld [vmem:[%s423 + $0x40] sm:$0xff]
      %v443 = vld [vmem:[%s423 + $0x48] sm:$0xff]
      %v444 = vld [vmem:[%s423 + $0x50] sm:$0xff]
      %v445 = vld [vmem:[%s423 + $0x58] sm:$0xff]
      %v446 = vld [vmem:[%s423 + $0x60] sm:$0xff]
      %v447 = vld [vmem:[%s423 + $0x68] sm:$0xff]
      %v448 = vld [vmem:[%s423 + $0x70] sm:$0xff]
      %v449 = vld [vmem:[%s423 + $0x78] sm:$0xff]
      %v450 = vld [vmem:[%s423 + $0x80] sm:$0xff]
      %v451 = vld [vmem:[%s423 + $0x88] sm:$0xff]
      %v452 = vld [vmem:[%s423 + $0x90] sm:$0xff]
      %v453 = vld [vmem:[%s423 + $0x98] sm:$0xff]
      %v454 = vld [vmem:[%s423 + $0xa0] sm:$0xff]
      %v455 = vld [vmem:[%s423 + $0xa8] sm:$0xff]
      %v456 = vld [vmem:[%s423 + $0xb0] sm:$0xff]
      %v457 = vld [vmem:[%s423 + $0xb8] sm:$0xff]
      %v458 = vld [vmem:[%s423 + $0xc0] sm:$0xff]
      %v459 = vld [vmem:[%s423 + $0xc8] sm:$0xff]
      %v460 = vld [vmem:[%s423 + $0xd0] sm:$0xff]
      %v461 = vld [vmem:[%s423 + $0xd8] sm:$0xff]
      %v462 = vld [vmem:[%s423 + $0xe0] sm:$0xff]
      %v463 = vld [vmem:[%s423 + $0xe8] sm:$0xff]
      %v464 = vld [vmem:[%s423 + $0xf0] sm:$0xff]
      %v465 = vld [vmem:[%s423 + $0xf8] sm:$0xff]
      %v466 = vld [vmem:[%s423 + $0x100] sm:$0xff]
      %v467 = vld [vmem:[%s423 + $0x108] sm:$0xff]
      %v468 = vld [vmem:[%s423 + $0x110] sm:$0xff]
      %v469 = vld [vmem:[%s423 + $0x118] sm:$0xff]
      %v470 = vld [vmem:[%s423 + $0x120] sm:$0xff]
      %v471 = vld [vmem:[%s423 + $0x128] sm:$0xff]
      %v472 = vld [vmem:[%s423 + $0x130] sm:$0xff]
      %v473 = vld [vmem:[%s423 + $0x138] sm:$0xff]
      %v474 = vld [vmem:[%s423 + $0x140] sm:$0xff]
      %v475 = vld [vmem:[%s423 + $0x148] sm:$0xff]
      %v476 = vld [vmem:[%s423 + $0x150] sm:$0xff]
      %v477 = vld [vmem:[%s423 + $0x158] sm:$0xff]
      %v478 = vld [vmem:[%s423 + $0x160] sm:$0xff]
      %v479 = vld [vmem:[%s423 + $0x168] sm:$0xff]
      %v480 = vld [vmem:[%s423 + $0x170] sm:$0xff]
      %v481 = vld [vmem:[%s423 + $0x178] sm:$0xff]
      %v482 = vld [vmem:[%s423 + $0x180] sm:$0xff]
      %v483 = vld [vmem:[%s423 + $0x188] sm:$0xff]
      %v484 = vld [vmem:[%s423 + $0x190] sm:$0xff]
      %v485 = vld [vmem:[%s423 + $0x198] sm:$0xff]
      %v486 = vld [vmem:[%s423 + $0x1a0] sm:$0xff]
      %v487 = vld [vmem:[%s423 + $0x1a8] sm:$0xff]
      %v488 = vld [vmem:[%s1] sm:$0xf]
      %v489 = vld [vmem:[%s2] sm:$0x1]
      %v491 = vperm.slane %v489, 0
      %vm493 = vcmask 31744
      %v495 = vsel %vm493, %v434, 0
      %v498 = vsel %vm493, %v435, 0
      %v501 = vsel %vm493, %v436, 0
      %v504 = vsel %vm493, %v437, 0
      %v507 = vsel %vm493, %v438, 0
      %v510 = vsel %vm493, %v439, 0
      %v513 = vsel %vm493, %v440, 0
      %v516 = vsel %vm493, %v441, 0
      %v519 = vsel %vm493, %v442, 0
      %v522 = vsel %vm493, %v443, 0
      %v525 = vsel %vm493, %v444, 0
      %v528 = vsel %vm493, %v445, 0
      %v531 = vsel %vm493, %v446, 0
      %v534 = vsel %vm493, %v447, 0
      %v537 = vsel %vm493, %v448, 0
      %v540 = vsel %vm493, %v449, 0
      %v543 = vsel %vm493, %v450, 0
      %v546 = vsel %vm493, %v451, 0
      %v549 = vsel %vm493, %v452, 0
      %v552 = vsel %vm493, %v453, 0
      %v555 = vsel %vm493, %v454, 0
      %v558 = vsel %vm493, %v455, 0
      %v561 = vsel %vm493, %v456, 0
      %v564 = vsel %vm493, %v457, 0
      %v567 = vsel %vm493, %v458, 0
      %v570 = vsel %vm493, %v459, 0
      %v573 = vsel %vm493, %v460, 0
      %v576 = vsel %vm493, %v461, 0
      %v579 = vsel %vm493, %v462, 0
      %v582 = vsel %vm493, %v463, 0
      %v585 = vsel %vm493, %v464, 0
      %v588 = vsel %vm493, %v465, 0
      %v591 = vsel %vm493, %v466, 0
      %v594 = vsel %vm493, %v467, 0
      %v597 = vsel %vm493, %v468, 0
      %v600 = vsel %vm493, %v469, 0
      %v603 = vsel %vm493, %v470, 0
      %v606 = vsel %vm493, %v471, 0
      %v609 = vsel %vm493, %v472, 0
      %v612 = vsel %vm493, %v473, 0
      %v615 = vsel %vm493, %v474, 0
      %v618 = vsel %vm493, %v475, 0
      %v621 = vsel %vm493, %v476, 0
      %v624 = vsel %vm493, %v477, 0
      %v627 = vsel %vm493, %v478, 0
      %v630 = vsel %vm493, %v479, 0
      %v633 = vsel %vm493, %v480, 0
      %v636 = vsel %vm493, %v481, 0
      %v639 = vsel %vm493, %v482, 0
      %v642 = vsel %vm493, %v483, 0
      %v645 = vsel %vm493, %v484, 0
      %v648 = vsel %vm493, %v485, 0
      %v651 = vsel %vm493, %v486, 0
      %v654 = vsel %vm493, %v487, 0
      %vm656 = vcmask 1043456
      %v658 = vsel %vm656, %v488, 0
      %660 = vmatpush.msra.mxu0 0.0
      %661 = vmatpush.msra.mxu0 0.0
      %662 = vmatpush.msra.mxu0 0.0
      %663 = vmatpush.msra.mxu0 0.0
      %664 = vmatpush.msra.mxu0 0.0
      %665 = vmatpush.msra.mxu0 0.0
      %666 = vmatpush.msra.mxu0 0.0
      %667 = vmatpush.msra.mxu0 0.0
      %668 = vmatpush.msra.mxu0 0.0
      %669 = vmatpush.msra.mxu0 0.0
      %670 = vmatpush.msra.mxu0 0.0
      %671 = vmatpush.msra.mxu0 0.0
      %672 = vmatpush.msra.mxu0 0.0
      %673 = vmatpush.msra.mxu0 0.0
      %674 = vmatpush.msra.mxu0 0.0
      %675 = vmatpush.msra.mxu0 %v658
      %676 = vmatmul.f32.gmra.mxu0 %v495
      %v677 = vpop.f32.mrf.mxu0
      %v678 = vadd.f32 %v491, %v677
      %679 = vmatmul.f32.gmra.mxu0 %v498
      %v680 = vpop.f32.mrf.mxu0
      %v681 = vadd.f32 %v491, %v680
      %682 = vmatmul.f32.gmra.mxu0 %v501
      %v683 = vpop.f32.mrf.mxu0
      %v684 = vadd.f32 %v491, %v683
      %685 = vmatmul.f32.gmra.mxu0 %v504
      %v686 = vpop.f32.mrf.mxu0
      %v687 = vadd.f32 %v491, %v686
      %688 = vmatmul.f32.gmra.mxu0 %v507
      %v689 = vpop.f32.mrf.mxu0
      %v690 = vadd.f32 %v491, %v689
      %691 = vmatmul.f32.gmra.mxu0 %v510
      %v692 = vpop.f32.mrf.mxu0
      %v693 = vadd.f32 %v491, %v692
      %694 = vmatmul.f32.gmra.mxu0 %v513
      %v695 = vpop.f32.mrf.mxu0
      %v696 = vadd.f32 %v491, %v695
      %697 = vmatmul.f32.gmra.mxu0 %v516
      %v698 = vpop.f32.mrf.mxu0
      %v699 = vadd.f32 %v491, %v698
      %700 = vmatmul.f32.gmra.mxu0 %v519
      %v701 = vpop.f32.mrf.mxu0
      %v702 = vadd.f32 %v491, %v701
      %703 = vmatmul.f32.gmra.mxu0 %v522
      %v704 = vpop.f32.mrf.mxu0
      %v705 = vadd.f32 %v491, %v704
      %706 = vmatmul.f32.gmra.mxu0 %v525
      %v707 = vpop.f32.mrf.mxu0
      %v708 = vadd.f32 %v491, %v707
      %709 = vmatmul.f32.gmra.mxu0 %v528
      %v710 = vpop.f32.mrf.mxu0
      %v711 = vadd.f32 %v491, %v710
      %712 = vmatmul.f32.gmra.mxu0 %v531
      %v713 = vpop.f32.mrf.mxu0
      %v714 = vadd.f32 %v491, %v713
      %715 = vmatmul.f32.gmra.mxu0 %v534
      %v716 = vpop.f32.mrf.mxu0
      %v717 = vadd.f32 %v491, %v716
      %718 = vmatmul.f32.gmra.mxu0 %v537
      %v719 = vpop.f32.mrf.mxu0
      %v720 = vadd.f32 %v491, %v719
      %721 = vmatmul.f32.gmra.mxu0 %v540
      %v722 = vpop.f32.mrf.mxu0
      %v723 = vadd.f32 %v491, %v722
      %724 = vmatmul.f32.gmra.mxu0 %v543
      %v725 = vpop.f32.mrf.mxu0
      %v726 = vadd.f32 %v491, %v725
      %727 = vmatmul.f32.gmra.mxu0 %v546
      %v728 = vpop.f32.mrf.mxu0
      %v729 = vadd.f32 %v491, %v728
      %730 = vmatmul.f32.gmra.mxu0 %v549
      %v731 = vpop.f32.mrf.mxu0
      %v732 = vadd.f32 %v491, %v731
      %733 = vmatmul.f32.gmra.mxu0 %v552
      %v734 = vpop.f32.mrf.mxu0
      %v735 = vadd.f32 %v491, %v734
      %736 = vmatmul.f32.gmra.mxu0 %v555
      %v737 = vpop.f32.mrf.mxu0
      %v738 = vadd.f32 %v491, %v737
      %739 = vmatmul.f32.gmra.mxu0 %v558
      %v740 = vpop.f32.mrf.mxu0
      %v741 = vadd.f32 %v491, %v740
      %742 = vmatmul.f32.gmra.mxu0 %v561
      %v743 = vpop.f32.mrf.mxu0
      %v744 = vadd.f32 %v491, %v743
      %745 = vmatmul.f32.gmra.mxu0 %v564
      %v746 = vpop.f32.mrf.mxu0
      %v747 = vadd.f32 %v491, %v746
      %748 = vmatmul.f32.gmra.mxu0 %v567
      %v749 = vpop.f32.mrf.mxu0
      %v750 = vadd.f32 %v491, %v749
      %751 = vmatmul.f32.gmra.mxu0 %v570
      %v752 = vpop.f32.mrf.mxu0
      %v753 = vadd.f32 %v491, %v752
      %754 = vmatmul.f32.gmra.mxu0 %v573
      %v755 = vpop.f32.mrf.mxu0
      %v756 = vadd.f32 %v491, %v755
      %757 = vmatmul.f32.gmra.mxu0 %v576
      %v758 = vpop.f32.mrf.mxu0
      %v759 = vadd.f32 %v491, %v758
      %760 = vmatmul.f32.gmra.mxu0 %v579
      %v761 = vpop.f32.mrf.mxu0
      %v762 = vadd.f32 %v491, %v761
      %763 = vmatmul.f32.gmra.mxu0 %v582
      %v764 = vpop.f32.mrf.mxu0
      %v765 = vadd.f32 %v491, %v764
      %766 = vmatmul.f32.gmra.mxu0 %v585
      %v767 = vpop.f32.mrf.mxu0
      %v768 = vadd.f32 %v491, %v767
      %769 = vmatmul.f32.gmra.mxu0 %v588
      %v770 = vpop.f32.mrf.mxu0
      %v771 = vadd.f32 %v491, %v770
      %772 = vmatmul.f32.gmra.mxu0 %v591
      %v773 = vpop.f32.mrf.mxu0
      %v774 = vadd.f32 %v491, %v773
      %775 = vmatmul.f32.gmra.mxu0 %v594
      %v776 = vpop.f32.mrf.mxu0
      %v777 = vadd.f32 %v491, %v776
      %778 = vmatmul.f32.gmra.mxu0 %v597
      %v779 = vpop.f32.mrf.mxu0
      %v780 = vadd.f32 %v491, %v779
      %781 = vmatmul.f32.gmra.mxu0 %v600
      %v782 = vpop.f32.mrf.mxu0
      %v783 = vadd.f32 %v491, %v782
      %784 = vmatmul.f32.gmra.mxu0 %v603
      %v785 = vpop.f32.mrf.mxu0
      %v786 = vadd.f32 %v491, %v785
      %787 = vmatmul.f32.gmra.mxu0 %v606
      %v788 = vpop.f32.mrf.mxu0
      %v789 = vadd.f32 %v491, %v788
      %790 = vmatmul.f32.gmra.mxu0 %v609
      %v791 = vpop.f32.mrf.mxu0
      %v792 = vadd.f32 %v491, %v791
      %793 = vmatmul.f32.gmra.mxu0 %v612
      %v794 = vpop.f32.mrf.mxu0
      %v795 = vadd.f32 %v491, %v794
      %796 = vmatmul.f32.gmra.mxu0 %v615
      %v797 = vpop.f32.mrf.mxu0
      %v798 = vadd.f32 %v491, %v797
      %799 = vmatmul.f32.gmra.mxu0 %v618
      %v800 = vpop.f32.mrf.mxu0
      %v801 = vadd.f32 %v491, %v800
      %802 = vmatmul.f32.gmra.mxu0 %v621
      %v803 = vpop.f32.mrf.mxu0
      %v804 = vadd.f32 %v491, %v803
      %805 = vmatmul.f32.gmra.mxu0 %v624
      %v806 = vpop.f32.mrf.mxu0
      %v807 = vadd.f32 %v491, %v806
      %808 = vmatmul.f32.gmra.mxu0 %v627
      %v809 = vpop.f32.mrf.mxu0
      %v810 = vadd.f32 %v491, %v809
      %811 = vmatmul.f32.gmra.mxu0 %v630
      %v812 = vpop.f32.mrf.mxu0
      %v813 = vadd.f32 %v491, %v812
      %814 = vmatmul.f32.gmra.mxu0 %v633
      %v815 = vpop.f32.mrf.mxu0
      %v816 = vadd.f32 %v491, %v815
      %817 = vmatmul.f32.gmra.mxu0 %v636
      %v818 = vpop.f32.mrf.mxu0
      %v819 = vadd.f32 %v491, %v818
      %820 = vmatmul.f32.gmra.mxu0 %v639
      %v821 = vpop.f32.mrf.mxu0
      %v822 = vadd.f32 %v491, %v821
      %823 = vmatmul.f32.gmra.mxu0 %v642
      %v824 = vpop.f32.mrf.mxu0
      %v825 = vadd.f32 %v491, %v824
      %826 = vmatmul.f32.gmra.mxu0 %v645
      %v827 = vpop.f32.mrf.mxu0
      %v828 = vadd.f32 %v491, %v827
      %829 = vmatmul.f32.gmra.mxu0 %v648
      %v830 = vpop.f32.mrf.mxu0
      %v831 = vadd.f32 %v491, %v830
      %832 = vmatmul.f32.gmra.mxu0 %v651
      %v833 = vpop.f32.mrf.mxu0
      %v834 = vadd.f32 %v491, %v833
      %835 = vmatmul.f32.gmra.mxu0 %v654
      %v836 = vpop.f32.mrf.mxu0
      %v837 = vadd.f32 %v491, %v836
      %838 = vdwg.mxu0
      %v839 = vxor.u32 %v678, 2147483648
      %v840 = vxor.u32 %v681, 2147483648
      %v841 = vxor.u32 %v684, 2147483648
      %v842 = vxor.u32 %v687, 2147483648
      %v843 = vxor.u32 %v690, 2147483648
      %v844 = vxor.u32 %v693, 2147483648
      %v845 = vxor.u32 %v696, 2147483648
      %v846 = vxor.u32 %v699, 2147483648
      %v847 = vxor.u32 %v702, 2147483648
      %v848 = vxor.u32 %v705, 2147483648
      %v849 = vxor.u32 %v708, 2147483648
      %v850 = vxor.u32 %v711, 2147483648
      %v851 = vxor.u32 %v714, 2147483648
      %v852 = vxor.u32 %v717, 2147483648
      %v853 = vxor.u32 %v720, 2147483648
      %v854 = vxor.u32 %v723, 2147483648
      %v855 = vxor.u32 %v726, 2147483648
      %v856 = vxor.u32 %v729, 2147483648
      %v857 = vxor.u32 %v732, 2147483648
      %v858 = vxor.u32 %v735, 2147483648
      %v859 = vxor.u32 %v738, 2147483648
      %v860 = vxor.u32 %v741, 2147483648
      %v861 = vxor.u32 %v744, 2147483648
      %v862 = vxor.u32 %v747, 2147483648
      %v863 = vxor.u32 %v750, 2147483648
      %v864 = vxor.u32 %v753, 2147483648
      %v865 = vxor.u32 %v756, 2147483648
      %v866 = vxor.u32 %v759, 2147483648
      %v867 = vxor.u32 %v762, 2147483648
      %v868 = vxor.u32 %v765, 2147483648
      %v869 = vxor.u32 %v768, 2147483648
      %v870 = vxor.u32 %v771, 2147483648
      %v871 = vxor.u32 %v774, 2147483648
      %v872 = vxor.u32 %v777, 2147483648
      %v873 = vxor.u32 %v780, 2147483648
      %v874 = vxor.u32 %v783, 2147483648
      %v875 = vxor.u32 %v786, 2147483648
      %v876 = vxor.u32 %v789, 2147483648
      %v877 = vxor.u32 %v792, 2147483648
      %v878 = vxor.u32 %v795, 2147483648
      %v879 = vxor.u32 %v798, 2147483648
      %v880 = vxor.u32 %v801, 2147483648
      %v881 = vxor.u32 %v804, 2147483648
      %v882 = vxor.u32 %v807, 2147483648
      %v883 = vxor.u32 %v810, 2147483648
      %v884 = vxor.u32 %v813, 2147483648
      %v885 = vxor.u32 %v816, 2147483648
      %v886 = vxor.u32 %v819, 2147483648
      %v887 = vxor.u32 %v822, 2147483648
      %v888 = vxor.u32 %v825, 2147483648
      %v889 = vxor.u32 %v828, 2147483648
      %v890 = vxor.u32 %v831, 2147483648
      %v891 = vxor.u32 %v834, 2147483648
      %v892 = vxor.u32 %v837, 2147483648
      %v893 = vmul.f32 %v839, 1.442695
      %v894 = vpow.pop %v893
      %v895 = vmul.f32 %v840, 1.442695
      %v896 = vpow.pop %v895
      %v897 = vmul.f32 %v841, 1.442695
      %v898 = vpow.pop %v897
      %v899 = vmul.f32 %v842, 1.442695
      %v900 = vpow.pop %v899
      %v901 = vmul.f32 %v843, 1.442695
      %v902 = vpow.pop %v901
      %v903 = vmul.f32 %v844, 1.442695
      %v904 = vpow.pop %v903
      %v905 = vmul.f32 %v845, 1.442695
      %v906 = vpow.pop %v905
      %v907 = vmul.f32 %v846, 1.442695
      %v908 = vpow.pop %v907
      %v909 = vmul.f32 %v847, 1.442695
      %v910 = vpow.pop %v909
      %v911 = vmul.f32 %v848, 1.442695
      %v912 = vpow.pop %v911
      %v913 = vmul.f32 %v849, 1.442695
      %v914 = vpow.pop %v913
      %v915 = vmul.f32 %v850, 1.442695
      %v916 = vpow.pop %v915
      %v917 = vmul.f32 %v851, 1.442695
      %v918 = vpow.pop %v917
      %v919 = vmul.f32 %v852, 1.442695
      %v920 = vpow.pop %v919
      %v921 = vmul.f32 %v853, 1.442695
      %v922 = vpow.pop %v921
      %v923 = vmul.f32 %v854, 1.442695
      %v924 = vpow.pop %v923
      %v925 = vmul.f32 %v855, 1.442695
      %v926 = vpow.pop %v925
      %v927 = vmul.f32 %v856, 1.442695
      %v928 = vpow.pop %v927
      %v929 = vmul.f32 %v857, 1.442695
      %v930 = vpow.pop %v929
      %v931 = vmul.f32 %v858, 1.442695
      %v932 = vpow.pop %v931
      %v933 = vmul.f32 %v859, 1.442695
      %v934 = vpow.pop %v933
      %v935 = vmul.f32 %v860, 1.442695
      %v936 = vpow.pop %v935
      %v937 = vmul.f32 %v861, 1.442695
      %v938 = vpow.pop %v937
      %v939 = vmul.f32 %v862, 1.442695
      %v940 = vpow.pop %v939
      %v941 = vmul.f32 %v863, 1.442695
      %v942 = vpow.pop %v941
      %v943 = vmul.f32 %v864, 1.442695
      %v944 = vpow.pop %v943
      %v945 = vmul.f32 %v865, 1.442695
      %v946 = vpow.pop %v945
      %v947 = vmul.f32 %v866, 1.442695
      %v948 = vpow.pop %v947
      %v949 = vmul.f32 %v867, 1.442695
      %v950 = vpow.pop %v949
      %v951 = vmul.f32 %v868, 1.442695
      %v952 = vpow.pop %v951
      %v953 = vmul.f32 %v869, 1.442695
      %v954 = vpow.pop %v953
      %v955 = vmul.f32 %v870, 1.442695
      %v956 = vpow.pop %v955
      %v957 = vmul.f32 %v871, 1.442695
      %v958 = vpow.pop %v957
      %v959 = vmul.f32 %v872, 1.442695
      %v960 = vpow.pop %v959
      %v961 = vmul.f32 %v873, 1.442695
      %v962 = vpow.pop %v961
      %v963 = vmul.f32 %v874, 1.442695
      %v964 = vpow.pop %v963
      %v965 = vmul.f32 %v875, 1.442695
      %v966 = vpow.pop %v965
      %v967 = vmul.f32 %v876, 1.442695
      %v968 = vpow.pop %v967
      %v969 = vmul.f32 %v877, 1.442695
      %v970 = vpow.pop %v969
      %v971 = vmul.f32 %v878, 1.442695
      %v972 = vpow.pop %v971
      %v973 = vmul.f32 %v879, 1.442695
      %v974 = vpow.pop %v973
      %v975 = vmul.f32 %v880, 1.442695
      %v976 = vpow.pop %v975
      %v977 = vmul.f32 %v881, 1.442695
      %v978 = vpow.pop %v977
      %v979 = vmul.f32 %v882, 1.442695
      %v980 = vpow.pop %v979
      %v981 = vmul.f32 %v883, 1.442695
      %v982 = vpow.pop %v981
      %v983 = vmul.f32 %v884, 1.442695
      %v984 = vpow.pop %v983
      %v985 = vmul.f32 %v885, 1.442695
      %v986 = vpow.pop %v985
      %v987 = vmul.f32 %v886, 1.442695
      %v988 = vpow.pop %v987
      %v989 = vmul.f32 %v887, 1.442695
      %v990 = vpow.pop %v989
      %v991 = vmul.f32 %v888, 1.442695
      %v992 = vpow.pop %v991
      %v993 = vmul.f32 %v889, 1.442695
      %v994 = vpow.pop %v993
      %v995 = vmul.f32 %v890, 1.442695
      %v996 = vpow.pop %v995
      %v997 = vmul.f32 %v891, 1.442695
      %v998 = vpow.pop %v997
      %v999 = vmul.f32 %v892, 1.442695
      %v1000 = vpow.pop %v999
      %v1001 = vadd.f32 %v894, 1.0
      %v1002 = vadd.f32 %v896, 1.0
      %v1003 = vadd.f32 %v898, 1.0
      %v1004 = vadd.f32 %v900, 1.0
      %v1005 = vadd.f32 %v902, 1.0
      %v1006 = vadd.f32 %v904, 1.0
      %v1007 = vadd.f32 %v906, 1.0
      %v1008 = vadd.f32 %v908, 1.0
      %v1009 = vadd.f32 %v910, 1.0
      %v1010 = vadd.f32 %v912, 1.0
      %v1011 = vadd.f32 %v914, 1.0
      %v1012 = vadd.f32 %v916, 1.0
      %v1013 = vadd.f32 %v918, 1.0
      %v1014 = vadd.f32 %v920, 1.0
      %v1015 = vadd.f32 %v922, 1.0
      %v1016 = vadd.f32 %v924, 1.0
      %v1017 = vadd.f32 %v926, 1.0
      %v1018 = vadd.f32 %v928, 1.0
      %v1019 = vadd.f32 %v930, 1.0
      %v1020 = vadd.f32 %v932, 1.0
      %v1021 = vadd.f32 %v934, 1.0
      %v1022 = vadd.f32 %v936, 1.0
      %v1023 = vadd.f32 %v938, 1.0
      %v1024 = vadd.f32 %v940, 1.0
      %v1025 = vadd.f32 %v942, 1.0
      %v1026 = vadd.f32 %v944, 1.0
      %v1027 = vadd.f32 %v946, 1.0
      %v1028 = vadd.f32 %v948, 1.0
      %v1029 = vadd.f32 %v950, 1.0
      %v1030 = vadd.f32 %v952, 1.0
      %v1031 = vadd.f32 %v954, 1.0
      %v1032 = vadd.f32 %v956, 1.0
      %v1033 = vadd.f32 %v958, 1.0
      %v1034 = vadd.f32 %v960, 1.0
      %v1035 = vadd.f32 %v962, 1.0
      %v1036 = vadd.f32 %v964, 1.0
      %v1037 = vadd.f32 %v966, 1.0
      %v1038 = vadd.f32 %v968, 1.0
      %v1039 = vadd.f32 %v970, 1.0
      %v1040 = vadd.f32 %v972, 1.0
      %v1041 = vadd.f32 %v974, 1.0
      %v1042 = vadd.f32 %v976, 1.0
      %v1043 = vadd.f32 %v978, 1.0
      %v1044 = vadd.f32 %v980, 1.0
      %v1045 = vadd.f32 %v982, 1.0
      %v1046 = vadd.f32 %v984, 1.0
      %v1047 = vadd.f32 %v986, 1.0
      %v1048 = vadd.f32 %v988, 1.0
      %v1049 = vadd.f32 %v990, 1.0
      %v1050 = vadd.f32 %v992, 1.0
      %v1051 = vadd.f32 %v994, 1.0
      %v1052 = vadd.f32 %v996, 1.0
      %v1053 = vadd.f32 %v998, 1.0
      %v1054 = vadd.f32 %v1000, 1.0
      %v1055 = vrcp.pop %v1001
      %v1056 = vmul.f32 %v1001, %v1055
      %v1057 = vsub.f32 1.0, %v1056
      %v1058 = vmul.f32 %v1055, %v1057
      %v1059 = vadd.f32 %v1055, %v1058
      %vm1060 = vweird.f32 %v1001
      %vm1061 = vweird.f32 %v1055
      %vm1062 = vmor %vm1060, %vm1061
      %v1063 = vsel %vm1062, %v1055, %v1059
      %v1064 = vand.u32 2147483647, %v1001
      %vm1065 = vcmp.eq.f32.partialorder %v1064, 8.507059e+37
      %v1066 = vand.u32 %v1001, 2147483648
      %v1067 = vor.u32 1.1754944e-38, %v1066
      %v1068 = vsel %vm1065, %v1067, %v1063
      %v1069 = vmul.f32 1.0, %v1068
      %v1070 = vrcp.pop %v1002
      %v1071 = vmul.f32 %v1002, %v1070
      %v1072 = vsub.f32 1.0, %v1071
      %v1073 = vmul.f32 %v1070, %v1072
      %v1074 = vadd.f32 %v1070, %v1073
      %vm1075 = vweird.f32 %v1002
      %vm1076 = vweird.f32 %v1070
      %vm1077 = vmor %vm1075, %vm1076
      %v1078 = vsel %vm1077, %v1070, %v1074
      %v1079 = vand.u32 2147483647, %v1002
      %vm1080 = vcmp.eq.f32.partialorder %v1079, 8.507059e+37
      %v1081 = vand.u32 %v1002, 2147483648
      %v1082 = vor.u32 1.1754944e-38, %v1081
      %v1083 = vsel %vm1080, %v1082, %v1078
      %v1084 = vmul.f32 1.0, %v1083
      %v1085 = vrcp.pop %v1003
      %v1086 = vmul.f32 %v1003, %v1085
      %v1087 = vsub.f32 1.0, %v1086
      %v1088 = vmul.f32 %v1085, %v1087
      %v1089 = vadd.f32 %v1085, %v1088
      %vm1090 = vweird.f32 %v1003
      %vm1091 = vweird.f32 %v1085
      %vm1092 = vmor %vm1090, %vm1091
      %v1093 = vsel %vm1092, %v1085, %v1089
      %v1094 = vand.u32 2147483647, %v1003
      %vm1095 = vcmp.eq.f32.partialorder %v1094, 8.507059e+37
      %v1096 = vand.u32 %v1003, 2147483648
      %v1097 = vor.u32 1.1754944e-38, %v1096
      %v1098 = vsel %vm1095, %v1097, %v1093
      %v1099 = vmul.f32 1.0, %v1098
      %v1100 = vrcp.pop %v1004
      %v1101 = vmul.f32 %v1004, %v1100
      %v1102 = vsub.f32 1.0, %v1101
      %v1103 = vmul.f32 %v1100, %v1102
      %v1104 = vadd.f32 %v1100, %v1103
      %vm1105 = vweird.f32 %v1004
      %vm1106 = vweird.f32 %v1100
      %vm1107 = vmor %vm1105, %vm1106
      %v1108 = vsel %vm1107, %v1100, %v1104
      %v1109 = vand.u32 2147483647, %v1004
      %vm1110 = vcmp.eq.f32.partialorder %v1109, 8.507059e+37
      %v1111 = vand.u32 %v1004, 2147483648
      %v1112 = vor.u32 1.1754944e-38, %v1111
      %v1113 = vsel %vm1110, %v1112, %v1108
      %v1114 = vmul.f32 1.0, %v1113
      %v1115 = vrcp.pop %v1005
      %v1116 = vmul.f32 %v1005, %v1115
      %v1117 = vsub.f32 1.0, %v1116
      %v1118 = vmul.f32 %v1115, %v1117
      %v1119 = vadd.f32 %v1115, %v1118
      %vm1120 = vweird.f32 %v1005
      %vm1121 = vweird.f32 %v1115
      %vm1122 = vmor %vm1120, %vm1121
      %v1123 = vsel %vm1122, %v1115, %v1119
      %v1124 = vand.u32 2147483647, %v1005
      %vm1125 = vcmp.eq.f32.partialorder %v1124, 8.507059e+37
      %v1126 = vand.u32 %v1005, 2147483648
      %v1127 = vor.u32 1.1754944e-38, %v1126
      %v1128 = vsel %vm1125, %v1127, %v1123
      %v1129 = vmul.f32 1.0, %v1128
      %v1130 = vrcp.pop %v1006
      %v1131 = vmul.f32 %v1006, %v1130
      %v1132 = vsub.f32 1.0, %v1131
      %v1133 = vmul.f32 %v1130, %v1132
      %v1134 = vadd.f32 %v1130, %v1133
      %vm1135 = vweird.f32 %v1006
      %vm1136 = vweird.f32 %v1130
      %vm1137 = vmor %vm1135, %vm1136
      %v1138 = vsel %vm1137, %v1130, %v1134
      %v1139 = vand.u32 2147483647, %v1006
      %vm1140 = vcmp.eq.f32.partialorder %v1139, 8.507059e+37
      %v1141 = vand.u32 %v1006, 2147483648
      %v1142 = vor.u32 1.1754944e-38, %v1141
      %v1143 = vsel %vm1140, %v1142, %v1138
      %v1144 = vmul.f32 1.0, %v1143
      %v1145 = vrcp.pop %v1007
      %v1146 = vmul.f32 %v1007, %v1145
      %v1147 = vsub.f32 1.0, %v1146
      %v1148 = vmul.f32 %v1145, %v1147
      %v1149 = vadd.f32 %v1145, %v1148
      %vm1150 = vweird.f32 %v1007
      %vm1151 = vweird.f32 %v1145
      %vm1152 = vmor %vm1150, %vm1151
      %v1153 = vsel %vm1152, %v1145, %v1149
      %v1154 = vand.u32 2147483647, %v1007
      %vm1155 = vcmp.eq.f32.partialorder %v1154, 8.507059e+37
      %v1156 = vand.u32 %v1007, 2147483648
      %v1157 = vor.u32 1.1754944e-38, %v1156
      %v1158 = vsel %vm1155, %v1157, %v1153
      %v1159 = vmul.f32 1.0, %v1158
      %v1160 = vrcp.pop %v1008
      %v1161 = vmul.f32 %v1008, %v1160
      %v1162 = vsub.f32 1.0, %v1161
      %v1163 = vmul.f32 %v1160, %v1162
      %v1164 = vadd.f32 %v1160, %v1163
      %vm1165 = vweird.f32 %v1008
      %vm1166 = vweird.f32 %v1160
      %vm1167 = vmor %vm1165, %vm1166
      %v1168 = vsel %vm1167, %v1160, %v1164
      %v1169 = vand.u32 2147483647, %v1008
      %vm1170 = vcmp.eq.f32.partialorder %v1169, 8.507059e+37
      %v1171 = vand.u32 %v1008, 2147483648
      %v1172 = vor.u32 1.1754944e-38, %v1171
      %v1173 = vsel %vm1170, %v1172, %v1168
      %v1174 = vmul.f32 1.0, %v1173
      %v1175 = vrcp.pop %v1009
      %v1176 = vmul.f32 %v1009, %v1175
      %v1177 = vsub.f32 1.0, %v1176
      %v1178 = vmul.f32 %v1175, %v1177
      %v1179 = vadd.f32 %v1175, %v1178
      %vm1180 = vweird.f32 %v1009
      %vm1181 = vweird.f32 %v1175
      %vm1182 = vmor %vm1180, %vm1181
      %v1183 = vsel %vm1182, %v1175, %v1179
      %v1184 = vand.u32 2147483647, %v1009
      %vm1185 = vcmp.eq.f32.partialorder %v1184, 8.507059e+37
      %v1186 = vand.u32 %v1009, 2147483648
      %v1187 = vor.u32 1.1754944e-38, %v1186
      %v1188 = vsel %vm1185, %v1187, %v1183
      %v1189 = vmul.f32 1.0, %v1188
      %v1190 = vrcp.pop %v1010
      %v1191 = vmul.f32 %v1010, %v1190
      %v1192 = vsub.f32 1.0, %v1191
      %v1193 = vmul.f32 %v1190, %v1192
      %v1194 = vadd.f32 %v1190, %v1193
      %vm1195 = vweird.f32 %v1010
      %vm1196 = vweird.f32 %v1190
      %vm1197 = vmor %vm1195, %vm1196
      %v1198 = vsel %vm1197, %v1190, %v1194
      %v1199 = vand.u32 2147483647, %v1010
      %vm1200 = vcmp.eq.f32.partialorder %v1199, 8.507059e+37
      %v1201 = vand.u32 %v1010, 2147483648
      %v1202 = vor.u32 1.1754944e-38, %v1201
      %v1203 = vsel %vm1200, %v1202, %v1198
      %v1204 = vmul.f32 1.0, %v1203
      %v1205 = vrcp.pop %v1011
      %v1206 = vmul.f32 %v1011, %v1205
      %v1207 = vsub.f32 1.0, %v1206
      %v1208 = vmul.f32 %v1205, %v1207
      %v1209 = vadd.f32 %v1205, %v1208
      %vm1210 = vweird.f32 %v1011
      %vm1211 = vweird.f32 %v1205
      %vm1212 = vmor %vm1210, %vm1211
      %v1213 = vsel %vm1212, %v1205, %v1209
      %v1214 = vand.u32 2147483647, %v1011
      %vm1215 = vcmp.eq.f32.partialorder %v1214, 8.507059e+37
      %v1216 = vand.u32 %v1011, 2147483648
      %v1217 = vor.u32 1.1754944e-38, %v1216
      %v1218 = vsel %vm1215, %v1217, %v1213
      %v1219 = vmul.f32 1.0, %v1218
      %v1220 = vrcp.pop %v1012
      %v1221 = vmul.f32 %v1012, %v1220
      %v1222 = vsub.f32 1.0, %v1221
      %v1223 = vmul.f32 %v1220, %v1222
      %v1224 = vadd.f32 %v1220, %v1223
      %vm1225 = vweird.f32 %v1012
      %vm1226 = vweird.f32 %v1220
      %vm1227 = vmor %vm1225, %vm1226
      %v1228 = vsel %vm1227, %v1220, %v1224
      %v1229 = vand.u32 2147483647, %v1012
      %vm1230 = vcmp.eq.f32.partialorder %v1229, 8.507059e+37
      %v1231 = vand.u32 %v1012, 2147483648
      %v1232 = vor.u32 1.1754944e-38, %v1231
      %v1233 = vsel %vm1230, %v1232, %v1228
      %v1234 = vmul.f32 1.0, %v1233
      %v1235 = vrcp.pop %v1013
      %v1236 = vmul.f32 %v1013, %v1235
      %v1237 = vsub.f32 1.0, %v1236
      %v1238 = vmul.f32 %v1235, %v1237
      %v1239 = vadd.f32 %v1235, %v1238
      %vm1240 = vweird.f32 %v1013
      %vm1241 = vweird.f32 %v1235
      %vm1242 = vmor %vm1240, %vm1241
      %v1243 = vsel %vm1242, %v1235, %v1239
      %v1244 = vand.u32 2147483647, %v1013
      %vm1245 = vcmp.eq.f32.partialorder %v1244, 8.507059e+37
      %v1246 = vand.u32 %v1013, 2147483648
      %v1247 = vor.u32 1.1754944e-38, %v1246
      %v1248 = vsel %vm1245, %v1247, %v1243
      %v1249 = vmul.f32 1.0, %v1248
      %v1250 = vrcp.pop %v1014
      %v1251 = vmul.f32 %v1014, %v1250
      %v1252 = vsub.f32 1.0, %v1251
      %v1253 = vmul.f32 %v1250, %v1252
      %v1254 = vadd.f32 %v1250, %v1253
      %vm1255 = vweird.f32 %v1014
      %vm1256 = vweird.f32 %v1250
      %vm1257 = vmor %vm1255, %vm1256
      %v1258 = vsel %vm1257, %v1250, %v1254
      %v1259 = vand.u32 2147483647, %v1014
      %vm1260 = vcmp.eq.f32.partialorder %v1259, 8.507059e+37
      %v1261 = vand.u32 %v1014, 2147483648
      %v1262 = vor.u32 1.1754944e-38, %v1261
      %v1263 = vsel %vm1260, %v1262, %v1258
      %v1264 = vmul.f32 1.0, %v1263
      %v1265 = vrcp.pop %v1015
      %v1266 = vmul.f32 %v1015, %v1265
      %v1267 = vsub.f32 1.0, %v1266
      %v1268 = vmul.f32 %v1265, %v1267
      %v1269 = vadd.f32 %v1265, %v1268
      %vm1270 = vweird.f32 %v1015
      %vm1271 = vweird.f32 %v1265
      %vm1272 = vmor %vm1270, %vm1271
      %v1273 = vsel %vm1272, %v1265, %v1269
      %v1274 = vand.u32 2147483647, %v1015
      %vm1275 = vcmp.eq.f32.partialorder %v1274, 8.507059e+37
      %v1276 = vand.u32 %v1015, 2147483648
      %v1277 = vor.u32 1.1754944e-38, %v1276
      %v1278 = vsel %vm1275, %v1277, %v1273
      %v1279 = vmul.f32 1.0, %v1278
      %v1280 = vrcp.pop %v1016
      %v1281 = vmul.f32 %v1016, %v1280
      %v1282 = vsub.f32 1.0, %v1281
      %v1283 = vmul.f32 %v1280, %v1282
      %v1284 = vadd.f32 %v1280, %v1283
      %vm1285 = vweird.f32 %v1016
      %vm1286 = vweird.f32 %v1280
      %vm1287 = vmor %vm1285, %vm1286
      %v1288 = vsel %vm1287, %v1280, %v1284
      %v1289 = vand.u32 2147483647, %v1016
      %vm1290 = vcmp.eq.f32.partialorder %v1289, 8.507059e+37
      %v1291 = vand.u32 %v1016, 2147483648
      %v1292 = vor.u32 1.1754944e-38, %v1291
      %v1293 = vsel %vm1290, %v1292, %v1288
      %v1294 = vmul.f32 1.0, %v1293
      %v1295 = vrcp.pop %v1017
      %v1296 = vmul.f32 %v1017, %v1295
      %v1297 = vsub.f32 1.0, %v1296
      %v1298 = vmul.f32 %v1295, %v1297
      %v1299 = vadd.f32 %v1295, %v1298
      %vm1300 = vweird.f32 %v1017
      %vm1301 = vweird.f32 %v1295
      %vm1302 = vmor %vm1300, %vm1301
      %v1303 = vsel %vm1302, %v1295, %v1299
      %v1304 = vand.u32 2147483647, %v1017
      %vm1305 = vcmp.eq.f32.partialorder %v1304, 8.507059e+37
      %v1306 = vand.u32 %v1017, 2147483648
      %v1307 = vor.u32 1.1754944e-38, %v1306
      %v1308 = vsel %vm1305, %v1307, %v1303
      %v1309 = vmul.f32 1.0, %v1308
      %v1310 = vrcp.pop %v1018
      %v1311 = vmul.f32 %v1018, %v1310
      %v1312 = vsub.f32 1.0, %v1311
      %v1313 = vmul.f32 %v1310, %v1312
      %v1314 = vadd.f32 %v1310, %v1313
      %vm1315 = vweird.f32 %v1018
      %vm1316 = vweird.f32 %v1310
      %vm1317 = vmor %vm1315, %vm1316
      %v1318 = vsel %vm1317, %v1310, %v1314
      %v1319 = vand.u32 2147483647, %v1018
      %vm1320 = vcmp.eq.f32.partialorder %v1319, 8.507059e+37
      %v1321 = vand.u32 %v1018, 2147483648
      %v1322 = vor.u32 1.1754944e-38, %v1321
      %v1323 = vsel %vm1320, %v1322, %v1318
      %v1324 = vmul.f32 1.0, %v1323
      %v1325 = vrcp.pop %v1019
      %v1326 = vmul.f32 %v1019, %v1325
      %v1327 = vsub.f32 1.0, %v1326
      %v1328 = vmul.f32 %v1325, %v1327
      %v1329 = vadd.f32 %v1325, %v1328
      %vm1330 = vweird.f32 %v1019
      %vm1331 = vweird.f32 %v1325
      %vm1332 = vmor %vm1330, %vm1331
      %v1333 = vsel %vm1332, %v1325, %v1329
      %v1334 = vand.u32 2147483647, %v1019
      %vm1335 = vcmp.eq.f32.partialorder %v1334, 8.507059e+37
      %v1336 = vand.u32 %v1019, 2147483648
      %v1337 = vor.u32 1.1754944e-38, %v1336
      %v1338 = vsel %vm1335, %v1337, %v1333
      %v1339 = vmul.f32 1.0, %v1338
      %v1340 = vrcp.pop %v1020
      %v1341 = vmul.f32 %v1020, %v1340
      %v1342 = vsub.f32 1.0, %v1341
      %v1343 = vmul.f32 %v1340, %v1342
      %v1344 = vadd.f32 %v1340, %v1343
      %vm1345 = vweird.f32 %v1020
      %vm1346 = vweird.f32 %v1340
      %vm1347 = vmor %vm1345, %vm1346
      %v1348 = vsel %vm1347, %v1340, %v1344
      %v1349 = vand.u32 2147483647, %v1020
      %vm1350 = vcmp.eq.f32.partialorder %v1349, 8.507059e+37
      %v1351 = vand.u32 %v1020, 2147483648
      %v1352 = vor.u32 1.1754944e-38, %v1351
      %v1353 = vsel %vm1350, %v1352, %v1348
      %v1354 = vmul.f32 1.0, %v1353
      %v1355 = vrcp.pop %v1021
      %v1356 = vmul.f32 %v1021, %v1355
      %v1357 = vsub.f32 1.0, %v1356
      %v1358 = vmul.f32 %v1355, %v1357
      %v1359 = vadd.f32 %v1355, %v1358
      %vm1360 = vweird.f32 %v1021
      %vm1361 = vweird.f32 %v1355
      %vm1362 = vmor %vm1360, %vm1361
      %v1363 = vsel %vm1362, %v1355, %v1359
      %v1364 = vand.u32 2147483647, %v1021
      %vm1365 = vcmp.eq.f32.partialorder %v1364, 8.507059e+37
      %v1366 = vand.u32 %v1021, 2147483648
      %v1367 = vor.u32 1.1754944e-38, %v1366
      %v1368 = vsel %vm1365, %v1367, %v1363
      %v1369 = vmul.f32 1.0, %v1368
      %v1370 = vrcp.pop %v1022
      %v1371 = vmul.f32 %v1022, %v1370
      %v1372 = vsub.f32 1.0, %v1371
      %v1373 = vmul.f32 %v1370, %v1372
      %v1374 = vadd.f32 %v1370, %v1373
      %vm1375 = vweird.f32 %v1022
      %vm1376 = vweird.f32 %v1370
      %vm1377 = vmor %vm1375, %vm1376
      %v1378 = vsel %vm1377, %v1370, %v1374
      %v1379 = vand.u32 2147483647, %v1022
      %vm1380 = vcmp.eq.f32.partialorder %v1379, 8.507059e+37
      %v1381 = vand.u32 %v1022, 2147483648
      %v1382 = vor.u32 1.1754944e-38, %v1381
      %v1383 = vsel %vm1380, %v1382, %v1378
      %v1384 = vmul.f32 1.0, %v1383
      %v1385 = vrcp.pop %v1023
      %v1386 = vmul.f32 %v1023, %v1385
      %v1387 = vsub.f32 1.0, %v1386
      %v1388 = vmul.f32 %v1385, %v1387
      %v1389 = vadd.f32 %v1385, %v1388
      %vm1390 = vweird.f32 %v1023
      %vm1391 = vweird.f32 %v1385
      %vm1392 = vmor %vm1390, %vm1391
      %v1393 = vsel %vm1392, %v1385, %v1389
      %v1394 = vand.u32 2147483647, %v1023
      %vm1395 = vcmp.eq.f32.partialorder %v1394, 8.507059e+37
      %v1396 = vand.u32 %v1023, 2147483648
      %v1397 = vor.u32 1.1754944e-38, %v1396
      %v1398 = vsel %vm1395, %v1397, %v1393
      %v1399 = vmul.f32 1.0, %v1398
      %v1400 = vrcp.pop %v1024
      %v1401 = vmul.f32 %v1024, %v1400
      %v1402 = vsub.f32 1.0, %v1401
      %v1403 = vmul.f32 %v1400, %v1402
      %v1404 = vadd.f32 %v1400, %v1403
      %vm1405 = vweird.f32 %v1024
      %vm1406 = vweird.f32 %v1400
      %vm1407 = vmor %vm1405, %vm1406
      %v1408 = vsel %vm1407, %v1400, %v1404
      %v1409 = vand.u32 2147483647, %v1024
      %vm1410 = vcmp.eq.f32.partialorder %v1409, 8.507059e+37
      %v1411 = vand.u32 %v1024, 2147483648
      %v1412 = vor.u32 1.1754944e-38, %v1411
      %v1413 = vsel %vm1410, %v1412, %v1408
      %v1414 = vmul.f32 1.0, %v1413
      %v1415 = vrcp.pop %v1025
      %v1416 = vmul.f32 %v1025, %v1415
      %v1417 = vsub.f32 1.0, %v1416
      %v1418 = vmul.f32 %v1415, %v1417
      %v1419 = vadd.f32 %v1415, %v1418
      %vm1420 = vweird.f32 %v1025
      %vm1421 = vweird.f32 %v1415
      %vm1422 = vmor %vm1420, %vm1421
      %v1423 = vsel %vm1422, %v1415, %v1419
      %v1424 = vand.u32 2147483647, %v1025
      %vm1425 = vcmp.eq.f32.partialorder %v1424, 8.507059e+37
      %v1426 = vand.u32 %v1025, 2147483648
      %v1427 = vor.u32 1.1754944e-38, %v1426
      %v1428 = vsel %vm1425, %v1427, %v1423
      %v1429 = vmul.f32 1.0, %v1428
      %v1430 = vrcp.pop %v1026
      %v1431 = vmul.f32 %v1026, %v1430
      %v1432 = vsub.f32 1.0, %v1431
      %v1433 = vmul.f32 %v1430, %v1432
      %v1434 = vadd.f32 %v1430, %v1433
      %vm1435 = vweird.f32 %v1026
      %vm1436 = vweird.f32 %v1430
      %vm1437 = vmor %vm1435, %vm1436
      %v1438 = vsel %vm1437, %v1430, %v1434
      %v1439 = vand.u32 2147483647, %v1026
      %vm1440 = vcmp.eq.f32.partialorder %v1439, 8.507059e+37
      %v1441 = vand.u32 %v1026, 2147483648
      %v1442 = vor.u32 1.1754944e-38, %v1441
      %v1443 = vsel %vm1440, %v1442, %v1438
      %v1444 = vmul.f32 1.0, %v1443
      %v1445 = vrcp.pop %v1027
      %v1446 = vmul.f32 %v1027, %v1445
      %v1447 = vsub.f32 1.0, %v1446
      %v1448 = vmul.f32 %v1445, %v1447
      %v1449 = vadd.f32 %v1445, %v1448
      %vm1450 = vweird.f32 %v1027
      %vm1451 = vweird.f32 %v1445
      %vm1452 = vmor %vm1450, %vm1451
      %v1453 = vsel %vm1452, %v1445, %v1449
      %v1454 = vand.u32 2147483647, %v1027
      %vm1455 = vcmp.eq.f32.partialorder %v1454, 8.507059e+37
      %v1456 = vand.u32 %v1027, 2147483648
      %v1457 = vor.u32 1.1754944e-38, %v1456
      %v1458 = vsel %vm1455, %v1457, %v1453
      %v1459 = vmul.f32 1.0, %v1458
      %v1460 = vrcp.pop %v1028
      %v1461 = vmul.f32 %v1028, %v1460
      %v1462 = vsub.f32 1.0, %v1461
      %v1463 = vmul.f32 %v1460, %v1462
      %v1464 = vadd.f32 %v1460, %v1463
      %vm1465 = vweird.f32 %v1028
      %vm1466 = vweird.f32 %v1460
      %vm1467 = vmor %vm1465, %vm1466
      %v1468 = vsel %vm1467, %v1460, %v1464
      %v1469 = vand.u32 2147483647, %v1028
      %vm1470 = vcmp.eq.f32.partialorder %v1469, 8.507059e+37
      %v1471 = vand.u32 %v1028, 2147483648
      %v1472 = vor.u32 1.1754944e-38, %v1471
      %v1473 = vsel %vm1470, %v1472, %v1468
      %v1474 = vmul.f32 1.0, %v1473
      %v1475 = vrcp.pop %v1029
      %v1476 = vmul.f32 %v1029, %v1475
      %v1477 = vsub.f32 1.0, %v1476
      %v1478 = vmul.f32 %v1475, %v1477
      %v1479 = vadd.f32 %v1475, %v1478
      %vm1480 = vweird.f32 %v1029
      %vm1481 = vweird.f32 %v1475
      %vm1482 = vmor %vm1480, %vm1481
      %v1483 = vsel %vm1482, %v1475, %v1479
      %v1484 = vand.u32 2147483647, %v1029
      %vm1485 = vcmp.eq.f32.partialorder %v1484, 8.507059e+37
      %v1486 = vand.u32 %v1029, 2147483648
      %v1487 = vor.u32 1.1754944e-38, %v1486
      %v1488 = vsel %vm1485, %v1487, %v1483
      %v1489 = vmul.f32 1.0, %v1488
      %v1490 = vrcp.pop %v1030
      %v1491 = vmul.f32 %v1030, %v1490
      %v1492 = vsub.f32 1.0, %v1491
      %v1493 = vmul.f32 %v1490, %v1492
      %v1494 = vadd.f32 %v1490, %v1493
      %vm1495 = vweird.f32 %v1030
      %vm1496 = vweird.f32 %v1490
      %vm1497 = vmor %vm1495, %vm1496
      %v1498 = vsel %vm1497, %v1490, %v1494
      %v1499 = vand.u32 2147483647, %v1030
      %vm1500 = vcmp.eq.f32.partialorder %v1499, 8.507059e+37
      %v1501 = vand.u32 %v1030, 2147483648
      %v1502 = vor.u32 1.1754944e-38, %v1501
      %v1503 = vsel %vm1500, %v1502, %v1498
      %v1504 = vmul.f32 1.0, %v1503
      %v1505 = vrcp.pop %v1031
      %v1506 = vmul.f32 %v1031, %v1505
      %v1507 = vsub.f32 1.0, %v1506
      %v1508 = vmul.f32 %v1505, %v1507
      %v1509 = vadd.f32 %v1505, %v1508
      %vm1510 = vweird.f32 %v1031
      %vm1511 = vweird.f32 %v1505
      %vm1512 = vmor %vm1510, %vm1511
      %v1513 = vsel %vm1512, %v1505, %v1509
      %v1514 = vand.u32 2147483647, %v1031
      %vm1515 = vcmp.eq.f32.partialorder %v1514, 8.507059e+37
      %v1516 = vand.u32 %v1031, 2147483648
      %v1517 = vor.u32 1.1754944e-38, %v1516
      %v1518 = vsel %vm1515, %v1517, %v1513
      %v1519 = vmul.f32 1.0, %v1518
      %v1520 = vrcp.pop %v1032
      %v1521 = vmul.f32 %v1032, %v1520
      %v1522 = vsub.f32 1.0, %v1521
      %v1523 = vmul.f32 %v1520, %v1522
      %v1524 = vadd.f32 %v1520, %v1523
      %vm1525 = vweird.f32 %v1032
      %vm1526 = vweird.f32 %v1520
      %vm1527 = vmor %vm1525, %vm1526
      %v1528 = vsel %vm1527, %v1520, %v1524
      %v1529 = vand.u32 2147483647, %v1032
      %vm1530 = vcmp.eq.f32.partialorder %v1529, 8.507059e+37
      %v1531 = vand.u32 %v1032, 2147483648
      %v1532 = vor.u32 1.1754944e-38, %v1531
      %v1533 = vsel %vm1530, %v1532, %v1528
      %v1534 = vmul.f32 1.0, %v1533
      %v1535 = vrcp.pop %v1033
      %v1536 = vmul.f32 %v1033, %v1535
      %v1537 = vsub.f32 1.0, %v1536
      %v1538 = vmul.f32 %v1535, %v1537
      %v1539 = vadd.f32 %v1535, %v1538
      %vm1540 = vweird.f32 %v1033
      %vm1541 = vweird.f32 %v1535
      %vm1542 = vmor %vm1540, %vm1541
      %v1543 = vsel %vm1542, %v1535, %v1539
      %v1544 = vand.u32 2147483647, %v1033
      %vm1545 = vcmp.eq.f32.partialorder %v1544, 8.507059e+37
      %v1546 = vand.u32 %v1033, 2147483648
      %v1547 = vor.u32 1.1754944e-38, %v1546
      %v1548 = vsel %vm1545, %v1547, %v1543
      %v1549 = vmul.f32 1.0, %v1548
      %v1550 = vrcp.pop %v1034
      %v1551 = vmul.f32 %v1034, %v1550
      %v1552 = vsub.f32 1.0, %v1551
      %v1553 = vmul.f32 %v1550, %v1552
      %v1554 = vadd.f32 %v1550, %v1553
      %vm1555 = vweird.f32 %v1034
      %vm1556 = vweird.f32 %v1550
      %vm1557 = vmor %vm1555, %vm1556
      %v1558 = vsel %vm1557, %v1550, %v1554
      %v1559 = vand.u32 2147483647, %v1034
      %vm1560 = vcmp.eq.f32.partialorder %v1559, 8.507059e+37
      %v1561 = vand.u32 %v1034, 2147483648
      %v1562 = vor.u32 1.1754944e-38, %v1561
      %v1563 = vsel %vm1560, %v1562, %v1558
      %v1564 = vmul.f32 1.0, %v1563
      %v1565 = vrcp.pop %v1035
      %v1566 = vmul.f32 %v1035, %v1565
      %v1567 = vsub.f32 1.0, %v1566
      %v1568 = vmul.f32 %v1565, %v1567
      %v1569 = vadd.f32 %v1565, %v1568
      %vm1570 = vweird.f32 %v1035
      %vm1571 = vweird.f32 %v1565
      %vm1572 = vmor %vm1570, %vm1571
      %v1573 = vsel %vm1572, %v1565, %v1569
      %v1574 = vand.u32 2147483647, %v1035
      %vm1575 = vcmp.eq.f32.partialorder %v1574, 8.507059e+37
      %v1576 = vand.u32 %v1035, 2147483648
      %v1577 = vor.u32 1.1754944e-38, %v1576
      %v1578 = vsel %vm1575, %v1577, %v1573
      %v1579 = vmul.f32 1.0, %v1578
      %v1580 = vrcp.pop %v1036
      %v1581 = vmul.f32 %v1036, %v1580
      %v1582 = vsub.f32 1.0, %v1581
      %v1583 = vmul.f32 %v1580, %v1582
      %v1584 = vadd.f32 %v1580, %v1583
      %vm1585 = vweird.f32 %v1036
      %vm1586 = vweird.f32 %v1580
      %vm1587 = vmor %vm1585, %vm1586
      %v1588 = vsel %vm1587, %v1580, %v1584
      %v1589 = vand.u32 2147483647, %v1036
      %vm1590 = vcmp.eq.f32.partialorder %v1589, 8.507059e+37
      %v1591 = vand.u32 %v1036, 2147483648
      %v1592 = vor.u32 1.1754944e-38, %v1591
      %v1593 = vsel %vm1590, %v1592, %v1588
      %v1594 = vmul.f32 1.0, %v1593
      %v1595 = vrcp.pop %v1037
      %v1596 = vmul.f32 %v1037, %v1595
      %v1597 = vsub.f32 1.0, %v1596
      %v1598 = vmul.f32 %v1595, %v1597
      %v1599 = vadd.f32 %v1595, %v1598
      %vm1600 = vweird.f32 %v1037
      %vm1601 = vweird.f32 %v1595
      %vm1602 = vmor %vm1600, %vm1601
      %v1603 = vsel %vm1602, %v1595, %v1599
      %v1604 = vand.u32 2147483647, %v1037
      %vm1605 = vcmp.eq.f32.partialorder %v1604, 8.507059e+37
      %v1606 = vand.u32 %v1037, 2147483648
      %v1607 = vor.u32 1.1754944e-38, %v1606
      %v1608 = vsel %vm1605, %v1607, %v1603
      %v1609 = vmul.f32 1.0, %v1608
      %v1610 = vrcp.pop %v1038
      %v1611 = vmul.f32 %v1038, %v1610
      %v1612 = vsub.f32 1.0, %v1611
      %v1613 = vmul.f32 %v1610, %v1612
      %v1614 = vadd.f32 %v1610, %v1613
      %vm1615 = vweird.f32 %v1038
      %vm1616 = vweird.f32 %v1610
      %vm1617 = vmor %vm1615, %vm1616
      %v1618 = vsel %vm1617, %v1610, %v1614
      %v1619 = vand.u32 2147483647, %v1038
      %vm1620 = vcmp.eq.f32.partialorder %v1619, 8.507059e+37
      %v1621 = vand.u32 %v1038, 2147483648
      %v1622 = vor.u32 1.1754944e-38, %v1621
      %v1623 = vsel %vm1620, %v1622, %v1618
      %v1624 = vmul.f32 1.0, %v1623
      %v1625 = vrcp.pop %v1039
      %v1626 = vmul.f32 %v1039, %v1625
      %v1627 = vsub.f32 1.0, %v1626
      %v1628 = vmul.f32 %v1625, %v1627
      %v1629 = vadd.f32 %v1625, %v1628
      %vm1630 = vweird.f32 %v1039
      %vm1631 = vweird.f32 %v1625
      %vm1632 = vmor %vm1630, %vm1631
      %v1633 = vsel %vm1632, %v1625, %v1629
      %v1634 = vand.u32 2147483647, %v1039
      %vm1635 = vcmp.eq.f32.partialorder %v1634, 8.507059e+37
      %v1636 = vand.u32 %v1039, 2147483648
      %v1637 = vor.u32 1.1754944e-38, %v1636
      %v1638 = vsel %vm1635, %v1637, %v1633
      %v1639 = vmul.f32 1.0, %v1638
      %v1640 = vrcp.pop %v1040
      %v1641 = vmul.f32 %v1040, %v1640
      %v1642 = vsub.f32 1.0, %v1641
      %v1643 = vmul.f32 %v1640, %v1642
      %v1644 = vadd.f32 %v1640, %v1643
      %vm1645 = vweird.f32 %v1040
      %vm1646 = vweird.f32 %v1640
      %vm1647 = vmor %vm1645, %vm1646
      %v1648 = vsel %vm1647, %v1640, %v1644
      %v1649 = vand.u32 2147483647, %v1040
      %vm1650 = vcmp.eq.f32.partialorder %v1649, 8.507059e+37
      %v1651 = vand.u32 %v1040, 2147483648
      %v1652 = vor.u32 1.1754944e-38, %v1651
      %v1653 = vsel %vm1650, %v1652, %v1648
      %v1654 = vmul.f32 1.0, %v1653
      %v1655 = vrcp.pop %v1041
      %v1656 = vmul.f32 %v1041, %v1655
      %v1657 = vsub.f32 1.0, %v1656
      %v1658 = vmul.f32 %v1655, %v1657
      %v1659 = vadd.f32 %v1655, %v1658
      %vm1660 = vweird.f32 %v1041
      %vm1661 = vweird.f32 %v1655
      %vm1662 = vmor %vm1660, %vm1661
      %v1663 = vsel %vm1662, %v1655, %v1659
      %v1664 = vand.u32 2147483647, %v1041
      %vm1665 = vcmp.eq.f32.partialorder %v1664, 8.507059e+37
      %v1666 = vand.u32 %v1041, 2147483648
      %v1667 = vor.u32 1.1754944e-38, %v1666
      %v1668 = vsel %vm1665, %v1667, %v1663
      %v1669 = vmul.f32 1.0, %v1668
      %v1670 = vrcp.pop %v1042
      %v1671 = vmul.f32 %v1042, %v1670
      %v1672 = vsub.f32 1.0, %v1671
      %v1673 = vmul.f32 %v1670, %v1672
      %v1674 = vadd.f32 %v1670, %v1673
      %vm1675 = vweird.f32 %v1042
      %vm1676 = vweird.f32 %v1670
      %vm1677 = vmor %vm1675, %vm1676
      %v1678 = vsel %vm1677, %v1670, %v1674
      %v1679 = vand.u32 2147483647, %v1042
      %vm1680 = vcmp.eq.f32.partialorder %v1679, 8.507059e+37
      %v1681 = vand.u32 %v1042, 2147483648
      %v1682 = vor.u32 1.1754944e-38, %v1681
      %v1683 = vsel %vm1680, %v1682, %v1678
      %v1684 = vmul.f32 1.0, %v1683
      %v1685 = vrcp.pop %v1043
      %v1686 = vmul.f32 %v1043, %v1685
      %v1687 = vsub.f32 1.0, %v1686
      %v1688 = vmul.f32 %v1685, %v1687
      %v1689 = vadd.f32 %v1685, %v1688
      %vm1690 = vweird.f32 %v1043
      %vm1691 = vweird.f32 %v1685
      %vm1692 = vmor %vm1690, %vm1691
      %v1693 = vsel %vm1692, %v1685, %v1689
      %v1694 = vand.u32 2147483647, %v1043
      %vm1695 = vcmp.eq.f32.partialorder %v1694, 8.507059e+37
      %v1696 = vand.u32 %v1043, 2147483648
      %v1697 = vor.u32 1.1754944e-38, %v1696
      %v1698 = vsel %vm1695, %v1697, %v1693
      %v1699 = vmul.f32 1.0, %v1698
      %v1700 = vrcp.pop %v1044
      %v1701 = vmul.f32 %v1044, %v1700
      %v1702 = vsub.f32 1.0, %v1701
      %v1703 = vmul.f32 %v1700, %v1702
      %v1704 = vadd.f32 %v1700, %v1703
      %vm1705 = vweird.f32 %v1044
      %vm1706 = vweird.f32 %v1700
      %vm1707 = vmor %vm1705, %vm1706
      %v1708 = vsel %vm1707, %v1700, %v1704
      %v1709 = vand.u32 2147483647, %v1044
      %vm1710 = vcmp.eq.f32.partialorder %v1709, 8.507059e+37
      %v1711 = vand.u32 %v1044, 2147483648
      %v1712 = vor.u32 1.1754944e-38, %v1711
      %v1713 = vsel %vm1710, %v1712, %v1708
      %v1714 = vmul.f32 1.0, %v1713
      %v1715 = vrcp.pop %v1045
      %v1716 = vmul.f32 %v1045, %v1715
      %v1717 = vsub.f32 1.0, %v1716
      %v1718 = vmul.f32 %v1715, %v1717
      %v1719 = vadd.f32 %v1715, %v1718
      %vm1720 = vweird.f32 %v1045
      %vm1721 = vweird.f32 %v1715
      %vm1722 = vmor %vm1720, %vm1721
      %v1723 = vsel %vm1722, %v1715, %v1719
      %v1724 = vand.u32 2147483647, %v1045
      %vm1725 = vcmp.eq.f32.partialorder %v1724, 8.507059e+37
      %v1726 = vand.u32 %v1045, 2147483648
      %v1727 = vor.u32 1.1754944e-38, %v1726
      %v1728 = vsel %vm1725, %v1727, %v1723
      %v1729 = vmul.f32 1.0, %v1728
      %v1730 = vrcp.pop %v1046
      %v1731 = vmul.f32 %v1046, %v1730
      %v1732 = vsub.f32 1.0, %v1731
      %v1733 = vmul.f32 %v1730, %v1732
      %v1734 = vadd.f32 %v1730, %v1733
      %vm1735 = vweird.f32 %v1046
      %vm1736 = vweird.f32 %v1730
      %vm1737 = vmor %vm1735, %vm1736
      %v1738 = vsel %vm1737, %v1730, %v1734
      %v1739 = vand.u32 2147483647, %v1046
      %vm1740 = vcmp.eq.f32.partialorder %v1739, 8.507059e+37
      %v1741 = vand.u32 %v1046, 2147483648
      %v1742 = vor.u32 1.1754944e-38, %v1741
      %v1743 = vsel %vm1740, %v1742, %v1738
      %v1744 = vmul.f32 1.0, %v1743
      %v1745 = vrcp.pop %v1047
      %v1746 = vmul.f32 %v1047, %v1745
      %v1747 = vsub.f32 1.0, %v1746
      %v1748 = vmul.f32 %v1745, %v1747
      %v1749 = vadd.f32 %v1745, %v1748
      %vm1750 = vweird.f32 %v1047
      %vm1751 = vweird.f32 %v1745
      %vm1752 = vmor %vm1750, %vm1751
      %v1753 = vsel %vm1752, %v1745, %v1749
      %v1754 = vand.u32 2147483647, %v1047
      %vm1755 = vcmp.eq.f32.partialorder %v1754, 8.507059e+37
      %v1756 = vand.u32 %v1047, 2147483648
      %v1757 = vor.u32 1.1754944e-38, %v1756
      %v1758 = vsel %vm1755, %v1757, %v1753
      %v1759 = vmul.f32 1.0, %v1758
      %v1760 = vrcp.pop %v1048
      %v1761 = vmul.f32 %v1048, %v1760
      %v1762 = vsub.f32 1.0, %v1761
      %v1763 = vmul.f32 %v1760, %v1762
      %v1764 = vadd.f32 %v1760, %v1763
      %vm1765 = vweird.f32 %v1048
      %vm1766 = vweird.f32 %v1760
      %vm1767 = vmor %vm1765, %vm1766
      %v1768 = vsel %vm1767, %v1760, %v1764
      %v1769 = vand.u32 2147483647, %v1048
      %vm1770 = vcmp.eq.f32.partialorder %v1769, 8.507059e+37
      %v1771 = vand.u32 %v1048, 2147483648
      %v1772 = vor.u32 1.1754944e-38, %v1771
      %v1773 = vsel %vm1770, %v1772, %v1768
      %v1774 = vmul.f32 1.0, %v1773
      %v1775 = vrcp.pop %v1049
      %v1776 = vmul.f32 %v1049, %v1775
      %v1777 = vsub.f32 1.0, %v1776
      %v1778 = vmul.f32 %v1775, %v1777
      %v1779 = vadd.f32 %v1775, %v1778
      %vm1780 = vweird.f32 %v1049
      %vm1781 = vweird.f32 %v1775
      %vm1782 = vmor %vm1780, %vm1781
      %v1783 = vsel %vm1782, %v1775, %v1779
      %v1784 = vand.u32 2147483647, %v1049
      %vm1785 = vcmp.eq.f32.partialorder %v1784, 8.507059e+37
      %v1786 = vand.u32 %v1049, 2147483648
      %v1787 = vor.u32 1.1754944e-38, %v1786
      %v1788 = vsel %vm1785, %v1787, %v1783
      %v1789 = vmul.f32 1.0, %v1788
      %v1790 = vrcp.pop %v1050
      %v1791 = vmul.f32 %v1050, %v1790
      %v1792 = vsub.f32 1.0, %v1791
      %v1793 = vmul.f32 %v1790, %v1792
      %v1794 = vadd.f32 %v1790, %v1793
      %vm1795 = vweird.f32 %v1050
      %vm1796 = vweird.f32 %v1790
      %vm1797 = vmor %vm1795, %vm1796
      %v1798 = vsel %vm1797, %v1790, %v1794
      %v1799 = vand.u32 2147483647, %v1050
      %vm1800 = vcmp.eq.f32.partialorder %v1799, 8.507059e+37
      %v1801 = vand.u32 %v1050, 2147483648
      %v1802 = vor.u32 1.1754944e-38, %v1801
      %v1803 = vsel %vm1800, %v1802, %v1798
      %v1804 = vmul.f32 1.0, %v1803
      %v1805 = vrcp.pop %v1051
      %v1806 = vmul.f32 %v1051, %v1805
      %v1807 = vsub.f32 1.0, %v1806
      %v1808 = vmul.f32 %v1805, %v1807
      %v1809 = vadd.f32 %v1805, %v1808
      %vm1810 = vweird.f32 %v1051
      %vm1811 = vweird.f32 %v1805
      %vm1812 = vmor %vm1810, %vm1811
      %v1813 = vsel %vm1812, %v1805, %v1809
      %v1814 = vand.u32 2147483647, %v1051
      %vm1815 = vcmp.eq.f32.partialorder %v1814, 8.507059e+37
      %v1816 = vand.u32 %v1051, 2147483648
      %v1817 = vor.u32 1.1754944e-38, %v1816
      %v1818 = vsel %vm1815, %v1817, %v1813
      %v1819 = vmul.f32 1.0, %v1818
      %v1820 = vrcp.pop %v1052
      %v1821 = vmul.f32 %v1052, %v1820
      %v1822 = vsub.f32 1.0, %v1821
      %v1823 = vmul.f32 %v1820, %v1822
      %v1824 = vadd.f32 %v1820, %v1823
      %vm1825 = vweird.f32 %v1052
      %vm1826 = vweird.f32 %v1820
      %vm1827 = vmor %vm1825, %vm1826
      %v1828 = vsel %vm1827, %v1820, %v1824
      %v1829 = vand.u32 2147483647, %v1052
      %vm1830 = vcmp.eq.f32.partialorder %v1829, 8.507059e+37
      %v1831 = vand.u32 %v1052, 2147483648
      %v1832 = vor.u32 1.1754944e-38, %v1831
      %v1833 = vsel %vm1830, %v1832, %v1828
      %v1834 = vmul.f32 1.0, %v1833
      %v1835 = vrcp.pop %v1053
      %v1836 = vmul.f32 %v1053, %v1835
      %v1837 = vsub.f32 1.0, %v1836
      %v1838 = vmul.f32 %v1835, %v1837
      %v1839 = vadd.f32 %v1835, %v1838
      %vm1840 = vweird.f32 %v1053
      %vm1841 = vweird.f32 %v1835
      %vm1842 = vmor %vm1840, %vm1841
      %v1843 = vsel %vm1842, %v1835, %v1839
      %v1844 = vand.u32 2147483647, %v1053
      %vm1845 = vcmp.eq.f32.partialorder %v1844, 8.507059e+37
      %v1846 = vand.u32 %v1053, 2147483648
      %v1847 = vor.u32 1.1754944e-38, %v1846
      %v1848 = vsel %vm1845, %v1847, %v1843
      %v1849 = vmul.f32 1.0, %v1848
      %v1850 = vrcp.pop %v1054
      %v1851 = vmul.f32 %v1054, %v1850
      %v1852 = vsub.f32 1.0, %v1851
      %v1853 = vmul.f32 %v1850, %v1852
      %v1854 = vadd.f32 %v1850, %v1853
      %vm1855 = vweird.f32 %v1054
      %vm1856 = vweird.f32 %v1850
      %vm1857 = vmor %vm1855, %vm1856
      %v1858 = vsel %vm1857, %v1850, %v1854
      %v1859 = vand.u32 2147483647, %v1054
      %vm1860 = vcmp.eq.f32.partialorder %v1859, 8.507059e+37
      %v1861 = vand.u32 %v1054, 2147483648
      %v1862 = vor.u32 1.1754944e-38, %v1861
      %v1863 = vsel %vm1860, %v1862, %v1858
      %v1864 = vmul.f32 1.0, %v1863
      %v1865 = vmul.f32 %v678, %v1069
      %v1866 = vmul.f32 %v681, %v1084
      %v1867 = vmul.f32 %v684, %v1099
      %v1868 = vmul.f32 %v687, %v1114
      %v1869 = vmul.f32 %v690, %v1129
      %v1870 = vmul.f32 %v693, %v1144
      %v1871 = vmul.f32 %v696, %v1159
      %v1872 = vmul.f32 %v699, %v1174
      %v1873 = vmul.f32 %v702, %v1189
      %v1874 = vmul.f32 %v705, %v1204
      %v1875 = vmul.f32 %v708, %v1219
      %v1876 = vmul.f32 %v711, %v1234
      %v1877 = vmul.f32 %v714, %v1249
      %v1878 = vmul.f32 %v717, %v1264
      %v1879 = vmul.f32 %v720, %v1279
      %v1880 = vmul.f32 %v723, %v1294
      %v1881 = vmul.f32 %v726, %v1309
      %v1882 = vmul.f32 %v729, %v1324
      %v1883 = vmul.f32 %v732, %v1339
      %v1884 = vmul.f32 %v735, %v1354
      %v1885 = vmul.f32 %v738, %v1369
      %v1886 = vmul.f32 %v741, %v1384
      %v1887 = vmul.f32 %v744, %v1399
      %v1888 = vmul.f32 %v747, %v1414
      %v1889 = vmul.f32 %v750, %v1429
      %v1890 = vmul.f32 %v753, %v1444
      %v1891 = vmul.f32 %v756, %v1459
      %v1892 = vmul.f32 %v759, %v1474
      %v1893 = vmul.f32 %v762, %v1489
      %v1894 = vmul.f32 %v765, %v1504
      %v1895 = vmul.f32 %v768, %v1519
      %v1896 = vmul.f32 %v771, %v1534
      %v1897 = vmul.f32 %v774, %v1549
      %v1898 = vmul.f32 %v777, %v1564
      %v1899 = vmul.f32 %v780, %v1579
      %v1900 = vmul.f32 %v783, %v1594
      %v1901 = vmul.f32 %v786, %v1609
      %v1902 = vmul.f32 %v789, %v1624
      %v1903 = vmul.f32 %v792, %v1639
      %v1904 = vmul.f32 %v795, %v1654
      %v1905 = vmul.f32 %v798, %v1669
      %v1906 = vmul.f32 %v801, %v1684
      %v1907 = vmul.f32 %v804, %v1699
      %v1908 = vmul.f32 %v807, %v1714
      %v1909 = vmul.f32 %v810, %v1729
      %v1910 = vmul.f32 %v813, %v1744
      %v1911 = vmul.f32 %v816, %v1759
      %v1912 = vmul.f32 %v819, %v1774
      %v1913 = vmul.f32 %v822, %v1789
      %v1914 = vmul.f32 %v825, %v1804
      %v1915 = vmul.f32 %v828, %v1819
      %v1916 = vmul.f32 %v831, %v1834
      %v1917 = vmul.f32 %v834, %v1849
      %v1918 = vmul.f32 %v837, %v1864
      %v1919 = vlaneseq
      %v1920 = vshrl.u32 %v1919, 7
      %v1921 = vadd.s32 %v1920, 8
      %v1922 = vadd.s32 %v1920, 16
      %vm1923 = vcmp.ge.s32.totalorder %v1920, 1
      %vm1924 = vcmp.ge.s32.totalorder %v1921, 1
      %vm1925 = vcmp.ge.s32.totalorder %v1922, 1
      %vm1926 = vmand 0, %vm1923
      %vm1927 = vmand 0, %vm1924
      %vm1928 = vmand 0, %vm1925
      %vm1929 = vmand 1, %vm1923
      %vm1930 = vmand 1, %vm1924
      %vm1931 = vmand 1, %vm1925
      %vm1932 = vcmp.lt.s32.totalorder %v1920, 17
      %vm1933 = vcmp.lt.s32.totalorder %v1921, 17
      %vm1934 = vcmp.lt.s32.totalorder %v1922, 17
      %vm1935 = vmand %vm1926, %vm1932
      %vm1936 = vmand %vm1927, %vm1933
      %vm1937 = vmand %vm1928, %vm1934
      %vm1938 = vmand %vm1929, %vm1932
      %vm1939 = vmand %vm1930, %vm1933
      %vm1940 = vmand %vm1931, %vm1934
      %v1941 = vsel %vm1935, %v1865, 0.0
      %v1942 = vsel %vm1936, %v1866, 0.0
      %v1943 = vsel %vm1937, %v1867, 0.0
      %v1944 = vsel %vm1938, %v1868, 0.0
      %v1945 = vsel %vm1939, %v1869, 0.0
      %v1946 = vsel %vm1940, %v1870, 0.0
      %v1947 = vsel %vm1938, %v1871, 0.0
      %v1948 = vsel %vm1939, %v1872, 0.0
      %v1949 = vsel %vm1940, %v1873, 0.0
      %v1950 = vsel %vm1938, %v1874, 0.0
      %v1951 = vsel %vm1939, %v1875, 0.0
      %v1952 = vsel %vm1940, %v1876, 0.0
      %v1953 = vsel %vm1938, %v1877, 0.0
      %v1954 = vsel %vm1939, %v1878, 0.0
      %v1955 = vsel %vm1940, %v1879, 0.0
      %v1956 = vsel %vm1938, %v1880, 0.0
      %v1957 = vsel %vm1939, %v1881, 0.0
      %v1958 = vsel %vm1940, %v1882, 0.0
      %v1959 = vsel %vm1938, %v1883, 0.0
      %v1960 = vsel %vm1939, %v1884, 0.0
      %v1961 = vsel %vm1940, %v1885, 0.0
      %v1962 = vsel %vm1938, %v1886, 0.0
      %v1963 = vsel %vm1939, %v1887, 0.0
      %v1964 = vsel %vm1940, %v1888, 0.0
      %v1965 = vsel %vm1938, %v1889, 0.0
      %v1966 = vsel %vm1939, %v1890, 0.0
      %v1967 = vsel %vm1940, %v1891, 0.0
      %v1968 = vsel %vm1938, %v1892, 0.0
      %v1969 = vsel %vm1939, %v1893, 0.0
      %v1970 = vsel %vm1940, %v1894, 0.0
      %v1971 = vsel %vm1938, %v1895, 0.0
      %v1972 = vsel %vm1939, %v1896, 0.0
      %v1973 = vsel %vm1940, %v1897, 0.0
      %v1974 = vsel %vm1938, %v1898, 0.0
      %v1975 = vsel %vm1939, %v1899, 0.0
      %v1976 = vsel %vm1940, %v1900, 0.0
      %v1977 = vsel %vm1938, %v1901, 0.0
      %v1978 = vsel %vm1939, %v1902, 0.0
      %v1979 = vsel %vm1940, %v1903, 0.0
      %v1980 = vsel %vm1938, %v1904, 0.0
      %v1981 = vsel %vm1939, %v1905, 0.0
      %v1982 = vsel %vm1940, %v1906, 0.0
      %v1983 = vsel %vm1938, %v1907, 0.0
      %v1984 = vsel %vm1939, %v1908, 0.0
      %v1985 = vsel %vm1940, %v1909, 0.0
      %v1986 = vsel %vm1938, %v1910, 0.0
      %v1987 = vsel %vm1939, %v1911, 0.0
      %v1988 = vsel %vm1940, %v1912, 0.0
      %v1989 = vsel %vm1938, %v1913, 0.0
      %v1990 = vsel %vm1939, %v1914, 0.0
      %v1991 = vsel %vm1940, %v1915, 0.0
      %v1992 = vsel %vm1935, %v1916, 0.0
      %v1993 = vsel %vm1936, %v1917, 0.0
      %v1994 = vsel %vm1937, %v1918, 0.0
      %vm1995 = vcmask 195584
      %1996 = vst.msk [vmem:[#allocation2] sm:$0xff] %vm1995, %v1941
      %1997 = vst.msk [vmem:[#allocation2 + $0x8] sm:$0xff] %vm1995, %v1942
      %1998 = vst.msk [vmem:[#allocation2 + $0x10] sm:$0xff] %vm1995, %v1943
      %1999 = vst.msk [vmem:[#allocation2 + $0x18] sm:$0xff] %vm1995, %v1944
      %2000 = vst.msk [vmem:[#allocation2 + $0x20] sm:$0xff] %vm1995, %v1945
      %2001 = vst.msk [vmem:[#allocation2 + $0x28] sm:$0xff] %vm1995, %v1946
      %2002 = vst.msk [vmem:[#allocation2 + $0x30] sm:$0xff] %vm1995, %v1947
      %2003 = vst.msk [vmem:[#allocation2 + $0x38] sm:$0xff] %vm1995, %v1948
      %2004 = vst.msk [vmem:[#allocation2 + $0x40] sm:$0xff] %vm1995, %v1949
      %2005 = vst.msk [vmem:[#allocation2 + $0x48] sm:$0xff] %vm1995, %v1950
      %2006 = vst.msk [vmem:[#allocation2 + $0x50] sm:$0xff] %vm1995, %v1951
      %2007 = vst.msk [vmem:[#allocation2 + $0x58] sm:$0xff] %vm1995, %v1952
      %2008 = vst.msk [vmem:[#allocation2 + $0x60] sm:$0xff] %vm1995, %v1953
      %2009 = vst.msk [vmem:[#allocation2 + $0x68] sm:$0xff] %vm1995, %v1954
      %2010 = vst.msk [vmem:[#allocation2 + $0x70] sm:$0xff] %vm1995, %v1955
      %2011 = vst.msk [vmem:[#allocation2 + $0x78] sm:$0xff] %vm1995, %v1956
      %2012 = vst.msk [vmem:[#allocation2 + $0x80] sm:$0xff] %vm1995, %v1957
      %2013 = vst.msk [vmem:[#allocation2 + $0x88] sm:$0xff] %vm1995, %v1958
      %2014 = vst.msk [vmem:[#allocation2 + $0x90] sm:$0xff] %vm1995, %v1959
      %2015 = vst.msk [vmem:[#allocation2 + $0x98] sm:$0xff] %vm1995, %v1960
      %2016 = vst.msk [vmem:[#allocation2 + $0xa0] sm:$0xff] %vm1995, %v1961
      %2017 = vst.msk [vmem:[#allocation2 + $0xa8] sm:$0xff] %vm1995, %v1962
      %2018 = vst.msk [vmem:[#allocation2 + $0xb0] sm:$0xff] %vm1995, %v1963
      %2019 = vst.msk [vmem:[#allocation2 + $0xb8] sm:$0xff] %vm1995, %v1964
      %2020 = vst.msk [vmem:[#allocation2 + $0xc0] sm:$0xff] %vm1995, %v1965
      %2021 = vst.msk [vmem:[#allocation2 + $0xc8] sm:$0xff] %vm1995, %v1966
      %2022 = vst.msk [vmem:[#allocation2 + $0xd0] sm:$0xff] %vm1995, %v1967
      %2023 = vst.msk [vmem:[#allocation2 + $0xd8] sm:$0xff] %vm1995, %v1968
      %2024 = vst.msk [vmem:[#allocation2 + $0xe0] sm:$0xff] %vm1995, %v1969
      %2025 = vst.msk [vmem:[#allocation2 + $0xe8] sm:$0xff] %vm1995, %v1970
      %2026 = vst.msk [vmem:[#allocation2 + $0xf0] sm:$0xff] %vm1995, %v1971
      %2027 = vst.msk [vmem:[#allocation2 + $0xf8] sm:$0xff] %vm1995, %v1972
      %2028 = vst.msk [vmem:[#allocation2 + $0x100] sm:$0xff] %vm1995, %v1973
      %2029 = vst.msk [vmem:[#allocation2 + $0x108] sm:$0xff] %vm1995, %v1974
      %2030 = vst.msk [vmem:[#allocation2 + $0x110] sm:$0xff] %vm1995, %v1975
      %2031 = vst.msk [vmem:[#allocation2 + $0x118] sm:$0xff] %vm1995, %v1976
      %2032 = vst.msk [vmem:[#allocation2 + $0x120] sm:$0xff] %vm1995, %v1977
      %2033 = vst.msk [vmem:[#allocation2 + $0x128] sm:$0xff] %vm1995, %v1978
      %2034 = vst.msk [vmem:[#allocation2 + $0x130] sm:$0xff] %vm1995, %v1979
      %2035 = vst.msk [vmem:[#allocation2 + $0x138] sm:$0xff] %vm1995, %v1980
      %2036 = vst.msk [vmem:[#allocation2 + $0x140] sm:$0xff] %vm1995, %v1981
      %2037 = vst.msk [vmem:[#allocation2 + $0x148] sm:$0xff] %vm1995, %v1982
      %2038 = vst.msk [vmem:[#allocation2 + $0x150] sm:$0xff] %vm1995, %v1983
      %2039 = vst.msk [vmem:[#allocation2 + $0x158] sm:$0xff] %vm1995, %v1984
      %2040 = vst.msk [vmem:[#allocation2 + $0x160] sm:$0xff] %vm1995, %v1985
      %2041 = vst.msk [vmem:[#allocation2 + $0x168] sm:$0xff] %vm1995, %v1986
      %2042 = vst.msk [vmem:[#allocation2 + $0x170] sm:$0xff] %vm1995, %v1987
      %2043 = vst.msk [vmem:[#allocation2 + $0x178] sm:$0xff] %vm1995, %v1988
      %2044 = vst.msk [vmem:[#allocation2 + $0x180] sm:$0xff] %vm1995, %v1989
      %2045 = vst.msk [vmem:[#allocation2 + $0x188] sm:$0xff] %vm1995, %v1990
      %2046 = vst.msk [vmem:[#allocation2 + $0x190] sm:$0xff] %vm1995, %v1991
      %2047 = vst.msk [vmem:[#allocation2 + $0x198] sm:$0xff] %vm1995, %v1992
      %2048 = vst.msk [vmem:[#allocation2 + $0x1a0] sm:$0xff] %vm1995, %v1993
      %2049 = vst.msk [vmem:[#allocation2 + $0x1a8] sm:$0xff] %vm1995, %v1994
      %v2050 = vld [vmem:[%s3] sm:$0xff]
      %v2051 = vld [vmem:[%s3 + $0x8] sm:$0x1]
      %v2052 = vld [vmem:[#allocation2] sm:$0xff]
      %v2053 = vld [vmem:[#allocation2 + $0x8] sm:$0xff]
      %v2054 = vld [vmem:[#allocation2 + $0x18] sm:$0xff]
      %v2055 = vld [vmem:[#allocation2 + $0x20] sm:$0xff]
      %v2056 = vld [vmem:[#allocation2 + $0x30] sm:$0xff]
      %v2057 = vld [vmem:[#allocation2 + $0x38] sm:$0xff]
      %v2058 = vld [vmem:[#allocation2 + $0x48] sm:$0xff]
      %v2059 = vld [vmem:[#allocation2 + $0x50] sm:$0xff]
      %v2060 = vld [vmem:[#allocation2 + $0x60] sm:$0xff]
      %v2061 = vld [vmem:[#allocation2 + $0x68] sm:$0xff]
      %v2062 = vld [vmem:[#allocation2 + $0x78] sm:$0xff]
      %v2063 = vld [vmem:[#allocation2 + $0x80] sm:$0xff]
      %v2064 = vld [vmem:[#allocation2 + $0x90] sm:$0xff]
      %v2065 = vld [vmem:[#allocation2 + $0x98] sm:$0xff]
      %v2066 = vld [vmem:[#allocation2 + $0xa8] sm:$0xff]
      %v2067 = vld [vmem:[#allocation2 + $0xb0] sm:$0xff]
      %v2068 = vld [vmem:[#allocation2 + $0xc0] sm:$0xff]
      %v2069 = vld [vmem:[#allocation2 + $0xc8] sm:$0xff]
      %v2070 = vld [vmem:[#allocation2 + $0xd8] sm:$0xff]
      %v2071 = vld [vmem:[#allocation2 + $0xe0] sm:$0xff]
      %v2072 = vld [vmem:[#allocation2 + $0xf0] sm:$0xff]
      %v2073 = vld [vmem:[#allocation2 + $0xf8] sm:$0xff]
      %v2074 = vld [vmem:[#allocation2 + $0x108] sm:$0xff]
      %v2075 = vld [vmem:[#allocation2 + $0x110] sm:$0xff]
      %v2076 = vld [vmem:[#allocation2 + $0x120] sm:$0xff]
      %v2077 = vld [vmem:[#allocation2 + $0x128] sm:$0xff]
      %v2078 = vld [vmem:[#allocation2 + $0x138] sm:$0xff]
      %v2079 = vld [vmem:[#allocation2 + $0x140] sm:$0xff]
      %v2080 = vld [vmem:[#allocation2 + $0x150] sm:$0xff]
      %v2081 = vld [vmem:[#allocation2 + $0x158] sm:$0xff]
      %v2082 = vld [vmem:[#allocation2 + $0x168] sm:$0xff]
      %v2083 = vld [vmem:[#allocation2 + $0x170] sm:$0xff]
      %v2084 = vperm.slane %v2050, 0
      %v2085 = vmul.f32 %v2052, %v2084
      %v2086 = vmul.f32 %v2053, %v2084
      %v2087 = vmul.f32 %v2054, %v2084
      %v2088 = vmul.f32 %v2055, %v2084
      %v2089 = vmul.f32 %v2056, %v2084
      %v2090 = vmul.f32 %v2057, %v2084
      %v2091 = vmul.f32 %v2058, %v2084
      %v2092 = vmul.f32 %v2059, %v2084
      %v2093 = vmul.f32 %v2060, %v2084
      %v2094 = vmul.f32 %v2061, %v2084
      %v2095 = vmul.f32 %v2062, %v2084
      %v2096 = vmul.f32 %v2063, %v2084
      %v2097 = vmul.f32 %v2064, %v2084
      %v2098 = vmul.f32 %v2065, %v2084
      %v2099 = vmul.f32 %v2066, %v2084
      %v2100 = vmul.f32 %v2067, %v2084
      %v2101 = vmul.f32 %v2068, %v2084
      %v2102 = vmul.f32 %v2069, %v2084
      %v2103 = vmul.f32 %v2070, %v2084
      %v2104 = vmul.f32 %v2071, %v2084
      %v2105 = vmul.f32 %v2072, %v2084
      %v2106 = vmul.f32 %v2073, %v2084
      %v2107 = vmul.f32 %v2074, %v2084
      %v2108 = vmul.f32 %v2075, %v2084
      %v2109 = vmul.f32 %v2076, %v2084
      %v2110 = vmul.f32 %v2077, %v2084
      %v2111 = vmul.f32 %v2078, %v2084
      %v2112 = vmul.f32 %v2079, %v2084
      %v2113 = vmul.f32 %v2080, %v2084
      %v2114 = vmul.f32 %v2081, %v2084
      %v2115 = vmul.f32 %v2082, %v2084
      %v2116 = vmul.f32 %v2083, %v2084
      %v2117 = vadd.f32 %v2085, 0.0
      %v2118 = vadd.f32 %v2086, 0.0
      %v2119 = vadd.f32 %v2087, 0.0
      %v2120 = vadd.f32 %v2088, 0.0
      %v2121 = vadd.f32 %v2089, 0.0
      %v2122 = vadd.f32 %v2090, 0.0
      %v2123 = vadd.f32 %v2091, 0.0
      %v2124 = vadd.f32 %v2092, 0.0
      %v2125 = vadd.f32 %v2093, 0.0
      %v2126 = vadd.f32 %v2094, 0.0
      %v2127 = vadd.f32 %v2095, 0.0
      %v2128 = vadd.f32 %v2096, 0.0
      %v2129 = vadd.f32 %v2097, 0.0
      %v2130 = vadd.f32 %v2098, 0.0
      %v2131 = vadd.f32 %v2099, 0.0
      %v2132 = vadd.f32 %v2100, 0.0
      %v2133 = vadd.f32 %v2101, 0.0
      %v2134 = vadd.f32 %v2102, 0.0
      %v2135 = vadd.f32 %v2103, 0.0
      %v2136 = vadd.f32 %v2104, 0.0
      %v2137 = vadd.f32 %v2105, 0.0
      %v2138 = vadd.f32 %v2106, 0.0
      %v2139 = vadd.f32 %v2107, 0.0
      %v2140 = vadd.f32 %v2108, 0.0
      %v2141 = vadd.f32 %v2109, 0.0
      %v2142 = vadd.f32 %v2110, 0.0
      %v2143 = vadd.f32 %v2111, 0.0
      %v2144 = vadd.f32 %v2112, 0.0
      %v2145 = vadd.f32 %v2113, 0.0
      %v2146 = vadd.f32 %v2114, 0.0
      %v2147 = vadd.f32 %v2115, 0.0
      %v2148 = vadd.f32 %v2116, 0.0
      %s2149 = scalar_lea.vmem [#allocation2], 24
      %v2150 = vld [vmem:[%s2149] sm:$0xff]
      %v2151 = vld [vmem:[%s2149 + $0x8] sm:$0xff]
      %v2152 = vld [vmem:[%s2149 + $0x18] sm:$0xff]
      %v2153 = vld [vmem:[%s2149 + $0x20] sm:$0xff]
      %v2154 = vld [vmem:[%s2149 + $0x30] sm:$0xff]
      %v2155 = vld [vmem:[%s2149 + $0x38] sm:$0xff]
      %v2156 = vld [vmem:[%s2149 + $0x48] sm:$0xff]
      %v2157 = vld [vmem:[%s2149 + $0x50] sm:$0xff]
      %v2158 = vld [vmem:[%s2149 + $0x60] sm:$0xff]
      %v2159 = vld [vmem:[%s2149 + $0x68] sm:$0xff]
      %v2160 = vld [vmem:[%s2149 + $0x78] sm:$0xff]
      %v2161 = vld [vmem:[%s2149 + $0x80] sm:$0xff]
      %v2162 = vld [vmem:[%s2149 + $0x90] sm:$0xff]
      %v2163 = vld [vmem:[%s2149 + $0x98] sm:$0xff]
      %v2164 = vld [vmem:[%s2149 + $0xa8] sm:$0xff]
      %v2165 = vld [vmem:[%s2149 + $0xb0] sm:$0xff]
      %v2166 = vld [vmem:[%s2149 + $0xc0] sm:$0xff]
      %v2167 = vld [vmem:[%s2149 + $0xc8] sm:$0xff]
      %v2168 = vld [vmem:[%s2149 + $0xd8] sm:$0xff]
      %v2169 = vld [vmem:[%s2149 + $0xe0] sm:$0xff]
      %v2170 = vld [vmem:[%s2149 + $0xf0] sm:$0xff]
      %v2171 = vld [vmem:[%s2149 + $0xf8] sm:$0xff]
      %v2172 = vld [vmem:[%s2149 + $0x108] sm:$0xff]
      %v2173 = vld [vmem:[%s2149 + $0x110] sm:$0xff]
      %v2174 = vld [vmem:[%s2149 + $0x120] sm:$0xff]
      %v2175 = vld [vmem:[%s2149 + $0x128] sm:$0xff]
      %v2176 = vld [vmem:[%s2149 + $0x138] sm:$0xff]
      %v2177 = vld [vmem:[%s2149 + $0x140] sm:$0xff]
      %v2178 = vld [vmem:[%s2149 + $0x150] sm:$0xff]
      %v2179 = vld [vmem:[%s2149 + $0x158] sm:$0xff]
      %v2180 = vld [vmem:[%s2149 + $0x168] sm:$0xff]
      %v2181 = vld [vmem:[%s2149 + $0x170] sm:$0xff]
      %v2182 = vperm.slane %v2050, 3
      %v2183 = vmul.f32 %v2150, %v2182
      %v2184 = vmul.f32 %v2151, %v2182
      %v2185 = vmul.f32 %v2152, %v2182
      %v2186 = vmul.f32 %v2153, %v2182
      %v2187 = vmul.f32 %v2154, %v2182
      %v2188 = vmul.f32 %v2155, %v2182
      %v2189 = vmul.f32 %v2156, %v2182
      %v2190 = vmul.f32 %v2157, %v2182
      %v2191 = vmul.f32 %v2158, %v2182
      %v2192 = vmul.f32 %v2159, %v2182
      %v2193 = vmul.f32 %v2160, %v2182
      %v2194 = vmul.f32 %v2161, %v2182
      %v2195 = vmul.f32 %v2162, %v2182
      %v2196 = vmul.f32 %v2163, %v2182
      %v2197 = vmul.f32 %v2164, %v2182
      %v2198 = vmul.f32 %v2165, %v2182
      %v2199 = vmul.f32 %v2166, %v2182
      %v2200 = vmul.f32 %v2167, %v2182
      %v2201 = vmul.f32 %v2168, %v2182
      %v2202 = vmul.f32 %v2169, %v2182
      %v2203 = vmul.f32 %v2170, %v2182
      %v2204 = vmul.f32 %v2171, %v2182
      %v2205 = vmul.f32 %v2172, %v2182
      %v2206 = vmul.f32 %v2173, %v2182
      %v2207 = vmul.f32 %v2174, %v2182
      %v2208 = vmul.f32 %v2175, %v2182
      %v2209 = vmul.f32 %v2176, %v2182
      %v2210 = vmul.f32 %v2177, %v2182
      %v2211 = vmul.f32 %v2178, %v2182
      %v2212 = vmul.f32 %v2179, %v2182
      %v2213 = vmul.f32 %v2180, %v2182
      %v2214 = vmul.f32 %v2181, %v2182
      %v2215 = vadd.f32 %v2117, %v2183
      %v2216 = vadd.f32 %v2118, %v2184
      %v2217 = vadd.f32 %v2119, %v2185
      %v2218 = vadd.f32 %v2120, %v2186
      %v2219 = vadd.f32 %v2121, %v2187
      %v2220 = vadd.f32 %v2122, %v2188
      %v2221 = vadd.f32 %v2123, %v2189
      %v2222 = vadd.f32 %v2124, %v2190
      %v2223 = vadd.f32 %v2125, %v2191
      %v2224 = vadd.f32 %v2126, %v2192
      %v2225 = vadd.f32 %v2127, %v2193
      %v2226 = vadd.f32 %v2128, %v2194
      %v2227 = vadd.f32 %v2129, %v2195
      %v2228 = vadd.f32 %v2130, %v2196
      %v2229 = vadd.f32 %v2131, %v2197
      %v2230 = vadd.f32 %v2132, %v2198
      %v2231 = vadd.f32 %v2133, %v2199
      %v2232 = vadd.f32 %v2134, %v2200
      %v2233 = vadd.f32 %v2135, %v2201
      %v2234 = vadd.f32 %v2136, %v2202
      %v2235 = vadd.f32 %v2137, %v2203
      %v2236 = vadd.f32 %v2138, %v2204
      %v2237 = vadd.f32 %v2139, %v2205
      %v2238 = vadd.f32 %v2140, %v2206
      %v2239 = vadd.f32 %v2141, %v2207
      %v2240 = vadd.f32 %v2142, %v2208
      %v2241 = vadd.f32 %v2143, %v2209
      %v2242 = vadd.f32 %v2144, %v2210
      %v2243 = vadd.f32 %v2145, %v2211
      %v2244 = vadd.f32 %v2146, %v2212
      %v2245 = vadd.f32 %v2147, %v2213
      %v2246 = vadd.f32 %v2148, %v2214
      %s2247 = scalar_lea.vmem [#allocation2], 48
      %v2248 = vld [vmem:[%s2247] sm:$0xff]
      %v2249 = vld [vmem:[%s2247 + $0x8] sm:$0xff]
      %v2250 = vld [vmem:[%s2247 + $0x18] sm:$0xff]
      %v2251 = vld [vmem:[%s2247 + $0x20] sm:$0xff]
      %v2252 = vld [vmem:[%s2247 + $0x30] sm:$0xff]
      %v2253 = vld [vmem:[%s2247 + $0x38] sm:$0xff]
      %v2254 = vld [vmem:[%s2247 + $0x48] sm:$0xff]
      %v2255 = vld [vmem:[%s2247 + $0x50] sm:$0xff]
      %v2256 = vld [vmem:[%s2247 + $0x60] sm:$0xff]
      %v2257 = vld [vmem:[%s2247 + $0x68] sm:$0xff]
      %v2258 = vld [vmem:[%s2247 + $0x78] sm:$0xff]
      %v2259 = vld [vmem:[%s2247 + $0x80] sm:$0xff]
      %v2260 = vld [vmem:[%s2247 + $0x90] sm:$0xff]
      %v2261 = vld [vmem:[%s2247 + $0x98] sm:$0xff]
      %v2262 = vld [vmem:[%s2247 + $0xa8] sm:$0xff]
      %v2263 = vld [vmem:[%s2247 + $0xb0] sm:$0xff]
      %v2264 = vld [vmem:[%s2247 + $0xc0] sm:$0xff]
      %v2265 = vld [vmem:[%s2247 + $0xc8] sm:$0xff]
      %v2266 = vld [vmem:[%s2247 + $0xd8] sm:$0xff]
      %v2267 = vld [vmem:[%s2247 + $0xe0] sm:$0xff]
      %v2268 = vld [vmem:[%s2247 + $0xf0] sm:$0xff]
      %v2269 = vld [vmem:[%s2247 + $0xf8] sm:$0xff]
      %v2270 = vld [vmem:[%s2247 + $0x108] sm:$0xff]
      %v2271 = vld [vmem:[%s2247 + $0x110] sm:$0xff]
      %v2272 = vld [vmem:[%s2247 + $0x120] sm:$0xff]
      %v2273 = vld [vmem:[%s2247 + $0x128] sm:$0xff]
      %v2274 = vld [vmem:[%s2247 + $0x138] sm:$0xff]
      %v2275 = vld [vmem:[%s2247 + $0x140] sm:$0xff]
      %v2276 = vld [vmem:[%s2247 + $0x150] sm:$0xff]
      %v2277 = vld [vmem:[%s2247 + $0x158] sm:$0xff]
      %v2278 = vld [vmem:[%s2247 + $0x168] sm:$0xff]
      %v2279 = vld [vmem:[%s2247 + $0x170] sm:$0xff]
      %v2280 = vperm.slane %v2050, 6
      %v2281 = vmul.f32 %v2248, %v2280
      %v2282 = vmul.f32 %v2249, %v2280
      %v2283 = vmul.f32 %v2250, %v2280
      %v2284 = vmul.f32 %v2251, %v2280
      %v2285 = vmul.f32 %v2252, %v2280
      %v2286 = vmul.f32 %v2253, %v2280
      %v2287 = vmul.f32 %v2254, %v2280
      %v2288 = vmul.f32 %v2255, %v2280
      %v2289 = vmul.f32 %v2256, %v2280
      %v2290 = vmul.f32 %v2257, %v2280
      %v2291 = vmul.f32 %v2258, %v2280
      %v2292 = vmul.f32 %v2259, %v2280
      %v2293 = vmul.f32 %v2260, %v2280
      %v2294 = vmul.f32 %v2261, %v2280
      %v2295 = vmul.f32 %v2262, %v2280
      %v2296 = vmul.f32 %v2263, %v2280
      %v2297 = vmul.f32 %v2264, %v2280
      %v2298 = vmul.f32 %v2265, %v2280
      %v2299 = vmul.f32 %v2266, %v2280
      %v2300 = vmul.f32 %v2267, %v2280
      %v2301 = vmul.f32 %v2268, %v2280
      %v2302 = vmul.f32 %v2269, %v2280
      %v2303 = vmul.f32 %v2270, %v2280
      %v2304 = vmul.f32 %v2271, %v2280
      %v2305 = vmul.f32 %v2272, %v2280
      %v2306 = vmul.f32 %v2273, %v2280
      %v2307 = vmul.f32 %v2274, %v2280
      %v2308 = vmul.f32 %v2275, %v2280
      %v2309 = vmul.f32 %v2276, %v2280
      %v2310 = vmul.f32 %v2277, %v2280
      %v2311 = vmul.f32 %v2278, %v2280
      %v2312 = vmul.f32 %v2279, %v2280
      %v2313 = vadd.f32 %v2215, %v2281
      %v2314 = vadd.f32 %v2216, %v2282
      %v2315 = vadd.f32 %v2217, %v2283
      %v2316 = vadd.f32 %v2218, %v2284
      %v2317 = vadd.f32 %v2219, %v2285
      %v2318 = vadd.f32 %v2220, %v2286
      %v2319 = vadd.f32 %v2221, %v2287
      %v2320 = vadd.f32 %v2222, %v2288
      %v2321 = vadd.f32 %v2223, %v2289
      %v2322 = vadd.f32 %v2224, %v2290
      %v2323 = vadd.f32 %v2225, %v2291
      %v2324 = vadd.f32 %v2226, %v2292
      %v2325 = vadd.f32 %v2227, %v2293
      %v2326 = vadd.f32 %v2228, %v2294
      %v2327 = vadd.f32 %v2229, %v2295
      %v2328 = vadd.f32 %v2230, %v2296
      %v2329 = vadd.f32 %v2231, %v2297
      %v2330 = vadd.f32 %v2232, %v2298
      %v2331 = vadd.f32 %v2233, %v2299
      %v2332 = vadd.f32 %v2234, %v2300
      %v2333 = vadd.f32 %v2235, %v2301
      %v2334 = vadd.f32 %v2236, %v2302
      %v2335 = vadd.f32 %v2237, %v2303
      %v2336 = vadd.f32 %v2238, %v2304
      %v2337 = vadd.f32 %v2239, %v2305
      %v2338 = vadd.f32 %v2240, %v2306
      %v2339 = vadd.f32 %v2241, %v2307
      %v2340 = vadd.f32 %v2242, %v2308
      %v2341 = vadd.f32 %v2243, %v2309
      %v2342 = vadd.f32 %v2244, %v2310
      %v2343 = vadd.f32 %v2245, %v2311
      %v2344 = vadd.f32 %v2246, %v2312
      %v2345 = vld [vmem:[#allocation2 + $0x1] sm:$0xff]
      %v2346 = vld [vmem:[#allocation2 + $0x9] sm:$0xff]
      %v2347 = vld [vmem:[#allocation2 + $0x19] sm:$0xff]
      %v2348 = vld [vmem:[#allocation2 + $0x21] sm:$0xff]
      %v2349 = vld [vmem:[#allocation2 + $0x31] sm:$0xff]
      %v2350 = vld [vmem:[#allocation2 + $0x39] sm:$0xff]
      %v2351 = vld [vmem:[#allocation2 + $0x49] sm:$0xff]
      %v2352 = vld [vmem:[#allocation2 + $0x51] sm:$0xff]
      %v2353 = vld [vmem:[#allocation2 + $0x61] sm:$0xff]
      %v2354 = vld [vmem:[#allocation2 + $0x69] sm:$0xff]
      %v2355 = vld [vmem:[#allocation2 + $0x79] sm:$0xff]
      %v2356 = vld [vmem:[#allocation2 + $0x81] sm:$0xff]
      %v2357 = vld [vmem:[#allocation2 + $0x91] sm:$0xff]
      %v2358 = vld [vmem:[#allocation2 + $0x99] sm:$0xff]
      %v2359 = vld [vmem:[#allocation2 + $0xa9] sm:$0xff]
      %v2360 = vld [vmem:[#allocation2 + $0xb1] sm:$0xff]
      %v2361 = vld [vmem:[#allocation2 + $0xc1] sm:$0xff]
      %v2362 = vld [vmem:[#allocation2 + $0xc9] sm:$0xff]
      %v2363 = vld [vmem:[#allocation2 + $0xd9] sm:$0xff]
      %v2364 = vld [vmem:[#allocation2 + $0xe1] sm:$0xff]
      %v2365 = vld [vmem:[#allocation2 + $0xf1] sm:$0xff]
      %v2366 = vld [vmem:[#allocation2 + $0xf9] sm:$0xff]
      %v2367 = vld [vmem:[#allocation2 + $0x109] sm:$0xff]
      %v2368 = vld [vmem:[#allocation2 + $0x111] sm:$0xff]
      %v2369 = vld [vmem:[#allocation2 + $0x121] sm:$0xff]
      %v2370 = vld [vmem:[#allocation2 + $0x129] sm:$0xff]
      %v2371 = vld [vmem:[#allocation2 + $0x139] sm:$0xff]
      %v2372 = vld [vmem:[#allocation2 + $0x141] sm:$0xff]
      %v2373 = vld [vmem:[#allocation2 + $0x151] sm:$0xff]
      %v2374 = vld [vmem:[#allocation2 + $0x159] sm:$0xff]
      %v2375 = vld [vmem:[#allocation2 + $0x169] sm:$0xff]
      %v2376 = vld [vmem:[#allocation2 + $0x171] sm:$0xff]
      %v2377 = vperm.slane %v2050, 1
      %v2378 = vmul.f32 %v2345, %v2377
      %v2379 = vmul.f32 %v2346, %v2377
      %v2380 = vmul.f32 %v2347, %v2377
      %v2381 = vmul.f32 %v2348, %v2377
      %v2382 = vmul.f32 %v2349, %v2377
      %v2383 = vmul.f32 %v2350, %v2377
      %v2384 = vmul.f32 %v2351, %v2377
      %v2385 = vmul.f32 %v2352, %v2377
      %v2386 = vmul.f32 %v2353, %v2377
      %v2387 = vmul.f32 %v2354, %v2377
      %v2388 = vmul.f32 %v2355, %v2377
      %v2389 = vmul.f32 %v2356, %v2377
      %v2390 = vmul.f32 %v2357, %v2377
      %v2391 = vmul.f32 %v2358, %v2377
      %v2392 = vmul.f32 %v2359, %v2377
      %v2393 = vmul.f32 %v2360, %v2377
      %v2394 = vmul.f32 %v2361, %v2377
      %v2395 = vmul.f32 %v2362, %v2377
      %v2396 = vmul.f32 %v2363, %v2377
      %v2397 = vmul.f32 %v2364, %v2377
      %v2398 = vmul.f32 %v2365, %v2377
      %v2399 = vmul.f32 %v2366, %v2377
      %v2400 = vmul.f32 %v2367, %v2377
      %v2401 = vmul.f32 %v2368, %v2377
      %v2402 = vmul.f32 %v2369, %v2377
      %v2403 = vmul.f32 %v2370, %v2377
      %v2404 = vmul.f32 %v2371, %v2377
      %v2405 = vmul.f32 %v2372, %v2377
      %v2406 = vmul.f32 %v2373, %v2377
      %v2407 = vmul.f32 %v2374, %v2377
      %v2408 = vmul.f32 %v2375, %v2377
      %v2409 = vmul.f32 %v2376, %v2377
      %v2410 = vadd.f32 %v2313, %v2378
      %v2411 = vadd.f32 %v2314, %v2379
      %v2412 = vadd.f32 %v2315, %v2380
      %v2413 = vadd.f32 %v2316, %v2381
      %v2414 = vadd.f32 %v2317, %v2382
      %v2415 = vadd.f32 %v2318, %v2383
      %v2416 = vadd.f32 %v2319, %v2384
      %v2417 = vadd.f32 %v2320, %v2385
      %v2418 = vadd.f32 %v2321, %v2386
      %v2419 = vadd.f32 %v2322, %v2387
      %v2420 = vadd.f32 %v2323, %v2388
      %v2421 = vadd.f32 %v2324, %v2389
      %v2422 = vadd.f32 %v2325, %v2390
      %v2423 = vadd.f32 %v2326, %v2391
      %v2424 = vadd.f32 %v2327, %v2392
      %v2425 = vadd.f32 %v2328, %v2393
      %v2426 = vadd.f32 %v2329, %v2394
      %v2427 = vadd.f32 %v2330, %v2395
      %v2428 = vadd.f32 %v2331, %v2396
      %v2429 = vadd.f32 %v2332, %v2397
      %v2430 = vadd.f32 %v2333, %v2398
      %v2431 = vadd.f32 %v2334, %v2399
      %v2432 = vadd.f32 %v2335, %v2400
      %v2433 = vadd.f32 %v2336, %v2401
      %v2434 = vadd.f32 %v2337, %v2402
      %v2435 = vadd.f32 %v2338, %v2403
      %v2436 = vadd.f32 %v2339, %v2404
      %v2437 = vadd.f32 %v2340, %v2405
      %v2438 = vadd.f32 %v2341, %v2406
      %v2439 = vadd.f32 %v2342, %v2407
      %v2440 = vadd.f32 %v2343, %v2408
      %v2441 = vadd.f32 %v2344, %v2409
      %v2442 = vld [vmem:[%s2149 + $0x1] sm:$0xff]
      %v2443 = vld [vmem:[%s2149 + $0x9] sm:$0xff]
      %v2444 = vld [vmem:[%s2149 + $0x19] sm:$0xff]
      %v2445 = vld [vmem:[%s2149 + $0x21] sm:$0xff]
      %v2446 = vld [vmem:[%s2149 + $0x31] sm:$0xff]
      %v2447 = vld [vmem:[%s2149 + $0x39] sm:$0xff]
      %v2448 = vld [vmem:[%s2149 + $0x49] sm:$0xff]
      %v2449 = vld [vmem:[%s2149 + $0x51] sm:$0xff]
      %v2450 = vld [vmem:[%s2149 + $0x61] sm:$0xff]
      %v2451 = vld [vmem:[%s2149 + $0x69] sm:$0xff]
      %v2452 = vld [vmem:[%s2149 + $0x79] sm:$0xff]
      %v2453 = vld [vmem:[%s2149 + $0x81] sm:$0xff]
      %v2454 = vld [vmem:[%s2149 + $0x91] sm:$0xff]
      %v2455 = vld [vmem:[%s2149 + $0x99] sm:$0xff]
      %v2456 = vld [vmem:[%s2149 + $0xa9] sm:$0xff]
      %v2457 = vld [vmem:[%s2149 + $0xb1] sm:$0xff]
      %v2458 = vld [vmem:[%s2149 + $0xc1] sm:$0xff]
      %v2459 = vld [vmem:[%s2149 + $0xc9] sm:$0xff]
      %v2460 = vld [vmem:[%s2149 + $0xd9] sm:$0xff]
      %v2461 = vld [vmem:[%s2149 + $0xe1] sm:$0xff]
      %v2462 = vld [vmem:[%s2149 + $0xf1] sm:$0xff]
      %v2463 = vld [vmem:[%s2149 + $0xf9] sm:$0xff]
      %v2464 = vld [vmem:[%s2149 + $0x109] sm:$0xff]
      %v2465 = vld [vmem:[%s2149 + $0x111] sm:$0xff]
      %v2466 = vld [vmem:[%s2149 + $0x121] sm:$0xff]
      %v2467 = vld [vmem:[%s2149 + $0x129] sm:$0xff]
      %v2468 = vld [vmem:[%s2149 + $0x139] sm:$0xff]
      %v2469 = vld [vmem:[%s2149 + $0x141] sm:$0xff]
      %v2470 = vld [vmem:[%s2149 + $0x151] sm:$0xff]
      %v2471 = vld [vmem:[%s2149 + $0x159] sm:$0xff]
      %v2472 = vld [vmem:[%s2149 + $0x169] sm:$0xff]
      %v2473 = vld [vmem:[%s2149 + $0x171] sm:$0xff]
      %v2474 = vperm.slane %v2050, 4
      %v2475 = vmul.f32 %v2442, %v2474
      %v2476 = vmul.f32 %v2443, %v2474
      %v2477 = vmul.f32 %v2444, %v2474
      %v2478 = vmul.f32 %v2445, %v2474
      %v2479 = vmul.f32 %v2446, %v2474
      %v2480 = vmul.f32 %v2447, %v2474
      %v2481 = vmul.f32 %v2448, %v2474
      %v2482 = vmul.f32 %v2449, %v2474
      %v2483 = vmul.f32 %v2450, %v2474
      %v2484 = vmul.f32 %v2451, %v2474
      %v2485 = vmul.f32 %v2452, %v2474
      %v2486 = vmul.f32 %v2453, %v2474
      %v2487 = vmul.f32 %v2454, %v2474
      %v2488 = vmul.f32 %v2455, %v2474
      %v2489 = vmul.f32 %v2456, %v2474
      %v2490 = vmul.f32 %v2457, %v2474
      %v2491 = vmul.f32 %v2458, %v2474
      %v2492 = vmul.f32 %v2459, %v2474
      %v2493 = vmul.f32 %v2460, %v2474
      %v2494 = vmul.f32 %v2461, %v2474
      %v2495 = vmul.f32 %v2462, %v2474
      %v2496 = vmul.f32 %v2463, %v2474
      %v2497 = vmul.f32 %v2464, %v2474
      %v2498 = vmul.f32 %v2465, %v2474
      %v2499 = vmul.f32 %v2466, %v2474
      %v2500 = vmul.f32 %v2467, %v2474
      %v2501 = vmul.f32 %v2468, %v2474
      %v2502 = vmul.f32 %v2469, %v2474
      %v2503 = vmul.f32 %v2470, %v2474
      %v2504 = vmul.f32 %v2471, %v2474
      %v2505 = vmul.f32 %v2472, %v2474
      %v2506 = vmul.f32 %v2473, %v2474
      %v2507 = vadd.f32 %v2410, %v2475
      %v2508 = vadd.f32 %v2411, %v2476
      %v2509 = vadd.f32 %v2412, %v2477
      %v2510 = vadd.f32 %v2413, %v2478
      %v2511 = vadd.f32 %v2414, %v2479
      %v2512 = vadd.f32 %v2415, %v2480
      %v2513 = vadd.f32 %v2416, %v2481
      %v2514 = vadd.f32 %v2417, %v2482
      %v2515 = vadd.f32 %v2418, %v2483
      %v2516 = vadd.f32 %v2419, %v2484
      %v2517 = vadd.f32 %v2420, %v2485
      %v2518 = vadd.f32 %v2421, %v2486
      %v2519 = vadd.f32 %v2422, %v2487
      %v2520 = vadd.f32 %v2423, %v2488
      %v2521 = vadd.f32 %v2424, %v2489
      %v2522 = vadd.f32 %v2425, %v2490
      %v2523 = vadd.f32 %v2426, %v2491
      %v2524 = vadd.f32 %v2427, %v2492
      %v2525 = vadd.f32 %v2428, %v2493
      %v2526 = vadd.f32 %v2429, %v2494
      %v2527 = vadd.f32 %v2430, %v2495
      %v2528 = vadd.f32 %v2431, %v2496
      %v2529 = vadd.f32 %v2432, %v2497
      %v2530 = vadd.f32 %v2433, %v2498
      %v2531 = vadd.f32 %v2434, %v2499
      %v2532 = vadd.f32 %v2435, %v2500
      %v2533 = vadd.f32 %v2436, %v2501
      %v2534 = vadd.f32 %v2437, %v2502
      %v2535 = vadd.f32 %v2438, %v2503
      %v2536 = vadd.f32 %v2439, %v2504
      %v2537 = vadd.f32 %v2440, %v2505
      %v2538 = vadd.f32 %v2441, %v2506
      %v2539 = vld [vmem:[%s2247 + $0x1] sm:$0xff]
      %v2540 = vld [vmem:[%s2247 + $0x9] sm:$0xff]
      %v2541 = vld [vmem:[%s2247 + $0x19] sm:$0xff]
      %v2542 = vld [vmem:[%s2247 + $0x21] sm:$0xff]
      %v2543 = vld [vmem:[%s2247 + $0x31] sm:$0xff]
      %v2544 = vld [vmem:[%s2247 + $0x39] sm:$0xff]
      %v2545 = vld [vmem:[%s2247 + $0x49] sm:$0xff]
      %v2546 = vld [vmem:[%s2247 + $0x51] sm:$0xff]
      %v2547 = vld [vmem:[%s2247 + $0x61] sm:$0xff]
      %v2548 = vld [vmem:[%s2247 + $0x69] sm:$0xff]
      %v2549 = vld [vmem:[%s2247 + $0x79] sm:$0xff]
      %v2550 = vld [vmem:[%s2247 + $0x81] sm:$0xff]
      %v2551 = vld [vmem:[%s2247 + $0x91] sm:$0xff]
      %v2552 = vld [vmem:[%s2247 + $0x99] sm:$0xff]
      %v2553 = vld [vmem:[%s2247 + $0xa9] sm:$0xff]
      %v2554 = vld [vmem:[%s2247 + $0xb1] sm:$0xff]
      %v2555 = vld [vmem:[%s2247 + $0xc1] sm:$0xff]
      %v2556 = vld [vmem:[%s2247 + $0xc9] sm:$0xff]
      %v2557 = vld [vmem:[%s2247 + $0xd9] sm:$0xff]
      %v2558 = vld [vmem:[%s2247 + $0xe1] sm:$0xff]
      %v2559 = vld [vmem:[%s2247 + $0xf1] sm:$0xff]
      %v2560 = vld [vmem:[%s2247 + $0xf9] sm:$0xff]
      %v2561 = vld [vmem:[%s2247 + $0x109] sm:$0xff]
      %v2562 = vld [vmem:[%s2247 + $0x111] sm:$0xff]
      %v2563 = vld [vmem:[%s2247 + $0x121] sm:$0xff]
      %v2564 = vld [vmem:[%s2247 + $0x129] sm:$0xff]
      %v2565 = vld [vmem:[%s2247 + $0x139] sm:$0xff]
      %v2566 = vld [vmem:[%s2247 + $0x141] sm:$0xff]
      %v2567 = vld [vmem:[%s2247 + $0x151] sm:$0xff]
      %v2568 = vld [vmem:[%s2247 + $0x159] sm:$0xff]
      %v2569 = vld [vmem:[%s2247 + $0x169] sm:$0xff]
      %v2570 = vld [vmem:[%s2247 + $0x171] sm:$0xff]
      %v2571 = vperm.slane %v2050, 7
      %v2572 = vmul.f32 %v2539, %v2571
      %v2573 = vmul.f32 %v2540, %v2571
      %v2574 = vmul.f32 %v2541, %v2571
      %v2575 = vmul.f32 %v2542, %v2571
      %v2576 = vmul.f32 %v2543, %v2571
      %v2577 = vmul.f32 %v2544, %v2571
      %v2578 = vmul.f32 %v2545, %v2571
      %v2579 = vmul.f32 %v2546, %v2571
      %v2580 = vmul.f32 %v2547, %v2571
      %v2581 = vmul.f32 %v2548, %v2571
      %v2582 = vmul.f32 %v2549, %v2571
      %v2583 = vmul.f32 %v2550, %v2571
      %v2584 = vmul.f32 %v2551, %v2571
      %v2585 = vmul.f32 %v2552, %v2571
      %v2586 = vmul.f32 %v2553, %v2571
      %v2587 = vmul.f32 %v2554, %v2571
      %v2588 = vmul.f32 %v2555, %v2571
      %v2589 = vmul.f32 %v2556, %v2571
      %v2590 = vmul.f32 %v2557, %v2571
      %v2591 = vmul.f32 %v2558, %v2571
      %v2592 = vmul.f32 %v2559, %v2571
      %v2593 = vmul.f32 %v2560, %v2571
      %v2594 = vmul.f32 %v2561, %v2571
      %v2595 = vmul.f32 %v2562, %v2571
      %v2596 = vmul.f32 %v2563, %v2571
      %v2597 = vmul.f32 %v2564, %v2571
      %v2598 = vmul.f32 %v2565, %v2571
      %v2599 = vmul.f32 %v2566, %v2571
      %v2600 = vmul.f32 %v2567, %v2571
      %v2601 = vmul.f32 %v2568, %v2571
      %v2602 = vmul.f32 %v2569, %v2571
      %v2603 = vmul.f32 %v2570, %v2571
      %v2604 = vadd.f32 %v2507, %v2572
      %v2605 = vadd.f32 %v2508, %v2573
      %v2606 = vadd.f32 %v2509, %v2574
      %v2607 = vadd.f32 %v2510, %v2575
      %v2608 = vadd.f32 %v2511, %v2576
      %v2609 = vadd.f32 %v2512, %v2577
      %v2610 = vadd.f32 %v2513, %v2578
      %v2611 = vadd.f32 %v2514, %v2579
      %v2612 = vadd.f32 %v2515, %v2580
      %v2613 = vadd.f32 %v2516, %v2581
      %v2614 = vadd.f32 %v2517, %v2582
      %v2615 = vadd.f32 %v2518, %v2583
      %v2616 = vadd.f32 %v2519, %v2584
      %v2617 = vadd.f32 %v2520, %v2585
      %v2618 = vadd.f32 %v2521, %v2586
      %v2619 = vadd.f32 %v2522, %v2587
      %v2620 = vadd.f32 %v2523, %v2588
      %v2621 = vadd.f32 %v2524, %v2589
      %v2622 = vadd.f32 %v2525, %v2590
      %v2623 = vadd.f32 %v2526, %v2591
      %v2624 = vadd.f32 %v2527, %v2592
      %v2625 = vadd.f32 %v2528, %v2593
      %v2626 = vadd.f32 %v2529, %v2594
      %v2627 = vadd.f32 %v2530, %v2595
      %v2628 = vadd.f32 %v2531, %v2596
      %v2629 = vadd.f32 %v2532, %v2597
      %v2630 = vadd.f32 %v2533, %v2598
      %v2631 = vadd.f32 %v2534, %v2599
      %v2632 = vadd.f32 %v2535, %v2600
      %v2633 = vadd.f32 %v2536, %v2601
      %v2634 = vadd.f32 %v2537, %v2602
      %v2635 = vadd.f32 %v2538, %v2603
      %v2636 = vld [vmem:[#allocation2 + $0x2] sm:$0xff]
      %v2637 = vld [vmem:[#allocation2 + $0xa] sm:$0xff]
      %v2638 = vld [vmem:[#allocation2 + $0x1a] sm:$0xff]
      %v2639 = vld [vmem:[#allocation2 + $0x22] sm:$0xff]
      %v2640 = vld [vmem:[#allocation2 + $0x32] sm:$0xff]
      %v2641 = vld [vmem:[#allocation2 + $0x3a] sm:$0xff]
      %v2642 = vld [vmem:[#allocation2 + $0x4a] sm:$0xff]
      %v2643 = vld [vmem:[#allocation2 + $0x52] sm:$0xff]
      %v2644 = vld [vmem:[#allocation2 + $0x62] sm:$0xff]
      %v2645 = vld [vmem:[#allocation2 + $0x6a] sm:$0xff]
      %v2646 = vld [vmem:[#allocation2 + $0x7a] sm:$0xff]
      %v2647 = vld [vmem:[#allocation2 + $0x82] sm:$0xff]
      %v2648 = vld [vmem:[#allocation2 + $0x92] sm:$0xff]
      %v2649 = vld [vmem:[#allocation2 + $0x9a] sm:$0xff]
      %v2650 = vld [vmem:[#allocation2 + $0xaa] sm:$0xff]
      %v2651 = vld [vmem:[#allocation2 + $0xb2] sm:$0xff]
      %v2652 = vld [vmem:[#allocation2 + $0xc2] sm:$0xff]
      %v2653 = vld [vmem:[#allocation2 + $0xca] sm:$0xff]
      %v2654 = vld [vmem:[#allocation2 + $0xda] sm:$0xff]
      %v2655 = vld [vmem:[#allocation2 + $0xe2] sm:$0xff]
      %v2656 = vld [vmem:[#allocation2 + $0xf2] sm:$0xff]
      %v2657 = vld [vmem:[#allocation2 + $0xfa] sm:$0xff]
      %v2658 = vld [vmem:[#allocation2 + $0x10a] sm:$0xff]
      %v2659 = vld [vmem:[#allocation2 + $0x112] sm:$0xff]
      %v2660 = vld [vmem:[#allocation2 + $0x122] sm:$0xff]
      %v2661 = vld [vmem:[#allocation2 + $0x12a] sm:$0xff]
      %v2662 = vld [vmem:[#allocation2 + $0x13a] sm:$0xff]
      %v2663 = vld [vmem:[#allocation2 + $0x142] sm:$0xff]
      %v2664 = vld [vmem:[#allocation2 + $0x152] sm:$0xff]
      %v2665 = vld [vmem:[#allocation2 + $0x15a] sm:$0xff]
      %v2666 = vld [vmem:[#allocation2 + $0x16a] sm:$0xff]
      %v2667 = vld [vmem:[#allocation2 + $0x172] sm:$0xff]
      %v2668 = vperm.slane %v2050, 2
      %v2669 = vmul.f32 %v2636, %v2668
      %v2670 = vmul.f32 %v2637, %v2668
      %v2671 = vmul.f32 %v2638, %v2668
      %v2672 = vmul.f32 %v2639, %v2668
      %v2673 = vmul.f32 %v2640, %v2668
      %v2674 = vmul.f32 %v2641, %v2668
      %v2675 = vmul.f32 %v2642, %v2668
      %v2676 = vmul.f32 %v2643, %v2668
      %v2677 = vmul.f32 %v2644, %v2668
      %v2678 = vmul.f32 %v2645, %v2668
      %v2679 = vmul.f32 %v2646, %v2668
      %v2680 = vmul.f32 %v2647, %v2668
      %v2681 = vmul.f32 %v2648, %v2668
      %v2682 = vmul.f32 %v2649, %v2668
      %v2683 = vmul.f32 %v2650, %v2668
      %v2684 = vmul.f32 %v2651, %v2668
      %v2685 = vmul.f32 %v2652, %v2668
      %v2686 = vmul.f32 %v2653, %v2668
      %v2687 = vmul.f32 %v2654, %v2668
      %v2688 = vmul.f32 %v2655, %v2668
      %v2689 = vmul.f32 %v2656, %v2668
      %v2690 = vmul.f32 %v2657, %v2668
      %v2691 = vmul.f32 %v2658, %v2668
      %v2692 = vmul.f32 %v2659, %v2668
      %v2693 = vmul.f32 %v2660, %v2668
      %v2694 = vmul.f32 %v2661, %v2668
      %v2695 = vmul.f32 %v2662, %v2668
      %v2696 = vmul.f32 %v2663, %v2668
      %v2697 = vmul.f32 %v2664, %v2668
      %v2698 = vmul.f32 %v2665, %v2668
      %v2699 = vmul.f32 %v2666, %v2668
      %v2700 = vmul.f32 %v2667, %v2668
      %v2701 = vadd.f32 %v2604, %v2669
      %v2702 = vadd.f32 %v2605, %v2670
      %v2703 = vadd.f32 %v2606, %v2671
      %v2704 = vadd.f32 %v2607, %v2672
      %v2705 = vadd.f32 %v2608, %v2673
      %v2706 = vadd.f32 %v2609, %v2674
      %v2707 = vadd.f32 %v2610, %v2675
      %v2708 = vadd.f32 %v2611, %v2676
      %v2709 = vadd.f32 %v2612, %v2677
      %v2710 = vadd.f32 %v2613, %v2678
      %v2711 = vadd.f32 %v2614, %v2679
      %v2712 = vadd.f32 %v2615, %v2680
      %v2713 = vadd.f32 %v2616, %v2681
      %v2714 = vadd.f32 %v2617, %v2682
      %v2715 = vadd.f32 %v2618, %v2683
      %v2716 = vadd.f32 %v2619, %v2684
      %v2717 = vadd.f32 %v2620, %v2685
      %v2718 = vadd.f32 %v2621, %v2686
      %v2719 = vadd.f32 %v2622, %v2687
      %v2720 = vadd.f32 %v2623, %v2688
      %v2721 = vadd.f32 %v2624, %v2689
      %v2722 = vadd.f32 %v2625, %v2690
      %v2723 = vadd.f32 %v2626, %v2691
      %v2724 = vadd.f32 %v2627, %v2692
      %v2725 = vadd.f32 %v2628, %v2693
      %v2726 = vadd.f32 %v2629, %v2694
      %v2727 = vadd.f32 %v2630, %v2695
      %v2728 = vadd.f32 %v2631, %v2696
      %v2729 = vadd.f32 %v2632, %v2697
      %v2730 = vadd.f32 %v2633, %v2698
      %v2731 = vadd.f32 %v2634, %v2699
      %v2732 = vadd.f32 %v2635, %v2700
      %v2733 = vld [vmem:[%s2149 + $0x2] sm:$0xff]
      %v2734 = vld [vmem:[%s2149 + $0xa] sm:$0xff]
      %v2735 = vld [vmem:[%s2149 + $0x1a] sm:$0xff]
      %v2736 = vld [vmem:[%s2149 + $0x22] sm:$0xff]
      %v2737 = vld [vmem:[%s2149 + $0x32] sm:$0xff]
      %v2738 = vld [vmem:[%s2149 + $0x3a] sm:$0xff]
      %v2739 = vld [vmem:[%s2149 + $0x4a] sm:$0xff]
      %v2740 = vld [vmem:[%s2149 + $0x52] sm:$0xff]
      %v2741 = vld [vmem:[%s2149 + $0x62] sm:$0xff]
      %v2742 = vld [vmem:[%s2149 + $0x6a] sm:$0xff]
      %v2743 = vld [vmem:[%s2149 + $0x7a] sm:$0xff]
      %v2744 = vld [vmem:[%s2149 + $0x82] sm:$0xff]
      %v2745 = vld [vmem:[%s2149 + $0x92] sm:$0xff]
      %v2746 = vld [vmem:[%s2149 + $0x9a] sm:$0xff]
      %v2747 = vld [vmem:[%s2149 + $0xaa] sm:$0xff]
      %v2748 = vld [vmem:[%s2149 + $0xb2] sm:$0xff]
      %v2749 = vld [vmem:[%s2149 + $0xc2] sm:$0xff]
      %v2750 = vld [vmem:[%s2149 + $0xca] sm:$0xff]
      %v2751 = vld [vmem:[%s2149 + $0xda] sm:$0xff]
      %v2752 = vld [vmem:[%s2149 + $0xe2] sm:$0xff]
      %v2753 = vld [vmem:[%s2149 + $0xf2] sm:$0xff]
      %v2754 = vld [vmem:[%s2149 + $0xfa] sm:$0xff]
      %v2755 = vld [vmem:[%s2149 + $0x10a] sm:$0xff]
      %v2756 = vld [vmem:[%s2149 + $0x112] sm:$0xff]
      %v2757 = vld [vmem:[%s2149 + $0x122] sm:$0xff]
      %v2758 = vld [vmem:[%s2149 + $0x12a] sm:$0xff]
      %v2759 = vld [vmem:[%s2149 + $0x13a] sm:$0xff]
      %v2760 = vld [vmem:[%s2149 + $0x142] sm:$0xff]
      %v2761 = vld [vmem:[%s2149 + $0x152] sm:$0xff]
      %v2762 = vld [vmem:[%s2149 + $0x15a] sm:$0xff]
      %v2763 = vld [vmem:[%s2149 + $0x16a] sm:$0xff]
      %v2764 = vld [vmem:[%s2149 + $0x172] sm:$0xff]
      %v2765 = vperm.slane %v2050, 5
      %v2766 = vmul.f32 %v2733, %v2765
      %v2767 = vmul.f32 %v2734, %v2765
      %v2768 = vmul.f32 %v2735, %v2765
      %v2769 = vmul.f32 %v2736, %v2765
      %v2770 = vmul.f32 %v2737, %v2765
      %v2771 = vmul.f32 %v2738, %v2765
      %v2772 = vmul.f32 %v2739, %v2765
      %v2773 = vmul.f32 %v2740, %v2765
      %v2774 = vmul.f32 %v2741, %v2765
      %v2775 = vmul.f32 %v2742, %v2765
      %v2776 = vmul.f32 %v2743, %v2765
      %v2777 = vmul.f32 %v2744, %v2765
      %v2778 = vmul.f32 %v2745, %v2765
      %v2779 = vmul.f32 %v2746, %v2765
      %v2780 = vmul.f32 %v2747, %v2765
      %v2781 = vmul.f32 %v2748, %v2765
      %v2782 = vmul.f32 %v2749, %v2765
      %v2783 = vmul.f32 %v2750, %v2765
      %v2784 = vmul.f32 %v2751, %v2765
      %v2785 = vmul.f32 %v2752, %v2765
      %v2786 = vmul.f32 %v2753, %v2765
      %v2787 = vmul.f32 %v2754, %v2765
      %v2788 = vmul.f32 %v2755, %v2765
      %v2789 = vmul.f32 %v2756, %v2765
      %v2790 = vmul.f32 %v2757, %v2765
      %v2791 = vmul.f32 %v2758, %v2765
      %v2792 = vmul.f32 %v2759, %v2765
      %v2793 = vmul.f32 %v2760, %v2765
      %v2794 = vmul.f32 %v2761, %v2765
      %v2795 = vmul.f32 %v2762, %v2765
      %v2796 = vmul.f32 %v2763, %v2765
      %v2797 = vmul.f32 %v2764, %v2765
      %v2798 = vadd.f32 %v2701, %v2766
      %v2799 = vadd.f32 %v2702, %v2767
      %v2800 = vadd.f32 %v2703, %v2768
      %v2801 = vadd.f32 %v2704, %v2769
      %v2802 = vadd.f32 %v2705, %v2770
      %v2803 = vadd.f32 %v2706, %v2771
      %v2804 = vadd.f32 %v2707, %v2772
      %v2805 = vadd.f32 %v2708, %v2773
      %v2806 = vadd.f32 %v2709, %v2774
      %v2807 = vadd.f32 %v2710, %v2775
      %v2808 = vadd.f32 %v2711, %v2776
      %v2809 = vadd.f32 %v2712, %v2777
      %v2810 = vadd.f32 %v2713, %v2778
      %v2811 = vadd.f32 %v2714, %v2779
      %v2812 = vadd.f32 %v2715, %v2780
      %v2813 = vadd.f32 %v2716, %v2781
      %v2814 = vadd.f32 %v2717, %v2782
      %v2815 = vadd.f32 %v2718, %v2783
      %v2816 = vadd.f32 %v2719, %v2784
      %v2817 = vadd.f32 %v2720, %v2785
      %v2818 = vadd.f32 %v2721, %v2786
      %v2819 = vadd.f32 %v2722, %v2787
      %v2820 = vadd.f32 %v2723, %v2788
      %v2821 = vadd.f32 %v2724, %v2789
      %v2822 = vadd.f32 %v2725, %v2790
      %v2823 = vadd.f32 %v2726, %v2791
      %v2824 = vadd.f32 %v2727, %v2792
      %v2825 = vadd.f32 %v2728, %v2793
      %v2826 = vadd.f32 %v2729, %v2794
      %v2827 = vadd.f32 %v2730, %v2795
      %v2828 = vadd.f32 %v2731, %v2796
      %v2829 = vadd.f32 %v2732, %v2797
      %v2830 = vld [vmem:[%s2247 + $0x2] sm:$0xff]
      %v2831 = vld [vmem:[%s2247 + $0xa] sm:$0xff]
      %v2832 = vld [vmem:[%s2247 + $0x1a] sm:$0xff]
      %v2833 = vld [vmem:[%s2247 + $0x22] sm:$0xff]
      %v2834 = vld [vmem:[%s2247 + $0x32] sm:$0xff]
      %v2835 = vld [vmem:[%s2247 + $0x3a] sm:$0xff]
      %v2836 = vld [vmem:[%s2247 + $0x4a] sm:$0xff]
      %v2837 = vld [vmem:[%s2247 + $0x52] sm:$0xff]
      %v2838 = vld [vmem:[%s2247 + $0x62] sm:$0xff]
      %v2839 = vld [vmem:[%s2247 + $0x6a] sm:$0xff]
      %v2840 = vld [vmem:[%s2247 + $0x7a] sm:$0xff]
      %v2841 = vld [vmem:[%s2247 + $0x82] sm:$0xff]
      %v2842 = vld [vmem:[%s2247 + $0x92] sm:$0xff]
      %v2843 = vld [vmem:[%s2247 + $0x9a] sm:$0xff]
      %v2844 = vld [vmem:[%s2247 + $0xaa] sm:$0xff]
      %v2845 = vld [vmem:[%s2247 + $0xb2] sm:$0xff]
      %v2846 = vld [vmem:[%s2247 + $0xc2] sm:$0xff]
      %v2847 = vld [vmem:[%s2247 + $0xca] sm:$0xff]
      %v2848 = vld [vmem:[%s2247 + $0xda] sm:$0xff]
      %v2849 = vld [vmem:[%s2247 + $0xe2] sm:$0xff]
      %v2850 = vld [vmem:[%s2247 + $0xf2] sm:$0xff]
      %v2851 = vld [vmem:[%s2247 + $0xfa] sm:$0xff]
      %v2852 = vld [vmem:[%s2247 + $0x10a] sm:$0xff]
      %v2853 = vld [vmem:[%s2247 + $0x112] sm:$0xff]
      %v2854 = vld [vmem:[%s2247 + $0x122] sm:$0xff]
      %v2855 = vld [vmem:[%s2247 + $0x12a] sm:$0xff]
      %v2856 = vld [vmem:[%s2247 + $0x13a] sm:$0xff]
      %v2857 = vld [vmem:[%s2247 + $0x142] sm:$0xff]
      %v2858 = vld [vmem:[%s2247 + $0x152] sm:$0xff]
      %v2859 = vld [vmem:[%s2247 + $0x15a] sm:$0xff]
      %v2860 = vld [vmem:[%s2247 + $0x16a] sm:$0xff]
      %v2861 = vld [vmem:[%s2247 + $0x172] sm:$0xff]
      %v2862 = vperm.slane %v2051, 0
      %v2863 = vmul.f32 %v2830, %v2862
      %v2864 = vmul.f32 %v2831, %v2862
      %v2865 = vmul.f32 %v2832, %v2862
      %v2866 = vmul.f32 %v2833, %v2862
      %v2867 = vmul.f32 %v2834, %v2862
      %v2868 = vmul.f32 %v2835, %v2862
      %v2869 = vmul.f32 %v2836, %v2862
      %v2870 = vmul.f32 %v2837, %v2862
      %v2871 = vmul.f32 %v2838, %v2862
      %v2872 = vmul.f32 %v2839, %v2862
      %v2873 = vmul.f32 %v2840, %v2862
      %v2874 = vmul.f32 %v2841, %v2862
      %v2875 = vmul.f32 %v2842, %v2862
      %v2876 = vmul.f32 %v2843, %v2862
      %v2877 = vmul.f32 %v2844, %v2862
      %v2878 = vmul.f32 %v2845, %v2862
      %v2879 = vmul.f32 %v2846, %v2862
      %v2880 = vmul.f32 %v2847, %v2862
      %v2881 = vmul.f32 %v2848, %v2862
      %v2882 = vmul.f32 %v2849, %v2862
      %v2883 = vmul.f32 %v2850, %v2862
      %v2884 = vmul.f32 %v2851, %v2862
      %v2885 = vmul.f32 %v2852, %v2862
      %v2886 = vmul.f32 %v2853, %v2862
      %v2887 = vmul.f32 %v2854, %v2862
      %v2888 = vmul.f32 %v2855, %v2862
      %v2889 = vmul.f32 %v2856, %v2862
      %v2890 = vmul.f32 %v2857, %v2862
      %v2891 = vmul.f32 %v2858, %v2862
      %v2892 = vmul.f32 %v2859, %v2862
      %v2893 = vmul.f32 %v2860, %v2862
      %v2894 = vmul.f32 %v2861, %v2862
      %v2895 = vadd.f32 %v2798, %v2863
      %v2896 = vadd.f32 %v2799, %v2864
      %v2897 = vadd.f32 %v2800, %v2865
      %v2898 = vadd.f32 %v2801, %v2866
      %v2899 = vadd.f32 %v2802, %v2867
      %v2900 = vadd.f32 %v2803, %v2868
      %v2901 = vadd.f32 %v2804, %v2869
      %v2902 = vadd.f32 %v2805, %v2870
      %v2903 = vadd.f32 %v2806, %v2871
      %v2904 = vadd.f32 %v2807, %v2872
      %v2905 = vadd.f32 %v2808, %v2873
      %v2906 = vadd.f32 %v2809, %v2874
      %v2907 = vadd.f32 %v2810, %v2875
      %v2908 = vadd.f32 %v2811, %v2876
      %v2909 = vadd.f32 %v2812, %v2877
      %v2910 = vadd.f32 %v2813, %v2878
      %v2911 = vadd.f32 %v2814, %v2879
      %v2912 = vadd.f32 %v2815, %v2880
      %v2913 = vadd.f32 %v2816, %v2881
      %v2914 = vadd.f32 %v2817, %v2882
      %v2915 = vadd.f32 %v2818, %v2883
      %v2916 = vadd.f32 %v2819, %v2884
      %v2917 = vadd.f32 %v2820, %v2885
      %v2918 = vadd.f32 %v2821, %v2886
      %v2919 = vadd.f32 %v2822, %v2887
      %v2920 = vadd.f32 %v2823, %v2888
      %v2921 = vadd.f32 %v2824, %v2889
      %v2922 = vadd.f32 %v2825, %v2890
      %v2923 = vadd.f32 %v2826, %v2891
      %v2924 = vadd.f32 %v2827, %v2892
      %v2925 = vadd.f32 %v2828, %v2893
      %v2926 = vadd.f32 %v2829, %v2894
      %v2927 = vld [vmem:[%s4] sm:$0x1]
      %v2929 = vperm.slane %v2927, 0
      %v2931 = vadd.f32 %v2895, %v2929
      %v2932 = vadd.f32 %v2896, %v2929
      %v2933 = vadd.f32 %v2897, %v2929
      %v2934 = vadd.f32 %v2898, %v2929
      %v2935 = vadd.f32 %v2899, %v2929
      %v2936 = vadd.f32 %v2900, %v2929
      %v2937 = vadd.f32 %v2901, %v2929
      %v2938 = vadd.f32 %v2902, %v2929
      %v2939 = vadd.f32 %v2903, %v2929
      %v2940 = vadd.f32 %v2904, %v2929
      %v2941 = vadd.f32 %v2905, %v2929
      %v2942 = vadd.f32 %v2906, %v2929
      %v2943 = vadd.f32 %v2907, %v2929
      %v2944 = vadd.f32 %v2908, %v2929
      %v2945 = vadd.f32 %v2909, %v2929
      %v2946 = vadd.f32 %v2910, %v2929
      %v2947 = vadd.f32 %v2911, %v2929
      %v2948 = vadd.f32 %v2912, %v2929
      %v2949 = vadd.f32 %v2913, %v2929
      %v2950 = vadd.f32 %v2914, %v2929
      %v2951 = vadd.f32 %v2915, %v2929
      %v2952 = vadd.f32 %v2916, %v2929
      %v2953 = vadd.f32 %v2917, %v2929
      %v2954 = vadd.f32 %v2918, %v2929
      %v2955 = vadd.f32 %v2919, %v2929
      %v2956 = vadd.f32 %v2920, %v2929
      %v2957 = vadd.f32 %v2921, %v2929
      %v2958 = vadd.f32 %v2922, %v2929
      %v2959 = vadd.f32 %v2923, %v2929
      %v2960 = vadd.f32 %v2924, %v2929
      %v2961 = vadd.f32 %v2925, %v2929
      %v2962 = vadd.f32 %v2926, %v2929
      %v2963 = vxor.u32 %v2931, 2147483648
      %v2964 = vxor.u32 %v2932, 2147483648
      %v2965 = vxor.u32 %v2933, 2147483648
      %v2966 = vxor.u32 %v2934, 2147483648
      %v2967 = vxor.u32 %v2935, 2147483648
      %v2968 = vxor.u32 %v2936, 2147483648
      %v2969 = vxor.u32 %v2937, 2147483648
      %v2970 = vxor.u32 %v2938, 2147483648
      %v2971 = vxor.u32 %v2939, 2147483648
      %v2972 = vxor.u32 %v2940, 2147483648
      %v2973 = vxor.u32 %v2941, 2147483648
      %v2974 = vxor.u32 %v2942, 2147483648
      %v2975 = vxor.u32 %v2943, 2147483648
      %v2976 = vxor.u32 %v2944, 2147483648
      %v2977 = vxor.u32 %v2945, 2147483648
      %v2978 = vxor.u32 %v2946, 2147483648
      %v2979 = vxor.u32 %v2947, 2147483648
      %v2980 = vxor.u32 %v2948, 2147483648
      %v2981 = vxor.u32 %v2949, 2147483648
      %v2982 = vxor.u32 %v2950, 2147483648
      %v2983 = vxor.u32 %v2951, 2147483648
      %v2984 = vxor.u32 %v2952, 2147483648
      %v2985 = vxor.u32 %v2953, 2147483648
      %v2986 = vxor.u32 %v2954, 2147483648
      %v2987 = vxor.u32 %v2955, 2147483648
      %v2988 = vxor.u32 %v2956, 2147483648
      %v2989 = vxor.u32 %v2957, 2147483648
      %v2990 = vxor.u32 %v2958, 2147483648
      %v2991 = vxor.u32 %v2959, 2147483648
      %v2992 = vxor.u32 %v2960, 2147483648
      %v2993 = vxor.u32 %v2961, 2147483648
      %v2994 = vxor.u32 %v2962, 2147483648
      %v2995 = vmul.f32 %v2963, 1.442695
      %v2996 = vpow.pop %v2995
      %v2997 = vmul.f32 %v2964, 1.442695
      %v2998 = vpow.pop %v2997
      %v2999 = vmul.f32 %v2965, 1.442695
      %v3000 = vpow.pop %v2999
      %v3001 = vmul.f32 %v2966, 1.442695
      %v3002 = vpow.pop %v3001
      %v3003 = vmul.f32 %v2967, 1.442695
      %v3004 = vpow.pop %v3003
      %v3005 = vmul.f32 %v2968, 1.442695
      %v3006 = vpow.pop %v3005
      %v3007 = vmul.f32 %v2969, 1.442695
      %v3008 = vpow.pop %v3007
      %v3009 = vmul.f32 %v2970, 1.442695
      %v3010 = vpow.pop %v3009
      %v3011 = vmul.f32 %v2971, 1.442695
      %v3012 = vpow.pop %v3011
      %v3013 = vmul.f32 %v2972, 1.442695
      %v3014 = vpow.pop %v3013
      %v3015 = vmul.f32 %v2973, 1.442695
      %v3016 = vpow.pop %v3015
      %v3017 = vmul.f32 %v2974, 1.442695
      %v3018 = vpow.pop %v3017
      %v3019 = vmul.f32 %v2975, 1.442695
      %v3020 = vpow.pop %v3019
      %v3021 = vmul.f32 %v2976, 1.442695
      %v3022 = vpow.pop %v3021
      %v3023 = vmul.f32 %v2977, 1.442695
      %v3024 = vpow.pop %v3023
      %v3025 = vmul.f32 %v2978, 1.442695
      %v3026 = vpow.pop %v3025
      %v3027 = vmul.f32 %v2979, 1.442695
      %v3028 = vpow.pop %v3027
      %v3029 = vmul.f32 %v2980, 1.442695
      %v3030 = vpow.pop %v3029
      %v3031 = vmul.f32 %v2981, 1.442695
      %v3032 = vpow.pop %v3031
      %v3033 = vmul.f32 %v2982, 1.442695
      %v3034 = vpow.pop %v3033
      %v3035 = vmul.f32 %v2983, 1.442695
      %v3036 = vpow.pop %v3035
      %v3037 = vmul.f32 %v2984, 1.442695
      %v3038 = vpow.pop %v3037
      %v3039 = vmul.f32 %v2985, 1.442695
      %v3040 = vpow.pop %v3039
      %v3041 = vmul.f32 %v2986, 1.442695
      %v3042 = vpow.pop %v3041
      %v3043 = vmul.f32 %v2987, 1.442695
      %v3044 = vpow.pop %v3043
      %v3045 = vmul.f32 %v2988, 1.442695
      %v3046 = vpow.pop %v3045
      %v3047 = vmul.f32 %v2989, 1.442695
      %v3048 = vpow.pop %v3047
      %v3049 = vmul.f32 %v2990, 1.442695
      %v3050 = vpow.pop %v3049
      %v3051 = vmul.f32 %v2991, 1.442695
      %v3052 = vpow.pop %v3051
      %v3053 = vmul.f32 %v2992, 1.442695
      %v3054 = vpow.pop %v3053
      %v3055 = vmul.f32 %v2993, 1.442695
      %v3056 = vpow.pop %v3055
      %v3057 = vmul.f32 %v2994, 1.442695
      %v3058 = vpow.pop %v3057
      %v3059 = vadd.f32 %v2996, 1.0
      %v3060 = vadd.f32 %v2998, 1.0
      %v3061 = vadd.f32 %v3000, 1.0
      %v3062 = vadd.f32 %v3002, 1.0
      %v3063 = vadd.f32 %v3004, 1.0
      %v3064 = vadd.f32 %v3006, 1.0
      %v3065 = vadd.f32 %v3008, 1.0
      %v3066 = vadd.f32 %v3010, 1.0
      %v3067 = vadd.f32 %v3012, 1.0
      %v3068 = vadd.f32 %v3014, 1.0
      %v3069 = vadd.f32 %v3016, 1.0
      %v3070 = vadd.f32 %v3018, 1.0
      %v3071 = vadd.f32 %v3020, 1.0
      %v3072 = vadd.f32 %v3022, 1.0
      %v3073 = vadd.f32 %v3024, 1.0
      %v3074 = vadd.f32 %v3026, 1.0
      %v3075 = vadd.f32 %v3028, 1.0
      %v3076 = vadd.f32 %v3030, 1.0
      %v3077 = vadd.f32 %v3032, 1.0
      %v3078 = vadd.f32 %v3034, 1.0
      %v3079 = vadd.f32 %v3036, 1.0
      %v3080 = vadd.f32 %v3038, 1.0
      %v3081 = vadd.f32 %v3040, 1.0
      %v3082 = vadd.f32 %v3042, 1.0
      %v3083 = vadd.f32 %v3044, 1.0
      %v3084 = vadd.f32 %v3046, 1.0
      %v3085 = vadd.f32 %v3048, 1.0
      %v3086 = vadd.f32 %v3050, 1.0
      %v3087 = vadd.f32 %v3052, 1.0
      %v3088 = vadd.f32 %v3054, 1.0
      %v3089 = vadd.f32 %v3056, 1.0
      %v3090 = vadd.f32 %v3058, 1.0
      %v3091 = vrcp.pop %v3059
      %v3092 = vmul.f32 %v3059, %v3091
      %v3093 = vsub.f32 1.0, %v3092
      %v3094 = vmul.f32 %v3091, %v3093
      %v3095 = vadd.f32 %v3091, %v3094
      %vm3096 = vweird.f32 %v3059
      %vm3097 = vweird.f32 %v3091
      %vm3098 = vmor %vm3096, %vm3097
      %v3099 = vsel %vm3098, %v3091, %v3095
      %v3100 = vand.u32 2147483647, %v3059
      %vm3101 = vcmp.eq.f32.partialorder %v3100, 8.507059e+37
      %v3102 = vand.u32 %v3059, 2147483648
      %v3103 = vor.u32 1.1754944e-38, %v3102
      %v3104 = vsel %vm3101, %v3103, %v3099
      %v3105 = vmul.f32 1.0, %v3104
      %v3106 = vrcp.pop %v3060
      %v3107 = vmul.f32 %v3060, %v3106
      %v3108 = vsub.f32 1.0, %v3107
      %v3109 = vmul.f32 %v3106, %v3108
      %v3110 = vadd.f32 %v3106, %v3109
      %vm3111 = vweird.f32 %v3060
      %vm3112 = vweird.f32 %v3106
      %vm3113 = vmor %vm3111, %vm3112
      %v3114 = vsel %vm3113, %v3106, %v3110
      %v3115 = vand.u32 2147483647, %v3060
      %vm3116 = vcmp.eq.f32.partialorder %v3115, 8.507059e+37
      %v3117 = vand.u32 %v3060, 2147483648
      %v3118 = vor.u32 1.1754944e-38, %v3117
      %v3119 = vsel %vm3116, %v3118, %v3114
      %v3120 = vmul.f32 1.0, %v3119
      %v3121 = vrcp.pop %v3061
      %v3122 = vmul.f32 %v3061, %v3121
      %v3123 = vsub.f32 1.0, %v3122
      %v3124 = vmul.f32 %v3121, %v3123
      %v3125 = vadd.f32 %v3121, %v3124
      %vm3126 = vweird.f32 %v3061
      %vm3127 = vweird.f32 %v3121
      %vm3128 = vmor %vm3126, %vm3127
      %v3129 = vsel %vm3128, %v3121, %v3125
      %v3130 = vand.u32 2147483647, %v3061
      %vm3131 = vcmp.eq.f32.partialorder %v3130, 8.507059e+37
      %v3132 = vand.u32 %v3061, 2147483648
      %v3133 = vor.u32 1.1754944e-38, %v3132
      %v3134 = vsel %vm3131, %v3133, %v3129
      %v3135 = vmul.f32 1.0, %v3134
      %v3136 = vrcp.pop %v3062
      %v3137 = vmul.f32 %v3062, %v3136
      %v3138 = vsub.f32 1.0, %v3137
      %v3139 = vmul.f32 %v3136, %v3138
      %v3140 = vadd.f32 %v3136, %v3139
      %vm3141 = vweird.f32 %v3062
      %vm3142 = vweird.f32 %v3136
      %vm3143 = vmor %vm3141, %vm3142
      %v3144 = vsel %vm3143, %v3136, %v3140
      %v3145 = vand.u32 2147483647, %v3062
      %vm3146 = vcmp.eq.f32.partialorder %v3145, 8.507059e+37
      %v3147 = vand.u32 %v3062, 2147483648
      %v3148 = vor.u32 1.1754944e-38, %v3147
      %v3149 = vsel %vm3146, %v3148, %v3144
      %v3150 = vmul.f32 1.0, %v3149
      %v3151 = vrcp.pop %v3063
      %v3152 = vmul.f32 %v3063, %v3151
      %v3153 = vsub.f32 1.0, %v3152
      %v3154 = vmul.f32 %v3151, %v3153
      %v3155 = vadd.f32 %v3151, %v3154
      %vm3156 = vweird.f32 %v3063
      %vm3157 = vweird.f32 %v3151
      %vm3158 = vmor %vm3156, %vm3157
      %v3159 = vsel %vm3158, %v3151, %v3155
      %v3160 = vand.u32 2147483647, %v3063
      %vm3161 = vcmp.eq.f32.partialorder %v3160, 8.507059e+37
      %v3162 = vand.u32 %v3063, 2147483648
      %v3163 = vor.u32 1.1754944e-38, %v3162
      %v3164 = vsel %vm3161, %v3163, %v3159
      %v3165 = vmul.f32 1.0, %v3164
      %v3166 = vrcp.pop %v3064
      %v3167 = vmul.f32 %v3064, %v3166
      %v3168 = vsub.f32 1.0, %v3167
      %v3169 = vmul.f32 %v3166, %v3168
      %v3170 = vadd.f32 %v3166, %v3169
      %vm3171 = vweird.f32 %v3064
      %vm3172 = vweird.f32 %v3166
      %vm3173 = vmor %vm3171, %vm3172
      %v3174 = vsel %vm3173, %v3166, %v3170
      %v3175 = vand.u32 2147483647, %v3064
      %vm3176 = vcmp.eq.f32.partialorder %v3175, 8.507059e+37
      %v3177 = vand.u32 %v3064, 2147483648
      %v3178 = vor.u32 1.1754944e-38, %v3177
      %v3179 = vsel %vm3176, %v3178, %v3174
      %v3180 = vmul.f32 1.0, %v3179
      %v3181 = vrcp.pop %v3065
      %v3182 = vmul.f32 %v3065, %v3181
      %v3183 = vsub.f32 1.0, %v3182
      %v3184 = vmul.f32 %v3181, %v3183
      %v3185 = vadd.f32 %v3181, %v3184
      %vm3186 = vweird.f32 %v3065
      %vm3187 = vweird.f32 %v3181
      %vm3188 = vmor %vm3186, %vm3187
      %v3189 = vsel %vm3188, %v3181, %v3185
      %v3190 = vand.u32 2147483647, %v3065
      %vm3191 = vcmp.eq.f32.partialorder %v3190, 8.507059e+37
      %v3192 = vand.u32 %v3065, 2147483648
      %v3193 = vor.u32 1.1754944e-38, %v3192
      %v3194 = vsel %vm3191, %v3193, %v3189
      %v3195 = vmul.f32 1.0, %v3194
      %v3196 = vrcp.pop %v3066
      %v3197 = vmul.f32 %v3066, %v3196
      %v3198 = vsub.f32 1.0, %v3197
      %v3199 = vmul.f32 %v3196, %v3198
      %v3200 = vadd.f32 %v3196, %v3199
      %vm3201 = vweird.f32 %v3066
      %vm3202 = vweird.f32 %v3196
      %vm3203 = vmor %vm3201, %vm3202
      %v3204 = vsel %vm3203, %v3196, %v3200
      %v3205 = vand.u32 2147483647, %v3066
      %vm3206 = vcmp.eq.f32.partialorder %v3205, 8.507059e+37
      %v3207 = vand.u32 %v3066, 2147483648
      %v3208 = vor.u32 1.1754944e-38, %v3207
      %v3209 = vsel %vm3206, %v3208, %v3204
      %v3210 = vmul.f32 1.0, %v3209
      %v3211 = vrcp.pop %v3067
      %v3212 = vmul.f32 %v3067, %v3211
      %v3213 = vsub.f32 1.0, %v3212
      %v3214 = vmul.f32 %v3211, %v3213
      %v3215 = vadd.f32 %v3211, %v3214
      %vm3216 = vweird.f32 %v3067
      %vm3217 = vweird.f32 %v3211
      %vm3218 = vmor %vm3216, %vm3217
      %v3219 = vsel %vm3218, %v3211, %v3215
      %v3220 = vand.u32 2147483647, %v3067
      %vm3221 = vcmp.eq.f32.partialorder %v3220, 8.507059e+37
      %v3222 = vand.u32 %v3067, 2147483648
      %v3223 = vor.u32 1.1754944e-38, %v3222
      %v3224 = vsel %vm3221, %v3223, %v3219
      %v3225 = vmul.f32 1.0, %v3224
      %v3226 = vrcp.pop %v3068
      %v3227 = vmul.f32 %v3068, %v3226
      %v3228 = vsub.f32 1.0, %v3227
      %v3229 = vmul.f32 %v3226, %v3228
      %v3230 = vadd.f32 %v3226, %v3229
      %vm3231 = vweird.f32 %v3068
      %vm3232 = vweird.f32 %v3226
      %vm3233 = vmor %vm3231, %vm3232
      %v3234 = vsel %vm3233, %v3226, %v3230
      %v3235 = vand.u32 2147483647, %v3068
      %vm3236 = vcmp.eq.f32.partialorder %v3235, 8.507059e+37
      %v3237 = vand.u32 %v3068, 2147483648
      %v3238 = vor.u32 1.1754944e-38, %v3237
      %v3239 = vsel %vm3236, %v3238, %v3234
      %v3240 = vmul.f32 1.0, %v3239
      %v3241 = vrcp.pop %v3069
      %v3242 = vmul.f32 %v3069, %v3241
      %v3243 = vsub.f32 1.0, %v3242
      %v3244 = vmul.f32 %v3241, %v3243
      %v3245 = vadd.f32 %v3241, %v3244
      %vm3246 = vweird.f32 %v3069
      %vm3247 = vweird.f32 %v3241
      %vm3248 = vmor %vm3246, %vm3247
      %v3249 = vsel %vm3248, %v3241, %v3245
      %v3250 = vand.u32 2147483647, %v3069
      %vm3251 = vcmp.eq.f32.partialorder %v3250, 8.507059e+37
      %v3252 = vand.u32 %v3069, 2147483648
      %v3253 = vor.u32 1.1754944e-38, %v3252
      %v3254 = vsel %vm3251, %v3253, %v3249
      %v3255 = vmul.f32 1.0, %v3254
      %v3256 = vrcp.pop %v3070
      %v3257 = vmul.f32 %v3070, %v3256
      %v3258 = vsub.f32 1.0, %v3257
      %v3259 = vmul.f32 %v3256, %v3258
      %v3260 = vadd.f32 %v3256, %v3259
      %vm3261 = vweird.f32 %v3070
      %vm3262 = vweird.f32 %v3256
      %vm3263 = vmor %vm3261, %vm3262
      %v3264 = vsel %vm3263, %v3256, %v3260
      %v3265 = vand.u32 2147483647, %v3070
      %vm3266 = vcmp.eq.f32.partialorder %v3265, 8.507059e+37
      %v3267 = vand.u32 %v3070, 2147483648
      %v3268 = vor.u32 1.1754944e-38, %v3267
      %v3269 = vsel %vm3266, %v3268, %v3264
      %v3270 = vmul.f32 1.0, %v3269
      %v3271 = vrcp.pop %v3071
      %v3272 = vmul.f32 %v3071, %v3271
      %v3273 = vsub.f32 1.0, %v3272
      %v3274 = vmul.f32 %v3271, %v3273
      %v3275 = vadd.f32 %v3271, %v3274
      %vm3276 = vweird.f32 %v3071
      %vm3277 = vweird.f32 %v3271
      %vm3278 = vmor %vm3276, %vm3277
      %v3279 = vsel %vm3278, %v3271, %v3275
      %v3280 = vand.u32 2147483647, %v3071
      %vm3281 = vcmp.eq.f32.partialorder %v3280, 8.507059e+37
      %v3282 = vand.u32 %v3071, 2147483648
      %v3283 = vor.u32 1.1754944e-38, %v3282
      %v3284 = vsel %vm3281, %v3283, %v3279
      %v3285 = vmul.f32 1.0, %v3284
      %v3286 = vrcp.pop %v3072
      %v3287 = vmul.f32 %v3072, %v3286
      %v3288 = vsub.f32 1.0, %v3287
      %v3289 = vmul.f32 %v3286, %v3288
      %v3290 = vadd.f32 %v3286, %v3289
      %vm3291 = vweird.f32 %v3072
      %vm3292 = vweird.f32 %v3286
      %vm3293 = vmor %vm3291, %vm3292
      %v3294 = vsel %vm3293, %v3286, %v3290
      %v3295 = vand.u32 2147483647, %v3072
      %vm3296 = vcmp.eq.f32.partialorder %v3295, 8.507059e+37
      %v3297 = vand.u32 %v3072, 2147483648
      %v3298 = vor.u32 1.1754944e-38, %v3297
      %v3299 = vsel %vm3296, %v3298, %v3294
      %v3300 = vmul.f32 1.0, %v3299
      %v3301 = vrcp.pop %v3073
      %v3302 = vmul.f32 %v3073, %v3301
      %v3303 = vsub.f32 1.0, %v3302
      %v3304 = vmul.f32 %v3301, %v3303
      %v3305 = vadd.f32 %v3301, %v3304
      %vm3306 = vweird.f32 %v3073
      %vm3307 = vweird.f32 %v3301
      %vm3308 = vmor %vm3306, %vm3307
      %v3309 = vsel %vm3308, %v3301, %v3305
      %v3310 = vand.u32 2147483647, %v3073
      %vm3311 = vcmp.eq.f32.partialorder %v3310, 8.507059e+37
      %v3312 = vand.u32 %v3073, 2147483648
      %v3313 = vor.u32 1.1754944e-38, %v3312
      %v3314 = vsel %vm3311, %v3313, %v3309
      %v3315 = vmul.f32 1.0, %v3314
      %v3316 = vrcp.pop %v3074
      %v3317 = vmul.f32 %v3074, %v3316
      %v3318 = vsub.f32 1.0, %v3317
      %v3319 = vmul.f32 %v3316, %v3318
      %v3320 = vadd.f32 %v3316, %v3319
      %vm3321 = vweird.f32 %v3074
      %vm3322 = vweird.f32 %v3316
      %vm3323 = vmor %vm3321, %vm3322
      %v3324 = vsel %vm3323, %v3316, %v3320
      %v3325 = vand.u32 2147483647, %v3074
      %vm3326 = vcmp.eq.f32.partialorder %v3325, 8.507059e+37
      %v3327 = vand.u32 %v3074, 2147483648
      %v3328 = vor.u32 1.1754944e-38, %v3327
      %v3329 = vsel %vm3326, %v3328, %v3324
      %v3330 = vmul.f32 1.0, %v3329
      %v3331 = vrcp.pop %v3075
      %v3332 = vmul.f32 %v3075, %v3331
      %v3333 = vsub.f32 1.0, %v3332
      %v3334 = vmul.f32 %v3331, %v3333
      %v3335 = vadd.f32 %v3331, %v3334
      %vm3336 = vweird.f32 %v3075
      %vm3337 = vweird.f32 %v3331
      %vm3338 = vmor %vm3336, %vm3337
      %v3339 = vsel %vm3338, %v3331, %v3335
      %v3340 = vand.u32 2147483647, %v3075
      %vm3341 = vcmp.eq.f32.partialorder %v3340, 8.507059e+37
      %v3342 = vand.u32 %v3075, 2147483648
      %v3343 = vor.u32 1.1754944e-38, %v3342
      %v3344 = vsel %vm3341, %v3343, %v3339
      %v3345 = vmul.f32 1.0, %v3344
      %v3346 = vrcp.pop %v3076
      %v3347 = vmul.f32 %v3076, %v3346
      %v3348 = vsub.f32 1.0, %v3347
      %v3349 = vmul.f32 %v3346, %v3348
      %v3350 = vadd.f32 %v3346, %v3349
      %vm3351 = vweird.f32 %v3076
      %vm3352 = vweird.f32 %v3346
      %vm3353 = vmor %vm3351, %vm3352
      %v3354 = vsel %vm3353, %v3346, %v3350
      %v3355 = vand.u32 2147483647, %v3076
      %vm3356 = vcmp.eq.f32.partialorder %v3355, 8.507059e+37
      %v3357 = vand.u32 %v3076, 2147483648
      %v3358 = vor.u32 1.1754944e-38, %v3357
      %v3359 = vsel %vm3356, %v3358, %v3354
      %v3360 = vmul.f32 1.0, %v3359
      %v3361 = vrcp.pop %v3077
      %v3362 = vmul.f32 %v3077, %v3361
      %v3363 = vsub.f32 1.0, %v3362
      %v3364 = vmul.f32 %v3361, %v3363
      %v3365 = vadd.f32 %v3361, %v3364
      %vm3366 = vweird.f32 %v3077
      %vm3367 = vweird.f32 %v3361
      %vm3368 = vmor %vm3366, %vm3367
      %v3369 = vsel %vm3368, %v3361, %v3365
      %v3370 = vand.u32 2147483647, %v3077
      %vm3371 = vcmp.eq.f32.partialorder %v3370, 8.507059e+37
      %v3372 = vand.u32 %v3077, 2147483648
      %v3373 = vor.u32 1.1754944e-38, %v3372
      %v3374 = vsel %vm3371, %v3373, %v3369
      %v3375 = vmul.f32 1.0, %v3374
      %v3376 = vrcp.pop %v3078
      %v3377 = vmul.f32 %v3078, %v3376
      %v3378 = vsub.f32 1.0, %v3377
      %v3379 = vmul.f32 %v3376, %v3378
      %v3380 = vadd.f32 %v3376, %v3379
      %vm3381 = vweird.f32 %v3078
      %vm3382 = vweird.f32 %v3376
      %vm3383 = vmor %vm3381, %vm3382
      %v3384 = vsel %vm3383, %v3376, %v3380
      %v3385 = vand.u32 2147483647, %v3078
      %vm3386 = vcmp.eq.f32.partialorder %v3385, 8.507059e+37
      %v3387 = vand.u32 %v3078, 2147483648
      %v3388 = vor.u32 1.1754944e-38, %v3387
      %v3389 = vsel %vm3386, %v3388, %v3384
      %v3390 = vmul.f32 1.0, %v3389
      %v3391 = vrcp.pop %v3079
      %v3392 = vmul.f32 %v3079, %v3391
      %v3393 = vsub.f32 1.0, %v3392
      %v3394 = vmul.f32 %v3391, %v3393
      %v3395 = vadd.f32 %v3391, %v3394
      %vm3396 = vweird.f32 %v3079
      %vm3397 = vweird.f32 %v3391
      %vm3398 = vmor %vm3396, %vm3397
      %v3399 = vsel %vm3398, %v3391, %v3395
      %v3400 = vand.u32 2147483647, %v3079
      %vm3401 = vcmp.eq.f32.partialorder %v3400, 8.507059e+37
      %v3402 = vand.u32 %v3079, 2147483648
      %v3403 = vor.u32 1.1754944e-38, %v3402
      %v3404 = vsel %vm3401, %v3403, %v3399
      %v3405 = vmul.f32 1.0, %v3404
      %v3406 = vrcp.pop %v3080
      %v3407 = vmul.f32 %v3080, %v3406
      %v3408 = vsub.f32 1.0, %v3407
      %v3409 = vmul.f32 %v3406, %v3408
      %v3410 = vadd.f32 %v3406, %v3409
      %vm3411 = vweird.f32 %v3080
      %vm3412 = vweird.f32 %v3406
      %vm3413 = vmor %vm3411, %vm3412
      %v3414 = vsel %vm3413, %v3406, %v3410
      %v3415 = vand.u32 2147483647, %v3080
      %vm3416 = vcmp.eq.f32.partialorder %v3415, 8.507059e+37
      %v3417 = vand.u32 %v3080, 2147483648
      %v3418 = vor.u32 1.1754944e-38, %v3417
      %v3419 = vsel %vm3416, %v3418, %v3414
      %v3420 = vmul.f32 1.0, %v3419
      %v3421 = vrcp.pop %v3081
      %v3422 = vmul.f32 %v3081, %v3421
      %v3423 = vsub.f32 1.0, %v3422
      %v3424 = vmul.f32 %v3421, %v3423
      %v3425 = vadd.f32 %v3421, %v3424
      %vm3426 = vweird.f32 %v3081
      %vm3427 = vweird.f32 %v3421
      %vm3428 = vmor %vm3426, %vm3427
      %v3429 = vsel %vm3428, %v3421, %v3425
      %v3430 = vand.u32 2147483647, %v3081
      %vm3431 = vcmp.eq.f32.partialorder %v3430, 8.507059e+37
      %v3432 = vand.u32 %v3081, 2147483648
      %v3433 = vor.u32 1.1754944e-38, %v3432
      %v3434 = vsel %vm3431, %v3433, %v3429
      %v3435 = vmul.f32 1.0, %v3434
      %v3436 = vrcp.pop %v3082
      %v3437 = vmul.f32 %v3082, %v3436
      %v3438 = vsub.f32 1.0, %v3437
      %v3439 = vmul.f32 %v3436, %v3438
      %v3440 = vadd.f32 %v3436, %v3439
      %vm3441 = vweird.f32 %v3082
      %vm3442 = vweird.f32 %v3436
      %vm3443 = vmor %vm3441, %vm3442
      %v3444 = vsel %vm3443, %v3436, %v3440
      %v3445 = vand.u32 2147483647, %v3082
      %vm3446 = vcmp.eq.f32.partialorder %v3445, 8.507059e+37
      %v3447 = vand.u32 %v3082, 2147483648
      %v3448 = vor.u32 1.1754944e-38, %v3447
      %v3449 = vsel %vm3446, %v3448, %v3444
      %v3450 = vmul.f32 1.0, %v3449
      %v3451 = vrcp.pop %v3083
      %v3452 = vmul.f32 %v3083, %v3451
      %v3453 = vsub.f32 1.0, %v3452
      %v3454 = vmul.f32 %v3451, %v3453
      %v3455 = vadd.f32 %v3451, %v3454
      %vm3456 = vweird.f32 %v3083
      %vm3457 = vweird.f32 %v3451
      %vm3458 = vmor %vm3456, %vm3457
      %v3459 = vsel %vm3458, %v3451, %v3455
      %v3460 = vand.u32 2147483647, %v3083
      %vm3461 = vcmp.eq.f32.partialorder %v3460, 8.507059e+37
      %v3462 = vand.u32 %v3083, 2147483648
      %v3463 = vor.u32 1.1754944e-38, %v3462
      %v3464 = vsel %vm3461, %v3463, %v3459
      %v3465 = vmul.f32 1.0, %v3464
      %v3466 = vrcp.pop %v3084
      %v3467 = vmul.f32 %v3084, %v3466
      %v3468 = vsub.f32 1.0, %v3467
      %v3469 = vmul.f32 %v3466, %v3468
      %v3470 = vadd.f32 %v3466, %v3469
      %vm3471 = vweird.f32 %v3084
      %vm3472 = vweird.f32 %v3466
      %vm3473 = vmor %vm3471, %vm3472
      %v3474 = vsel %vm3473, %v3466, %v3470
      %v3475 = vand.u32 2147483647, %v3084
      %vm3476 = vcmp.eq.f32.partialorder %v3475, 8.507059e+37
      %v3477 = vand.u32 %v3084, 2147483648
      %v3478 = vor.u32 1.1754944e-38, %v3477
      %v3479 = vsel %vm3476, %v3478, %v3474
      %v3480 = vmul.f32 1.0, %v3479
      %v3481 = vrcp.pop %v3085
      %v3482 = vmul.f32 %v3085, %v3481
      %v3483 = vsub.f32 1.0, %v3482
      %v3484 = vmul.f32 %v3481, %v3483
      %v3485 = vadd.f32 %v3481, %v3484
      %vm3486 = vweird.f32 %v3085
      %vm3487 = vweird.f32 %v3481
      %vm3488 = vmor %vm3486, %vm3487
      %v3489 = vsel %vm3488, %v3481, %v3485
      %v3490 = vand.u32 2147483647, %v3085
      %vm3491 = vcmp.eq.f32.partialorder %v3490, 8.507059e+37
      %v3492 = vand.u32 %v3085, 2147483648
      %v3493 = vor.u32 1.1754944e-38, %v3492
      %v3494 = vsel %vm3491, %v3493, %v3489
      %v3495 = vmul.f32 1.0, %v3494
      %v3496 = vrcp.pop %v3086
      %v3497 = vmul.f32 %v3086, %v3496
      %v3498 = vsub.f32 1.0, %v3497
      %v3499 = vmul.f32 %v3496, %v3498
      %v3500 = vadd.f32 %v3496, %v3499
      %vm3501 = vweird.f32 %v3086
      %vm3502 = vweird.f32 %v3496
      %vm3503 = vmor %vm3501, %vm3502
      %v3504 = vsel %vm3503, %v3496, %v3500
      %v3505 = vand.u32 2147483647, %v3086
      %vm3506 = vcmp.eq.f32.partialorder %v3505, 8.507059e+37
      %v3507 = vand.u32 %v3086, 2147483648
      %v3508 = vor.u32 1.1754944e-38, %v3507
      %v3509 = vsel %vm3506, %v3508, %v3504
      %v3510 = vmul.f32 1.0, %v3509
      %v3511 = vrcp.pop %v3087
      %v3512 = vmul.f32 %v3087, %v3511
      %v3513 = vsub.f32 1.0, %v3512
      %v3514 = vmul.f32 %v3511, %v3513
      %v3515 = vadd.f32 %v3511, %v3514
      %vm3516 = vweird.f32 %v3087
      %vm3517 = vweird.f32 %v3511
      %vm3518 = vmor %vm3516, %vm3517
      %v3519 = vsel %vm3518, %v3511, %v3515
      %v3520 = vand.u32 2147483647, %v3087
      %vm3521 = vcmp.eq.f32.partialorder %v3520, 8.507059e+37
      %v3522 = vand.u32 %v3087, 2147483648
      %v3523 = vor.u32 1.1754944e-38, %v3522
      %v3524 = vsel %vm3521, %v3523, %v3519
      %v3525 = vmul.f32 1.0, %v3524
      %v3526 = vrcp.pop %v3088
      %v3527 = vmul.f32 %v3088, %v3526
      %v3528 = vsub.f32 1.0, %v3527
      %v3529 = vmul.f32 %v3526, %v3528
      %v3530 = vadd.f32 %v3526, %v3529
      %vm3531 = vweird.f32 %v3088
      %vm3532 = vweird.f32 %v3526
      %vm3533 = vmor %vm3531, %vm3532
      %v3534 = vsel %vm3533, %v3526, %v3530
      %v3535 = vand.u32 2147483647, %v3088
      %vm3536 = vcmp.eq.f32.partialorder %v3535, 8.507059e+37
      %v3537 = vand.u32 %v3088, 2147483648
      %v3538 = vor.u32 1.1754944e-38, %v3537
      %v3539 = vsel %vm3536, %v3538, %v3534
      %v3540 = vmul.f32 1.0, %v3539
      %v3541 = vrcp.pop %v3089
      %v3542 = vmul.f32 %v3089, %v3541
      %v3543 = vsub.f32 1.0, %v3542
      %v3544 = vmul.f32 %v3541, %v3543
      %v3545 = vadd.f32 %v3541, %v3544
      %vm3546 = vweird.f32 %v3089
      %vm3547 = vweird.f32 %v3541
      %vm3548 = vmor %vm3546, %vm3547
      %v3549 = vsel %vm3548, %v3541, %v3545
      %v3550 = vand.u32 2147483647, %v3089
      %vm3551 = vcmp.eq.f32.partialorder %v3550, 8.507059e+37
      %v3552 = vand.u32 %v3089, 2147483648
      %v3553 = vor.u32 1.1754944e-38, %v3552
      %v3554 = vsel %vm3551, %v3553, %v3549
      %v3555 = vmul.f32 1.0, %v3554
      %v3556 = vrcp.pop %v3090
      %v3557 = vmul.f32 %v3090, %v3556
      %v3558 = vsub.f32 1.0, %v3557
      %v3559 = vmul.f32 %v3556, %v3558
      %v3560 = vadd.f32 %v3556, %v3559
      %vm3561 = vweird.f32 %v3090
      %vm3562 = vweird.f32 %v3556
      %vm3563 = vmor %vm3561, %vm3562
      %v3564 = vsel %vm3563, %v3556, %v3560
      %v3565 = vand.u32 2147483647, %v3090
      %vm3566 = vcmp.eq.f32.partialorder %v3565, 8.507059e+37
      %v3567 = vand.u32 %v3090, 2147483648
      %v3568 = vor.u32 1.1754944e-38, %v3567
      %v3569 = vsel %vm3566, %v3568, %v3564
      %v3570 = vmul.f32 1.0, %v3569
      %v3571 = vmul.f32 %v2931, %v3105
      %v3572 = vmul.f32 %v2932, %v3120
      %v3573 = vmul.f32 %v2933, %v3135
      %v3574 = vmul.f32 %v2934, %v3150
      %v3575 = vmul.f32 %v2935, %v3165
      %v3576 = vmul.f32 %v2936, %v3180
      %v3577 = vmul.f32 %v2937, %v3195
      %v3578 = vmul.f32 %v2938, %v3210
      %v3579 = vmul.f32 %v2939, %v3225
      %v3580 = vmul.f32 %v2940, %v3240
      %v3581 = vmul.f32 %v2941, %v3255
      %v3582 = vmul.f32 %v2942, %v3270
      %v3583 = vmul.f32 %v2943, %v3285
      %v3584 = vmul.f32 %v2944, %v3300
      %v3585 = vmul.f32 %v2945, %v3315
      %v3586 = vmul.f32 %v2946, %v3330
      %v3587 = vmul.f32 %v2947, %v3345
      %v3588 = vmul.f32 %v2948, %v3360
      %v3589 = vmul.f32 %v2949, %v3375
      %v3590 = vmul.f32 %v2950, %v3390
      %v3591 = vmul.f32 %v2951, %v3405
      %v3592 = vmul.f32 %v2952, %v3420
      %v3593 = vmul.f32 %v2953, %v3435
      %v3594 = vmul.f32 %v2954, %v3450
      %v3595 = vmul.f32 %v2955, %v3465
      %v3596 = vmul.f32 %v2956, %v3480
      %v3597 = vmul.f32 %v2957, %v3495
      %v3598 = vmul.f32 %v2958, %v3510
      %v3599 = vmul.f32 %v2959, %v3525
      %v3600 = vmul.f32 %v2960, %v3540
      %v3601 = vmul.f32 %v2961, %v3555
      %v3602 = vmul.f32 %v2962, %v3570
      %v3603 = vsel %vm1995, %v3571, 0.0
      %v3604 = vsel %vm1995, %v3572, 0.0
      %v3605 = vadd.f32 %v3603, %v3604
      %v3606 = vsel %vm1995, %v3573, 0.0
      %v3607 = vadd.f32 %v3605, %v3606
      %v3608 = vsel %vm1995, %v3574, 0.0
      %v3609 = vadd.f32 %v3607, %v3608
      %v3610 = vsel %vm1995, %v3575, 0.0
      %v3611 = vadd.f32 %v3609, %v3610
      %v3612 = vsel %vm1995, %v3576, 0.0
      %v3613 = vadd.f32 %v3611, %v3612
      %v3614 = vsel %vm1995, %v3577, 0.0
      %v3615 = vadd.f32 %v3613, %v3614
      %v3616 = vsel %vm1995, %v3578, 0.0
      %v3617 = vadd.f32 %v3615, %v3616
      %v3618 = vsel %vm1995, %v3579, 0.0
      %v3619 = vadd.f32 %v3617, %v3618
      %v3620 = vsel %vm1995, %v3580, 0.0
      %v3621 = vadd.f32 %v3619, %v3620
      %v3622 = vsel %vm1995, %v3581, 0.0
      %v3623 = vadd.f32 %v3621, %v3622
      %v3624 = vsel %vm1995, %v3582, 0.0
      %v3625 = vadd.f32 %v3623, %v3624
      %v3626 = vsel %vm1995, %v3583, 0.0
      %v3627 = vadd.f32 %v3625, %v3626
      %v3628 = vsel %vm1995, %v3584, 0.0
      %v3629 = vadd.f32 %v3627, %v3628
      %v3630 = vsel %vm1995, %v3585, 0.0
      %v3631 = vadd.f32 %v3629, %v3630
      %v3632 = vsel %vm1995, %v3586, 0.0
      %v3633 = vadd.f32 %v3631, %v3632
      %v3634 = vsel %vm1995, %v3587, 0.0
      %v3635 = vadd.f32 %v3633, %v3634
      %v3636 = vsel %vm1995, %v3588, 0.0
      %v3637 = vadd.f32 %v3635, %v3636
      %v3638 = vsel %vm1995, %v3589, 0.0
      %v3639 = vadd.f32 %v3637, %v3638
      %v3640 = vsel %vm1995, %v3590, 0.0
      %v3641 = vadd.f32 %v3639, %v3640
      %v3642 = vsel %vm1995, %v3591, 0.0
      %v3643 = vadd.f32 %v3641, %v3642
      %v3644 = vsel %vm1995, %v3592, 0.0
      %v3645 = vadd.f32 %v3643, %v3644
      %v3646 = vsel %vm1995, %v3593, 0.0
      %v3647 = vadd.f32 %v3645, %v3646
      %v3648 = vsel %vm1995, %v3594, 0.0
      %v3649 = vadd.f32 %v3647, %v3648
      %v3650 = vsel %vm1995, %v3595, 0.0
      %v3651 = vadd.f32 %v3649, %v3650
      %v3652 = vsel %vm1995, %v3596, 0.0
      %v3653 = vadd.f32 %v3651, %v3652
      %v3654 = vsel %vm1995, %v3597, 0.0
      %v3655 = vadd.f32 %v3653, %v3654
      %v3656 = vsel %vm1995, %v3598, 0.0
      %v3657 = vadd.f32 %v3655, %v3656
      %v3658 = vsel %vm1995, %v3599, 0.0
      %v3659 = vadd.f32 %v3657, %v3658
      %v3660 = vsel %vm1995, %v3600, 0.0
      %v3661 = vadd.f32 %v3659, %v3660
      %v3662 = vsel %vm1995, %v3601, 0.0
      %v3663 = vadd.f32 %v3661, %v3662
      %v3664 = vsel %vm1995, %v3602, 0.0
      %v3665 = vadd.f32 %v3663, %v3664
      %v3666 = vrot.slane %v3665, 4
      %v3667 = vadd.f32 %v3665, %v3666
      %v3668 = vrot.slane %v3667, 2
      %v3669 = vadd.f32 %v3667, %v3668
      %v3670 = vrot.slane %v3669, 1
      %v3671 = vadd.f32 %v3669, %v3670
      %v3672 = vrcp.pop 256.0
      %v3673 = vmul.f32 256.0, %v3672
      %v3674 = vsub.f32 1.0, %v3673
      %v3675 = vmul.f32 %v3672, %v3674
      %v3676 = vadd.f32 %v3672, %v3675
      %vm3677 = vweird.f32 %v3672
      %v3678 = vsel %vm3677, %v3672, %v3676
      %v3679 = vmul.f32 %v3671, %v3678
      %v3680 = vld [vmem:[%s5] sm:$0xff]
      %v3681 = vld [vmem:[%s5 + $0x8] sm:$0xff]
      %v3682 = vld [vmem:[%s5 + $0x10] sm:$0xff]
      %v3683 = vld [vmem:[%s6] sm:$0x1]
      %v3685 = vsel %vm1995, %v3679, 0
      %3687 = vmatpush.msra.mxu0 0.0
      %3688 = vmatpush.msra.mxu0 0.0
      %3689 = vmatpush.msra.mxu0 0.0
      %3690 = vmatpush.msra.mxu0 0.0
      %3691 = vmatpush.msra.mxu0 0.0
      %3692 = vmatpush.msra.mxu0 0.0
      %3693 = vmatpush.msra.mxu0 0.0
      %3694 = vmatpush.msra.mxu0 0.0
      %3695 = vmatpush.msra.mxu0 0.0
      %3696 = vmatpush.msra.mxu0 0.0
      %3697 = vmatpush.msra.mxu0 0.0
      %3698 = vmatpush.msra.mxu0 0.0
      %3699 = vmatpush.msra.mxu0 0.0
      %3700 = vmatpush.msra.mxu0 %v3682
      %3701 = vmatpush.msra.mxu0 %v3681
      %3702 = vmatpush.msra.mxu0 %v3680
      %3703 = vmatmul.f32.gmra.mxu0 %v3685
      %v3704 = vpop.f32.mrf.mxu0
      %v3705 = vadd.f32 %v3683, %v3704
      %3706 = vdwg.mxu0
      %v3707 = vxor.u32 %v3705, 2147483648
      %v3708 = vmul.f32 %v3707, 1.442695
      %v3709 = vpow.pop %v3708
      %v3710 = vadd.f32 %v3709, 1.0
      %v3711 = vrcp.pop %v3710
      %v3712 = vmul.f32 %v3710, %v3711
      %v3713 = vsub.f32 1.0, %v3712
      %v3714 = vmul.f32 %v3711, %v3713
      %v3715 = vadd.f32 %v3711, %v3714
      %vm3716 = vweird.f32 %v3710
      %vm3717 = vweird.f32 %v3711
      %vm3718 = vmor %vm3716, %vm3717
      %v3719 = vsel %vm3718, %v3711, %v3715
      %v3720 = vand.u32 2147483647, %v3710
      %vm3721 = vcmp.eq.f32.partialorder %v3720, 8.507059e+37
      %v3722 = vand.u32 %v3710, 2147483648
      %v3723 = vor.u32 1.1754944e-38, %v3722
      %v3724 = vsel %vm3721, %v3723, %v3719
      %v3725 = vmul.f32 1.0, %v3724
      %v3726 = vmul.f32 %v3705, %v3725
      %v3727 = vld [vmem:[%s7] sm:$0xff]
      %v3728 = vld [vmem:[%s7 + $0x8] sm:$0xff]
      %v3729 = vld [vmem:[%s7 + $0x10] sm:$0xff]
      %v3730 = vld [vmem:[%s7 + $0x18] sm:$0xff]
      %v3731 = vld [vmem:[%s7 + $0x20] sm:$0xff]
      %v3732 = vld [vmem:[%s7 + $0x28] sm:$0xff]
      %v3733 = vld [vmem:[%s7 + $0x30] sm:$0xff]
      %v3734 = vld [vmem:[%s7 + $0x38] sm:$0xff]
      %v3735 = vld [vmem:[%s7 + $0x40] sm:$0xff]
      %v3736 = vld [vmem:[%s7 + $0x48] sm:$0xff]
      %v3737 = vld [vmem:[%s7 + $0x50] sm:$0xff]
      %v3738 = vld [vmem:[%s7 + $0x58] sm:$0xff]
      %v3739 = vld [vmem:[%s8] sm:$0x1]
      %vm3740 = vcmask 785408
      %v3742 = vsel %vm3740, %v3726, 0
      %3744 = vmatpush.msra.mxu0 0.0
      %3745 = vmatpush.msra.mxu0 0.0
      %3746 = vmatpush.msra.mxu0 0.0
      %3747 = vmatpush.msra.mxu0 0.0
      %3748 = vmatpush.msra.mxu0 %v3738
      %3749 = vmatpush.msra.mxu0 %v3737
      %3750 = vmatpush.msra.mxu0 %v3736
      %3751 = vmatpush.msra.mxu0 %v3735
      %3752 = vmatpush.msra.mxu0 %v3734
      %3753 = vmatpush.msra.mxu0 %v3733
      %3754 = vmatpush.msra.mxu0 %v3732
      %3755 = vmatpush.msra.mxu0 %v3731
      %3756 = vmatpush.msra.mxu0 %v3730
      %3757 = vmatpush.msra.mxu0 %v3729
      %3758 = vmatpush.msra.mxu0 %v3728
      %3759 = vmatpush.msra.mxu0 %v3727
      %3760 = vmatmul.f32.gmra.mxu0 %v3742
      %v3761 = vpop.f32.mrf.mxu0
      %v3762 = vadd.f32 %v3739, %v3761
      %3763 = vdwg.mxu0
      %v3764 = vxor.u32 %v3762, 2147483648
      %v3765 = vmul.f32 %v3764, 1.442695
      %v3766 = vpow.pop %v3765
      %v3767 = vadd.f32 %v3766, 1.0
      %v3768 = vrcp.pop %v3767
      %v3769 = vmul.f32 %v3767, %v3768
      %v3770 = vsub.f32 1.0, %v3769
      %v3771 = vmul.f32 %v3768, %v3770
      %v3772 = vadd.f32 %v3768, %v3771
      %vm3773 = vweird.f32 %v3767
      %vm3774 = vweird.f32 %v3768
      %vm3775 = vmor %vm3773, %vm3774
      %v3776 = vsel %vm3775, %v3768, %v3772
      %v3777 = vand.u32 2147483647, %v3767
      %vm3778 = vcmp.eq.f32.partialorder %v3777, 8.507059e+37
      %v3779 = vand.u32 %v3767, 2147483648
      %v3780 = vor.u32 1.1754944e-38, %v3779
      %v3781 = vsel %vm3778, %v3780, %v3776
      %v3782 = vmul.f32 1.0, %v3781
      %v3783 = vperm.slane %v3782, 0
      %v3784 = vmul.f32 %v3571, %v3783
      %v3785 = vmul.f32 %v3572, %v3783
      %v3786 = vmul.f32 %v3573, %v3783
      %v3787 = vmul.f32 %v3574, %v3783
      %v3788 = vmul.f32 %v3575, %v3783
      %v3789 = vmul.f32 %v3576, %v3783
      %v3790 = vmul.f32 %v3577, %v3783
      %v3791 = vmul.f32 %v3578, %v3783
      %v3792 = vmul.f32 %v3579, %v3783
      %v3793 = vmul.f32 %v3580, %v3783
      %v3794 = vmul.f32 %v3581, %v3783
      %v3795 = vmul.f32 %v3582, %v3783
      %v3796 = vmul.f32 %v3583, %v3783
      %v3797 = vmul.f32 %v3584, %v3783
      %v3798 = vmul.f32 %v3585, %v3783
      %v3799 = vmul.f32 %v3586, %v3783
      %v3800 = vmul.f32 %v3587, %v3783
      %v3801 = vmul.f32 %v3588, %v3783
      %v3802 = vmul.f32 %v3589, %v3783
      %v3803 = vmul.f32 %v3590, %v3783
      %v3804 = vmul.f32 %v3591, %v3783
      %v3805 = vmul.f32 %v3592, %v3783
      %v3806 = vmul.f32 %v3593, %v3783
      %v3807 = vmul.f32 %v3594, %v3783
      %v3808 = vmul.f32 %v3595, %v3783
      %v3809 = vmul.f32 %v3596, %v3783
      %v3810 = vmul.f32 %v3597, %v3783
      %v3811 = vmul.f32 %v3598, %v3783
      %v3812 = vmul.f32 %v3599, %v3783
      %v3813 = vmul.f32 %v3600, %v3783
      %v3814 = vmul.f32 %v3601, %v3783
      %v3815 = vmul.f32 %v3602, %v3783
      %v3816 = vpack.c.bf16 %v3785, %v3784
      %v3817 = vpack.c.bf16 %v3787, %v3786
      %v3818 = vpack.c.bf16 %v3789, %v3788
      %v3819 = vpack.c.bf16 %v3791, %v3790
      %v3820 = vpack.c.bf16 %v3793, %v3792
      %v3821 = vpack.c.bf16 %v3795, %v3794
      %v3822 = vpack.c.bf16 %v3797, %v3796
      %v3823 = vpack.c.bf16 %v3799, %v3798
      %v3824 = vpack.c.bf16 %v3801, %v3800
      %v3825 = vpack.c.bf16 %v3803, %v3802
      %v3826 = vpack.c.bf16 %v3805, %v3804
      %v3827 = vpack.c.bf16 %v3807, %v3806
      %v3828 = vpack.c.bf16 %v3809, %v3808
      %v3829 = vpack.c.bf16 %v3811, %v3810
      %v3830 = vpack.c.bf16 %v3813, %v3812
      %v3831 = vpack.c.bf16 %v3815, %v3814
      %v3832 = vld [vmem:[%s9] sm:$0x3]
      %v3833 = vld [vmem:[%s10] sm:$0xf]
      %3835 = vset.pattern.permute.xlu0 0
      %3836 = vperm.xlu0 %3835, %v3833
      %v3837 = vpop.permute.xlu0 %3836
      %v3840 = vsel %vm1995, %v3832, 0
      %v3843 = vsel %vm1995, %v3816, 0
      %v3846 = vsel %vm1995, %v3817, 0
      %v3849 = vsel %vm1995, %v3818, 0
      %v3852 = vsel %vm1995, %v3819, 0
      %v3855 = vsel %vm1995, %v3820, 0
      %v3858 = vsel %vm1995, %v3821, 0
      %v3861 = vsel %vm1995, %v3822, 0
      %v3864 = vsel %vm1995, %v3823, 0
      %v3867 = vsel %vm1995, %v3824, 0
      %v3870 = vsel %vm1995, %v3825, 0
      %v3873 = vsel %vm1995, %v3826, 0
      %v3876 = vsel %vm1995, %v3827, 0
      %v3879 = vsel %vm1995, %v3828, 0
      %v3882 = vsel %vm1995, %v3829, 0
      %v3885 = vsel %vm1995, %v3830, 0
      %v3888 = vsel %vm1995, %v3831, 0
      %3890 = vmatpush.bf16.xpose.msra.mxu0 %v3864
      %3891 = vmatpush.bf16.xpose.msra.mxu0 %v3861
      %3892 = vmatpush.bf16.xpose.msra.mxu0 %v3858
      %3893 = vmatpush.bf16.xpose.msra.mxu0 %v3855
      %3894 = vmatpush.bf16.xpose.msra.mxu0 %v3852
      %3895 = vmatpush.bf16.xpose.msra.mxu0 %v3849
      %3896 = vmatpush.bf16.xpose.msra.mxu0 %v3846
      %3897 = vmatpush.bf16.xpose.msra.mxu0 %v3843
      %3898 = vmatmul.bf16.gmra.mxu0 %v3840
      %v3899 = vpop.f32.mrf.mxu0
      %v3900 = vadd.f32 %v3837, %v3899
      %v3901 = vpop.f32.mrf.mxu0
      %3902 = vdwg.mxu0
      %3903 = vmatpush.bf16.xpose.msra.mxu0 %v3888
      %3904 = vmatpush.bf16.xpose.msra.mxu0 %v3885
      %3905 = vmatpush.bf16.xpose.msra.mxu0 %v3882
      %3906 = vmatpush.bf16.xpose.msra.mxu0 %v3879
      %3907 = vmatpush.bf16.xpose.msra.mxu0 %v3876
      %3908 = vmatpush.bf16.xpose.msra.mxu0 %v3873
      %3909 = vmatpush.bf16.xpose.msra.mxu0 %v3870
      %3910 = vmatpush.bf16.xpose.msra.mxu0 %v3867
      %3911 = vmatmul.bf16.gmra.mxu0 %v3840
      %v3912 = vpop.f32.mrf.mxu0
      %v3913 = vadd.f32 %v3837, %v3912
      %v3914 = vpop.f32.mrf.mxu0
      %3915 = vdwg.mxu0
      %v3916 = vld [vmem:[%s428] sm:$0xff]
      %3918 = vst [vmem:[#allocation1] ss:$2 sm:$0xff] %v3916
      %v3919 = vld.sshfl [vmem:[#allocation1] sm:$0xff pattern:$0x75316420]
      %v3920 = vld.sshfl [vmem:[#allocation1 + $0x8] sm:$0xff pattern:$0x75316420]
      %v3923 = vadd.f32 %v3900, %v3919
      %v3924 = vadd.f32 %v3913, %v3920
      %v3927 = vrot.slane %v3924, 4
      %v3928 = vsel %vm656, %v3923, %v3927
      %3930 = vst [vmem:[%s433] sm:$0xff] %v3928
      %p3931 = scmp.lt.s32.totalorder %s23, 1
      %s3932 = scalar_select %p3931, %s23, 1
      %s3933 = smul.addr %s3932, 2
      %s3934 = smul.addr %s3933, 4
      %s3935 = scalar_lea.vmem %s12, %s3934
      // Predicated region
      $region69: #{mbconv_forward.1} parent=67 // pred_check
        %p3936 = pneg %p303
      $region70: #{mbconv_forward.1} parent=67 // pred_check_branch
        %3938 = sbr.rel (%p3936) target = $region72
      $region71: #{mbconv_forward.1} parent=67 // pred_region
        _
      $region72: #{mbconv_forward.1} parent=67 // pred_fallthru
        _
    $region68: #{mbconv_forward.1} parent=5 // pred_fallthru
      _
    %p3939 = scmp.le.s32.totalorder 2, %s18
    // Predicated region
    $region73: #{mbconv_forward.1} parent=5 // pred_check
      %p3940 = pneg %p3939
    $region74: #{mbconv_forward.1} parent=5 // pred_check_branch
      %3942 = sbr.rel (%p3940) target = $region76
    $region75: #{mbconv_forward.1} parent=5 // pred_region
      %s3943 = ssub.s32 %s18, 2
      // Predicated region
      $region77: #{mbconv_forward.1} parent=75 // pred_check
        %p3944 = pneg %p309
      $region78: #{mbconv_forward.1} parent=75 // pred_check_branch
        %3946 = sbr.rel (%p3944) target = $region80
      $region79: #{mbconv_forward.1} parent=75 // pred_region
        %p3947 = scmp.lt.s32.totalorder %s24, 1
        %s3948 = scalar_select %p3947, %s24, 1
        %s3949 = smul.addr %s3948, 2
        %s3950 = smul.addr %s3949, 4
        %s3951 = scalar_lea.vmem %s12, %s3950
      $region80: #{mbconv_forward.1} parent=75 // pred_fallthru
        _
    $region76: #{mbconv_forward.1} parent=5 // pred_fallthru
      _
  $region6: #{mbconv_forward.1} parent=0 // loop_footer
    %s22 = sadd.s32 1, %s18
  $region7: #{mbconv_forward.1} parent=0 // loop_footer_branch
    %17 = sbr.rel target = $region3
  $region8: #{mbconv_forward.1} parent=0 // loop_exit
    _

</llo_original>
